<compile_context>
chip_gen: v7x
topology: tpu7x:2x2x1
jax: 0.10.0
libtpu: 0.0.40
codegen_flags: <defaults>
</compile_context>

<pallas_src>
import jax
import jax.numpy as jnp
from jax.experimental import pallas as pl
from jax.experimental.pallas import tpu as pltpu


def _vmem_spec():
    return pl.BlockSpec(memory_space=pltpu.MemorySpace.VMEM)


# ---------------- fused encoder + LSTM + decoder kernel ----------------
def _fused_caption_kernel(feat_ref, enc_w_hbm, enc_b_ref, emb_ref,
                          wih_ref, whh_ref, b_ref,
                          dec_w1_ref, dec_b1_ref, dec_w2_ref, dec_b2_ref,
                          o_ref,
                          enc_w_vmem, xproj_ref, dma_sem):
    # feat_ref : (Bp, F)      bf16    enc_w_hbm: (F, E) bf16 in HBM (pl.ANY)
    # enc_b    : (1, E)       f32
    # emb_ref  : (T*Bp, E)    bf16    time-major caption embeddings (flattened)
    # wih      : (E, 4H) bf16 whh: (H, 4H) bf16  b: (1, 4H) f32  (b_ih + b_hh combined)
    # dec_w1   : (H, E) bf16  dec_b1: (1, E) f32  dec_w2: (E, V) bf16  dec_b2: (1, V) f32
    # o_ref    : (T, Bp, V)   f32 logits for the T kept timesteps, time-major
    # enc_w_vmem: (F, E) bf16 scratch; xproj_ref: (T*Bp, 4H) f32 scratch; dma_sem: DMA sem
    T = o_ref.shape[0]
    Bp = feat_ref.shape[0]
    H = whh_ref.shape[0]
    bf16 = jnp.bfloat16

    # Start streaming the encoder weight (largest single transfer) into VMEM and overlap
    # it with the caption-token input projection, which does not need it.
    enc_w_cp = pltpu.make_async_copy(enc_w_hbm, enc_w_vmem, dma_sem)
    enc_w_cp.start()

    bias = b_ref[...]                                                     # (1, 4H) f32

    # ---- LSTM input projection hoisted out of the recurrence, spilled to VMEM scratch ----
    xproj = jnp.dot(emb_ref[...], wih_ref[...],
                    preferred_element_type=jnp.float32) + bias            # (T*Bp, 4H) f32
    xproj_ref[...] = xproj

    # ---- encoder: (Dropout = identity at eval) -> Linear(F->E) -> ReLU ----
    # TODO(synk): training-mode dropout (pltpu.prng_random_bits mask) not implemented.
    enc_w_cp.wait()
    enc = jnp.dot(feat_ref[...], enc_w_vmem[...],
                  preferred_element_type=jnp.float32)
    enc = jnp.maximum(enc + enc_b_ref[...], 0.0)                          # (Bp, E) f32

    # ---- step 0 (image feature): h = c = 0, so h @ W_hh and f*c vanish; its logits
    #      (outputs[:, 0]) are discarded and therefore never decoded ----
    gates0 = jnp.dot(enc.astype(bf16), wih_ref[...],
                     preferred_element_type=jnp.float32) + bias           # (Bp, 4H)
    i0 = jax.nn.sigmoid(gates0[:, 0:H])
    g0 = jnp.tanh(gates0[:, 2 * H:3 * H])
    o0 = jax.nn.sigmoid(gates0[:, 3 * H:4 * H])
    c = i0 * g0
    h = o0 * jnp.tanh(c)

    dec_b1 = dec_b1_ref[...]
    dec_b2 = dec_b2_ref[...]

    # ---- recurrence over the T caption tokens (full static unroll; T small/static).
    #      The per-step decoder is interleaved so its MXU work hides under the
    #      EUP/VPU-bound gate chain of the serial recurrence. ----
    for t in range(T):
        gates = xproj_ref[pl.ds(t * Bp, Bp), :] + jnp.dot(
            h.astype(bf16), whh_ref[...], preferred_element_type=jnp.float32)
        i = jax.nn.sigmoid(gates[:, 0:H])
        f = jax.nn.sigmoid(gates[:, H:2 * H])
        g = jnp.tanh(gates[:, 2 * H:3 * H])
        o = jax.nn.sigmoid(gates[:, 3 * H:4 * H])
        c = f * c + i * g
        h = o * jnp.tanh(c)

        # decoder for this timestep: Linear(H->E) -> ReLU -> Linear(E->V)
        d1 = jnp.dot(h.astype(bf16), dec_w1_ref[...],
                     preferred_element_type=jnp.float32) + dec_b1
        d1 = jnp.maximum(d1, 0.0)
        o_ref[t] = jnp.dot(d1.astype(bf16), dec_w2_ref[...],
                           preferred_element_type=jnp.float32) + dec_b2


# ---------------- parameters (deterministic synthetic init, f32 master copy) ----------------
def init_params(key, vocab_size, embed_size=128, hidden_size=128, feat_size=2048):
    ks = jax.random.split(key, 10)
    s = 0.02
    return {
        "enc_w":  jax.random.normal(ks[0], (feat_size, embed_size), jnp.float32) * s,
        "enc_b":  jax.random.normal(ks[1], (1, embed_size), jnp.float32) * s,
        "embed":  jax.random.normal(ks[2], (vocab_size, embed_size), jnp.float32) * s,
        "w_ih":   jax.random.normal(ks[3], (embed_size, 4 * hidden_size), jnp.float32) * s,
        "w_hh":   jax.random.normal(ks[4], (hidden_size, 4 * hidden_size), jnp.float32) * s,
        "b_lstm": jax.random.normal(ks[5], (1, 4 * hidden_size), jnp.float32) * s,  # b_ih + b_hh
        "dec_w1": jax.random.normal(ks[6], (hidden_size, embed_size), jnp.float32) * s,
        "dec_b1": jax.random.normal(ks[7], (1, embed_size), jnp.float32) * s,
        "dec_w2": jax.random.normal(ks[8], (embed_size, vocab_size), jnp.float32) * s,
        "dec_b2": jax.random.normal(ks[9], (1, vocab_size), jnp.float32) * s,
    }


# ---------------- forward pass ----------------
def image_caption_forward(params, features, captions):
    B = features.shape[0]
    T = captions.shape[1]
    F, E = params["enc_w"].shape
    H = params["w_hh"].shape[0]
    V = params["dec_w2"].shape[1]
    bf16 = jnp.bfloat16

    # Pad batch to a multiple of 8 (f32 sublane); padded rows are sliced off at the end.
    Bp = max(8, ((B + 7) // 8) * 8)
    feat_p = jnp.pad(features, ((0, Bp - B), (0, 0))).astype(bf16)

    # Pad the int32 captions (not the float embeddings) and gather time-major:
    # indexing with captions.T yields (T, Bp, E) directly; flatten leading dims in XLA
    # so the kernel never reshapes a bf16 tile.
    cap_p = jnp.pad(captions, ((0, Bp - B), (0, 0)))                  # padded rows -> token 0
    emb_tm = jnp.take(params["embed"].astype(bf16), cap_p.T, axis=0)  # (T, Bp, E) bf16
    emb_flat = emb_tm.reshape(T * Bp, E)

    out_tm = pl.pallas_call(
        _fused_caption_kernel,
        out_shape=jax.ShapeDtypeStruct((T, Bp, V), jnp.float32),
        in_specs=[
            _vmem_spec(),                          # features
            pl.BlockSpec(memory_space=pl.ANY),     # enc_w stays in HBM, manual DMA
            _vmem_spec(),                          # enc_b
            _vmem_spec(),                          # embeddings (time-major, flattened)
            _vmem_spec(),                          # w_ih
            _vmem_spec(),                          # w_hh
            _vmem_spec(),                          # b_lstm
            _vmem_spec(),                          # dec_w1
            _vmem_spec(),                          # dec_b1
            _vmem_spec(),                          # dec_w2
            _vmem_spec(),                          # dec_b2
        ],
        out_specs=_vmem_spec(),
        scratch_shapes=[
            pltpu.VMEM((F, E), bf16),                   # enc_w landing buffer
            pltpu.VMEM((T * Bp, 4 * H), jnp.float32),   # hoisted LSTM input projection
            pltpu.SemaphoreType.DMA,                    # enc_w copy completion
        ],
    )(feat_p,
      params["enc_w"].astype(bf16),
      params["enc_b"],
      emb_flat,
      params["w_ih"].astype(bf16),
      params["w_hh"].astype(bf16),
      params["b_lstm"],
      params["dec_w1"].astype(bf16),
      params["dec_b1"],
      params["dec_w2"].astype(bf16),
      params["dec_b2"])

    # (T, Bp, V) -> (B, T, V); tiny transpose/slice on the final logits only.
    return jnp.transpose(out_tm, (1, 0, 2))[:B]


# ---------------- pure-JAX f32 reference (for correctness check) ----------------
def reference_forward(params, features, captions):
    H = params["w_hh"].shape[0]
    enc = jnp.maximum(features @ params["enc_w"] + params["enc_b"], 0.0)
    emb = jnp.take(params["embed"], captions, axis=0)
    x = jnp.concatenate([enc[:, None, :], emb], axis=1)             # (B, S, E)
    B, S, _ = x.shape
    h = jnp.zeros((B, H), jnp.float32)
    c = jnp.zeros((B, H), jnp.float32)
    hs = []
    for t in range(S):
        gates = x[:, t, :] @ params["w_ih"] + h @ params["w_hh"] + params["b_lstm"]
        i = jax.nn.sigmoid(gates[:, :H])
        f = jax.nn.sigmoid(gates[:, H:2 * H])
        g = jnp.tanh(gates[:, 2 * H:3 * H])
        o = jax.nn.sigmoid(gates[:, 3 * H:])
        c = f * c + i * g
        h = o * jnp.tanh(c)
        hs.append(h)
    lstm_out = jnp.stack(hs, axis=1)                                # (B, S, H)
    d1 = jnp.maximum(lstm_out @ params["dec_w1"] + params["dec_b1"], 0.0)
    logits = d1 @ params["dec_w2"] + params["dec_b2"]
    return logits[:, 1:, :]


if __name__ == "__main__":
    vocab_size, embed_size, hidden_size, feat_size = 256, 128, 128, 2048
    B, T = 2, 8

    key = jax.random.PRNGKey(0)
    kp, kf, kc = jax.random.split(key, 3)
    params = init_params(kp, vocab_size, embed_size, hidden_size, feat_size)
    features = jax.random.normal(kf, (B, feat_size), jnp.float32)
    captions = jax.random.randint(kc, (B, T), 0, vocab_size, dtype=jnp.int32)

    out = jax.jit(image_caption_forward)(params, features, captions)
    jax.block_until_ready(out)
    assert out.shape == (B, T, vocab_size) and out.dtype == jnp.float32

    ref = reference_forward(params, features, captions)
    max_err = float(jnp.max(jnp.abs(out - ref)))
    # Kernel uses bf16 weights/activations on the MXU with f32 accumulation.
    assert jnp.allclose(out, ref, rtol=5e-2, atol=5e-3), max_err
    print("KERNEL_OK")
</pallas_src>

<mosaic_0001>
module attributes {stable_mosaic.version = 11 : i64} {
  func.func @_fused_caption_kernel(%arg0: memref<8x2048xbf16, #tpu.memory_space<vmem>>, %arg1: memref<2048x128xbf16, #tpu.memory_space<any>>, %arg2: memref<1x128xf32, #tpu.memory_space<vmem>>, %arg3: memref<64x128xbf16, #tpu.memory_space<vmem>>, %arg4: memref<128x512xbf16, #tpu.memory_space<vmem>>, %arg5: memref<128x512xbf16, #tpu.memory_space<vmem>>, %arg6: memref<1x512xf32, #tpu.memory_space<vmem>>, %arg7: memref<128x128xbf16, #tpu.memory_space<vmem>>, %arg8: memref<1x128xf32, #tpu.memory_space<vmem>>, %arg9: memref<128x256xbf16, #tpu.memory_space<vmem>>, %arg10: memref<1x256xf32, #tpu.memory_space<vmem>>, %arg11: memref<8x8x256xf32, #tpu.memory_space<vmem>>, %arg12: memref<2048x128xbf16, #tpu.memory_space<vmem>>, %arg13: memref<64x512xf32, #tpu.memory_space<vmem>>, %arg14: memref<!tpu.dma_semaphore, #tpu.memory_space<semaphore_mem>>) attributes {dimension_semantics = [], scalar_prefetch = 0 : i64, scratch_operands = 3 : i64, tpu.core_type = #tpu.core_type<tc>} {
    tpu.enqueue_dma source(%arg1 : memref<2048x128xbf16, #tpu.memory_space<any>>) target(%arg12 : memref<2048x128xbf16, #tpu.memory_space<vmem>>) target_semaphore(%arg14 : memref<!tpu.dma_semaphore, #tpu.memory_space<semaphore_mem>>)
    %c0 = arith.constant 0 : index
    %c0_0 = arith.constant 0 : index
    %0 = vector.load %arg6[%c0, %c0_0] : memref<1x512xf32, #tpu.memory_space<vmem>>, vector<1x512xf32>
    %c0_1 = arith.constant 0 : index
    %c0_2 = arith.constant 0 : index
    %1 = vector.load %arg3[%c0_1, %c0_2] : memref<64x128xbf16, #tpu.memory_space<vmem>>, vector<64x128xbf16>
    %c0_3 = arith.constant 0 : index
    %c0_4 = arith.constant 0 : index
    %2 = vector.load %arg4[%c0_3, %c0_4] : memref<128x512xbf16, #tpu.memory_space<vmem>>, vector<128x512xbf16>
    %cst = arith.constant dense<0.000000e+00> : vector<64x512xf32>
    %3 = tpu.matmul %1, %2, %cst {dimension_numbers = #tpu.dot_dimension_numbers<[1], [0], [0], [1], [0, 0, 1, 1], [], []>} : vector<64x128xbf16>, vector<128x512xbf16>, vector<64x512xf32> -> vector<64x512xf32>
    %4 = vector.broadcast %0 : vector<1x512xf32> to vector<64x512xf32>
    %5 = arith.addf %3, %4 : vector<64x512xf32>
    %c0_5 = arith.constant 0 : index
    %c0_6 = arith.constant 0 : index
    %6 = vector.load %arg13[%c0_5, %c0_6] : memref<64x512xf32, #tpu.memory_space<vmem>>, vector<64x512xf32>
    tpu.vector_store %arg13[%c0_5, %c0_6], %5 {strides = array<i32>} : memref<64x512xf32, #tpu.memory_space<vmem>>, vector<64x512xf32>,
    tpu.wait_dma2 semaphore(%arg14 : memref<!tpu.dma_semaphore, #tpu.memory_space<semaphore_mem>>) src(%arg1 : memref<2048x128xbf16, #tpu.memory_space<any>>) dst(%arg12 : memref<2048x128xbf16, #tpu.memory_space<vmem>>)
    %c0_7 = arith.constant 0 : index
    %c0_8 = arith.constant 0 : index
    %7 = vector.load %arg0[%c0_7, %c0_8] : memref<8x2048xbf16, #tpu.memory_space<vmem>>, vector<8x2048xbf16>
    %c0_9 = arith.constant 0 : index
    %c0_10 = arith.constant 0 : index
    %8 = vector.load %arg12[%c0_9, %c0_10] : memref<2048x128xbf16, #tpu.memory_space<vmem>>, vector<2048x128xbf16>
    %cst_11 = arith.constant dense<0.000000e+00> : vector<8x128xf32>
    %9 = tpu.matmul %7, %8, %cst_11 {dimension_numbers = #tpu.dot_dimension_numbers<[1], [0], [0], [1], [0, 0, 1, 1], [], []>} : vector<8x2048xbf16>, vector<2048x128xbf16>, vector<8x128xf32> -> vector<8x128xf32>
    %c0_12 = arith.constant 0 : index
    %c0_13 = arith.constant 0 : index
    %10 = vector.load %arg2[%c0_12, %c0_13] : memref<1x128xf32, #tpu.memory_space<vmem>>, vector<1x128xf32>
    %11 = vector.broadcast %10 : vector<1x128xf32> to vector<8x128xf32>
    %12 = arith.addf %9, %11 : vector<8x128xf32>
    %cst_14 = arith.constant 0.000000e+00 : f32
    %13 = vector.broadcast %cst_14 : f32 to vector<8x128xf32>
    %14 = arith.maximumf %12, %13 : vector<8x128xf32>
    %15 = arith.truncf %14 : vector<8x128xf32> to vector<8x128xbf16>
    %c0_15 = arith.constant 0 : index
    %c0_16 = arith.constant 0 : index
    %16 = vector.load %arg4[%c0_15, %c0_16] : memref<128x512xbf16, #tpu.memory_space<vmem>>, vector<128x512xbf16>
    %cst_17 = arith.constant dense<0.000000e+00> : vector<8x512xf32>
    %17 = tpu.matmul %15, %16, %cst_17 {dimension_numbers = #tpu.dot_dimension_numbers<[1], [0], [0], [1], [0, 0, 1, 1], [], []>} : vector<8x128xbf16>, vector<128x512xbf16>, vector<8x512xf32> -> vector<8x512xf32>
    %18 = vector.broadcast %0 : vector<1x512xf32> to vector<8x512xf32>
    %19 = arith.addf %17, %18 : vector<8x512xf32>
    %20 = vector.extract_strided_slice %19 {offsets = [0, 0], sizes = [8, 128], strides = [1, 1]} : vector<8x512xf32> to vector<8x128xf32>
    %21 = arith.negf %20 : vector<8x128xf32>
    %22 = math.exp %21 : vector<8x128xf32>
    %cst_18 = arith.constant 1.000000e+00 : f32
    %23 = vector.broadcast %cst_18 : f32 to vector<8x128xf32>
    %24 = arith.addf %23, %22 : vector<8x128xf32>
    %25 = arith.divf %23, %24 : vector<8x128xf32>
    %26 = vector.extract_strided_slice %19 {offsets = [0, 256], sizes = [8, 128], strides = [1, 1]} : vector<8x512xf32> to vector<8x128xf32>
    %27 = math.tanh %26 : vector<8x128xf32>
    %28 = vector.extract_strided_slice %19 {offsets = [0, 384], sizes = [8, 128], strides = [1, 1]} : vector<8x512xf32> to vector<8x128xf32>
    %29 = arith.negf %28 : vector<8x128xf32>
    %30 = math.exp %29 : vector<8x128xf32>
    %cst_19 = arith.constant 1.000000e+00 : f32
    %31 = vector.broadcast %cst_19 : f32 to vector<8x128xf32>
    %32 = arith.addf %31, %30 : vector<8x128xf32>
    %33 = arith.divf %31, %32 : vector<8x128xf32>
    %34 = arith.mulf %25, %27 : vector<8x128xf32>
    %35 = math.tanh %34 : vector<8x128xf32>
    %36 = arith.mulf %33, %35 : vector<8x128xf32>
    %c0_20 = arith.constant 0 : index
    %c0_21 = arith.constant 0 : index
    %37 = vector.load %arg8[%c0_20, %c0_21] : memref<1x128xf32, #tpu.memory_space<vmem>>, vector<1x128xf32>
    %c0_22 = arith.constant 0 : index
    %c0_23 = arith.constant 0 : index
    %38 = vector.load %arg10[%c0_22, %c0_23] : memref<1x256xf32, #tpu.memory_space<vmem>>, vector<1x256xf32>
    %c0_24 = arith.constant 0 : index
    %c0_25 = arith.constant 0 : index
    %39 = vector.load %arg13[%c0_24, %c0_25] : memref<64x512xf32, #tpu.memory_space<vmem>>, vector<8x512xf32>
    %40 = arith.truncf %36 : vector<8x128xf32> to vector<8x128xbf16>
    %c0_26 = arith.constant 0 : index
    %c0_27 = arith.constant 0 : index
    %41 = vector.load %arg5[%c0_26, %c0_27] : memref<128x512xbf16, #tpu.memory_space<vmem>>, vector<128x512xbf16>
    %cst_28 = arith.constant dense<0.000000e+00> : vector<8x512xf32>
    %42 = tpu.matmul %40, %41, %cst_28 {dimension_numbers = #tpu.dot_dimension_numbers<[1], [0], [0], [1], [0, 0, 1, 1], [], []>} : vector<8x128xbf16>, vector<128x512xbf16>, vector<8x512xf32> -> vector<8x512xf32>
    %43 = arith.addf %39, %42 : vector<8x512xf32>
    %44 = vector.extract_strided_slice %43 {offsets = [0, 0], sizes = [8, 128], strides = [1, 1]} : vector<8x512xf32> to vector<8x128xf32>
    %45 = arith.negf %44 : vector<8x128xf32>
    %46 = math.exp %45 : vector<8x128xf32>
    %cst_29 = arith.constant 1.000000e+00 : f32
    %47 = vector.broadcast %cst_29 : f32 to vector<8x128xf32>
    %48 = arith.addf %47, %46 : vector<8x128xf32>
    %49 = arith.divf %47, %48 : vector<8x128xf32>
    %50 = vector.extract_strided_slice %43 {offsets = [0, 128], sizes = [8, 128], strides = [1, 1]} : vector<8x512xf32> to vector<8x128xf32>
    %51 = arith.negf %50 : vector<8x128xf32>
    %52 = math.exp %51 : vector<8x128xf32>
    %cst_30 = arith.constant 1.000000e+00 : f32
    %53 = vector.broadcast %cst_30 : f32 to vector<8x128xf32>
    %54 = arith.addf %53, %52 : vector<8x128xf32>
    %55 = arith.divf %53, %54 : vector<8x128xf32>
    %56 = vector.extract_strided_slice %43 {offsets = [0, 256], sizes = [8, 128], strides = [1, 1]} : vector<8x512xf32> to vector<8x128xf32>
    %57 = math.tanh %56 : vector<8x128xf32>
    %58 = vector.extract_strided_slice %43 {offsets = [0, 384], sizes = [8, 128], strides = [1, 1]} : vector<8x512xf32> to vector<8x128xf32>
    %59 = arith.negf %58 : vector<8x128xf32>
    %60 = math.exp %59 : vector<8x128xf32>
    %cst_31 = arith.constant 1.000000e+00 : f32
    %61 = vector.broadcast %cst_31 : f32 to vector<8x128xf32>
    %62 = arith.addf %61, %60 : vector<8x128xf32>
    %63 = arith.divf %61, %62 : vector<8x128xf32>
    %64 = arith.mulf %55, %34 : vector<8x128xf32>
    %65 = arith.mulf %49, %57 : vector<8x128xf32>
    %66 = arith.addf %64, %65 : vector<8x128xf32>
    %67 = math.tanh %66 : vector<8x128xf32>
    %68 = arith.mulf %63, %67 : vector<8x128xf32>
    %69 = arith.truncf %68 : vector<8x128xf32> to vector<8x128xbf16>
    %c0_32 = arith.constant 0 : index
    %c0_33 = arith.constant 0 : index
    %70 = vector.load %arg7[%c0_32, %c0_33] : memref<128x128xbf16, #tpu.memory_space<vmem>>, vector<128x128xbf16>
    %cst_34 = arith.constant dense<0.000000e+00> : vector<8x128xf32>
    %71 = tpu.matmul %69, %70, %cst_34 {dimension_numbers = #tpu.dot_dimension_numbers<[1], [0], [0], [1], [0, 0, 1, 1], [], []>} : vector<8x128xbf16>, vector<128x128xbf16>, vector<8x128xf32> -> vector<8x128xf32>
    %72 = vector.broadcast %37 : vector<1x128xf32> to vector<8x128xf32>
    %73 = arith.addf %71, %72 : vector<8x128xf32>
    %cst_35 = arith.constant 0.000000e+00 : f32
    %74 = vector.broadcast %cst_35 : f32 to vector<8x128xf32>
    %75 = arith.maximumf %73, %74 : vector<8x128xf32>
    %76 = arith.truncf %75 : vector<8x128xf32> to vector<8x128xbf16>
    %c0_36 = arith.constant 0 : index
    %c0_37 = arith.constant 0 : index
    %77 = vector.load %arg9[%c0_36, %c0_37] : memref<128x256xbf16, #tpu.memory_space<vmem>>, vector<128x256xbf16>
    %cst_38 = arith.constant dense<0.000000e+00> : vector<8x256xf32>
    %78 = tpu.matmul %76, %77, %cst_38 {dimension_numbers = #tpu.dot_dimension_numbers<[1], [0], [0], [1], [0, 0, 1, 1], [], []>} : vector<8x128xbf16>, vector<128x256xbf16>, vector<8x256xf32> -> vector<8x256xf32>
    %79 = vector.broadcast %38 : vector<1x256xf32> to vector<8x256xf32>
    %80 = arith.addf %78, %79 : vector<8x256xf32>
    %c0_39 = arith.constant 0 : index
    %c0_40 = arith.constant 0 : index
    %c0_41 = arith.constant 0 : index
    %81 = vector.load %arg11[%c0_39, %c0_40, %c0_41] : memref<8x8x256xf32, #tpu.memory_space<vmem>>, vector<1x8x256xf32>
    %82 = vector.shape_cast %81 : vector<1x8x256xf32> to vector<8x256xf32>
    %83 = vector.shape_cast %80 : vector<8x256xf32> to vector<1x8x256xf32>
    tpu.vector_store %arg11[%c0_39, %c0_40, %c0_41], %83 {strides = array<i32>} : memref<8x8x256xf32, #tpu.memory_space<vmem>>, vector<1x8x256xf32>,
    %c8 = arith.constant 8 : index
    %c0_42 = arith.constant 0 : index
    %84 = vector.load %arg13[%c8, %c0_42] : memref<64x512xf32, #tpu.memory_space<vmem>>, vector<8x512xf32>
    %85 = arith.truncf %68 : vector<8x128xf32> to vector<8x128xbf16>
    %c0_43 = arith.constant 0 : index
    %c0_44 = arith.constant 0 : index
    %86 = vector.load %arg5[%c0_43, %c0_44] : memref<128x512xbf16, #tpu.memory_space<vmem>>, vector<128x512xbf16>
    %cst_45 = arith.constant dense<0.000000e+00> : vector<8x512xf32>
    %87 = tpu.matmul %85, %86, %cst_45 {dimension_numbers = #tpu.dot_dimension_numbers<[1], [0], [0], [1], [0, 0, 1, 1], [], []>} : vector<8x128xbf16>, vector<128x512xbf16>, vector<8x512xf32> -> vector<8x512xf32>
    %88 = arith.addf %84, %87 : vector<8x512xf32>
    %89 = vector.extract_strided_slice %88 {offsets = [0, 0], sizes = [8, 128], strides = [1, 1]} : vector<8x512xf32> to vector<8x128xf32>
    %90 = arith.negf %89 : vector<8x128xf32>
    %91 = math.exp %90 : vector<8x128xf32>
    %cst_46 = arith.constant 1.000000e+00 : f32
    %92 = vector.broadcast %cst_46 : f32 to vector<8x128xf32>
    %93 = arith.addf %92, %91 : vector<8x128xf32>
    %94 = arith.divf %92, %93 : vector<8x128xf32>
    %95 = vector.extract_strided_slice %88 {offsets = [0, 128], sizes = [8, 128], strides = [1, 1]} : vector<8x512xf32> to vector<8x128xf32>
    %96 = arith.negf %95 : vector<8x128xf32>
    %97 = math.exp %96 : vector<8x128xf32>
    %cst_47 = arith.constant 1.000000e+00 : f32
    %98 = vector.broadcast %cst_47 : f32 to vector<8x128xf32>
    %99 = arith.addf %98, %97 : vector<8x128xf32>
    %100 = arith.divf %98, %99 : vector<8x128xf32>
    %101 = vector.extract_strided_slice %88 {offsets = [0, 256], sizes = [8, 128], strides = [1, 1]} : vector<8x512xf32> to vector<8x128xf32>
    %102 = math.tanh %101 : vector<8x128xf32>
    %103 = vector.extract_strided_slice %88 {offsets = [0, 384], sizes = [8, 128], strides = [1, 1]} : vector<8x512xf32> to vector<8x128xf32>
    %104 = arith.negf %103 : vector<8x128xf32>
    %105 = math.exp %104 : vector<8x128xf32>
    %cst_48 = arith.constant 1.000000e+00 : f32
    %106 = vector.broadcast %cst_48 : f32 to vector<8x128xf32>
    %107 = arith.addf %106, %105 : vector<8x128xf32>
    %108 = arith.divf %106, %107 : vector<8x128xf32>
    %109 = arith.mulf %100, %66 : vector<8x128xf32>
    %110 = arith.mulf %94, %102 : vector<8x128xf32>
    %111 = arith.addf %109, %110 : vector<8x128xf32>
    %112 = math.tanh %111 : vector<8x128xf32>
    %113 = arith.mulf %108, %112 : vector<8x128xf32>
    %114 = arith.truncf %113 : vector<8x128xf32> to vector<8x128xbf16>
    %c0_49 = arith.constant 0 : index
    %c0_50 = arith.constant 0 : index
    %115 = vector.load %arg7[%c0_49, %c0_50] : memref<128x128xbf16, #tpu.memory_space<vmem>>, vector<128x128xbf16>
    %cst_51 = arith.constant dense<0.000000e+00> : vector<8x128xf32>
    %116 = tpu.matmul %114, %115, %cst_51 {dimension_numbers = #tpu.dot_dimension_numbers<[1], [0], [0], [1], [0, 0, 1, 1], [], []>} : vector<8x128xbf16>, vector<128x128xbf16>, vector<8x128xf32> -> vector<8x128xf32>
    %117 = vector.broadcast %37 : vector<1x128xf32> to vector<8x128xf32>
    %118 = arith.addf %116, %117 : vector<8x128xf32>
    %cst_52 = arith.constant 0.000000e+00 : f32
    %119 = vector.broadcast %cst_52 : f32 to vector<8x128xf32>
    %120 = arith.maximumf %118, %119 : vector<8x128xf32>
    %121 = arith.truncf %120 : vector<8x128xf32> to vector<8x128xbf16>
    %c0_53 = arith.constant 0 : index
    %c0_54 = arith.constant 0 : index
    %122 = vector.load %arg9[%c0_53, %c0_54] : memref<128x256xbf16, #tpu.memory_space<vmem>>, vector<128x256xbf16>
    %cst_55 = arith.constant dense<0.000000e+00> : vector<8x256xf32>
    %123 = tpu.matmul %121, %122, %cst_55 {dimension_numbers = #tpu.dot_dimension_numbers<[1], [0], [0], [1], [0, 0, 1, 1], [], []>} : vector<8x128xbf16>, vector<128x256xbf16>, vector<8x256xf32> -> vector<8x256xf32>
    %124 = vector.broadcast %38 : vector<1x256xf32> to vector<8x256xf32>
    %125 = arith.addf %123, %124 : vector<8x256xf32>
    %c1 = arith.constant 1 : index
    %c0_56 = arith.constant 0 : index
    %c0_57 = arith.constant 0 : index
    %126 = vector.load %arg11[%c1, %c0_56, %c0_57] : memref<8x8x256xf32, #tpu.memory_space<vmem>>, vector<1x8x256xf32>
    %127 = vector.shape_cast %126 : vector<1x8x256xf32> to vector<8x256xf32>
    %128 = vector.shape_cast %125 : vector<8x256xf32> to vector<1x8x256xf32>
    tpu.vector_store %arg11[%c1, %c0_56, %c0_57], %128 {strides = array<i32>} : memref<8x8x256xf32, #tpu.memory_space<vmem>>, vector<1x8x256xf32>,
    %c16 = arith.constant 16 : index
    %c0_58 = arith.constant 0 : index
    %129 = vector.load %arg13[%c16, %c0_58] : memref<64x512xf32, #tpu.memory_space<vmem>>, vector<8x512xf32>
    %130 = arith.truncf %113 : vector<8x128xf32> to vector<8x128xbf16>
    %c0_59 = arith.constant 0 : index
    %c0_60 = arith.constant 0 : index
    %131 = vector.load %arg5[%c0_59, %c0_60] : memref<128x512xbf16, #tpu.memory_space<vmem>>, vector<128x512xbf16>
    %cst_61 = arith.constant dense<0.000000e+00> : vector<8x512xf32>
    %132 = tpu.matmul %130, %131, %cst_61 {dimension_numbers = #tpu.dot_dimension_numbers<[1], [0], [0], [1], [0, 0, 1, 1], [], []>} : vector<8x128xbf16>, vector<128x512xbf16>, vector<8x512xf32> -> vector<8x512xf32>
    %133 = arith.addf %129, %132 : vector<8x512xf32>
    %134 = vector.extract_strided_slice %133 {offsets = [0, 0], sizes = [8, 128], strides = [1, 1]} : vector<8x512xf32> to vector<8x128xf32>
    %135 = arith.negf %134 : vector<8x128xf32>
    %136 = math.exp %135 : vector<8x128xf32>
    %cst_62 = arith.constant 1.000000e+00 : f32
    %137 = vector.broadcast %cst_62 : f32 to vector<8x128xf32>
    %138 = arith.addf %137, %136 : vector<8x128xf32>
    %139 = arith.divf %137, %138 : vector<8x128xf32>
    %140 = vector.extract_strided_slice %133 {offsets = [0, 128], sizes = [8, 128], strides = [1, 1]} : vector<8x512xf32> to vector<8x128xf32>
    %141 = arith.negf %140 : vector<8x128xf32>
    %142 = math.exp %141 : vector<8x128xf32>
    %cst_63 = arith.constant 1.000000e+00 : f32
    %143 = vector.broadcast %cst_63 : f32 to vector<8x128xf32>
    %144 = arith.addf %143, %142 : vector<8x128xf32>
    %145 = arith.divf %143, %144 : vector<8x128xf32>
    %146 = vector.extract_strided_slice %133 {offsets = [0, 256], sizes = [8, 128], strides = [1, 1]} : vector<8x512xf32> to vector<8x128xf32>
    %147 = math.tanh %146 : vector<8x128xf32>
    %148 = vector.extract_strided_slice %133 {offsets = [0, 384], sizes = [8, 128], strides = [1, 1]} : vector<8x512xf32> to vector<8x128xf32>
    %149 = arith.negf %148 : vector<8x128xf32>
    %150 = math.exp %149 : vector<8x128xf32>
    %cst_64 = arith.constant 1.000000e+00 : f32
    %151 = vector.broadcast %cst_64 : f32 to vector<8x128xf32>
    %152 = arith.addf %151, %150 : vector<8x128xf32>
    %153 = arith.divf %151, %152 : vector<8x128xf32>
    %154 = arith.mulf %145, %111 : vector<8x128xf32>
    %155 = arith.mulf %139, %147 : vector<8x128xf32>
    %156 = arith.addf %154, %155 : vector<8x128xf32>
    %157 = math.tanh %156 : vector<8x128xf32>
    %158 = arith.mulf %153, %157 : vector<8x128xf32>
    %159 = arith.truncf %158 : vector<8x128xf32> to vector<8x128xbf16>
    %c0_65 = arith.constant 0 : index
    %c0_66 = arith.constant 0 : index
    %160 = vector.load %arg7[%c0_65, %c0_66] : memref<128x128xbf16, #tpu.memory_space<vmem>>, vector<128x128xbf16>
    %cst_67 = arith.constant dense<0.000000e+00> : vector<8x128xf32>
    %161 = tpu.matmul %159, %160, %cst_67 {dimension_numbers = #tpu.dot_dimension_numbers<[1], [0], [0], [1], [0, 0, 1, 1], [], []>} : vector<8x128xbf16>, vector<128x128xbf16>, vector<8x128xf32> -> vector<8x128xf32>
    %162 = vector.broadcast %37 : vector<1x128xf32> to vector<8x128xf32>
    %163 = arith.addf %161, %162 : vector<8x128xf32>
    %cst_68 = arith.constant 0.000000e+00 : f32
    %164 = vector.broadcast %cst_68 : f32 to vector<8x128xf32>
    %165 = arith.maximumf %163, %164 : vector<8x128xf32>
    %166 = arith.truncf %165 : vector<8x128xf32> to vector<8x128xbf16>
    %c0_69 = arith.constant 0 : index
    %c0_70 = arith.constant 0 : index
    %167 = vector.load %arg9[%c0_69, %c0_70] : memref<128x256xbf16, #tpu.memory_space<vmem>>, vector<128x256xbf16>
    %cst_71 = arith.constant dense<0.000000e+00> : vector<8x256xf32>
    %168 = tpu.matmul %166, %167, %cst_71 {dimension_numbers = #tpu.dot_dimension_numbers<[1], [0], [0], [1], [0, 0, 1, 1], [], []>} : vector<8x128xbf16>, vector<128x256xbf16>, vector<8x256xf32> -> vector<8x256xf32>
    %169 = vector.broadcast %38 : vector<1x256xf32> to vector<8x256xf32>
    %170 = arith.addf %168, %169 : vector<8x256xf32>
    %c2 = arith.constant 2 : index
    %c0_72 = arith.constant 0 : index
    %c0_73 = arith.constant 0 : index
    %171 = vector.load %arg11[%c2, %c0_72, %c0_73] : memref<8x8x256xf32, #tpu.memory_space<vmem>>, vector<1x8x256xf32>
    %172 = vector.shape_cast %171 : vector<1x8x256xf32> to vector<8x256xf32>
    %173 = vector.shape_cast %170 : vector<8x256xf32> to vector<1x8x256xf32>
    tpu.vector_store %arg11[%c2, %c0_72, %c0_73], %173 {strides = array<i32>} : memref<8x8x256xf32, #tpu.memory_space<vmem>>, vector<1x8x256xf32>,
    %c24 = arith.constant 24 : index
    %c0_74 = arith.constant 0 : index
    %174 = vector.load %arg13[%c24, %c0_74] : memref<64x512xf32, #tpu.memory_space<vmem>>, vector<8x512xf32>
    %175 = arith.truncf %158 : vector<8x128xf32> to vector<8x128xbf16>
    %c0_75 = arith.constant 0 : index
    %c0_76 = arith.constant 0 : index
    %176 = vector.load %arg5[%c0_75, %c0_76] : memref<128x512xbf16, #tpu.memory_space<vmem>>, vector<128x512xbf16>
    %cst_77 = arith.constant dense<0.000000e+00> : vector<8x512xf32>
    %177 = tpu.matmul %175, %176, %cst_77 {dimension_numbers = #tpu.dot_dimension_numbers<[1], [0], [0], [1], [0, 0, 1, 1], [], []>} : vector<8x128xbf16>, vector<128x512xbf16>, vector<8x512xf32> -> vector<8x512xf32>
    %178 = arith.addf %174, %177 : vector<8x512xf32>
    %179 = vector.extract_strided_slice %178 {offsets = [0, 0], sizes = [8, 128], strides = [1, 1]} : vector<8x512xf32> to vector<8x128xf32>
    %180 = arith.negf %179 : vector<8x128xf32>
    %181 = math.exp %180 : vector<8x128xf32>
    %cst_78 = arith.constant 1.000000e+00 : f32
    %182 = vector.broadcast %cst_78 : f32 to vector<8x128xf32>
    %183 = arith.addf %182, %181 : vector<8x128xf32>
    %184 = arith.divf %182, %183 : vector<8x128xf32>
    %185 = vector.extract_strided_slice %178 {offsets = [0, 128], sizes = [8, 128], strides = [1, 1]} : vector<8x512xf32> to vector<8x128xf32>
    %186 = arith.negf %185 : vector<8x128xf32>
    %187 = math.exp %186 : vector<8x128xf32>
    %cst_79 = arith.constant 1.000000e+00 : f32
    %188 = vector.broadcast %cst_79 : f32 to vector<8x128xf32>
    %189 = arith.addf %188, %187 : vector<8x128xf32>
    %190 = arith.divf %188, %189 : vector<8x128xf32>
    %191 = vector.extract_strided_slice %178 {offsets = [0, 256], sizes = [8, 128], strides = [1, 1]} : vector<8x512xf32> to vector<8x128xf32>
    %192 = math.tanh %191 : vector<8x128xf32>
    %193 = vector.extract_strided_slice %178 {offsets = [0, 384], sizes = [8, 128], strides = [1, 1]} : vector<8x512xf32> to vector<8x128xf32>
    %194 = arith.negf %193 : vector<8x128xf32>
    %195 = math.exp %194 : vector<8x128xf32>
    %cst_80 = arith.constant 1.000000e+00 : f32
    %196 = vector.broadcast %cst_80 : f32 to vector<8x128xf32>
    %197 = arith.addf %196, %195 : vector<8x128xf32>
    %198 = arith.divf %196, %197 : vector<8x128xf32>
    %199 = arith.mulf %190, %156 : vector<8x128xf32>
    %200 = arith.mulf %184, %192 : vector<8x128xf32>
    %201 = arith.addf %199, %200 : vector<8x128xf32>
    %202 = math.tanh %201 : vector<8x128xf32>
    %203 = arith.mulf %198, %202 : vector<8x128xf32>
    %204 = arith.truncf %203 : vector<8x128xf32> to vector<8x128xbf16>
    %c0_81 = arith.constant 0 : index
    %c0_82 = arith.constant 0 : index
    %205 = vector.load %arg7[%c0_81, %c0_82] : memref<128x128xbf16, #tpu.memory_space<vmem>>, vector<128x128xbf16>
    %cst_83 = arith.constant dense<0.000000e+00> : vector<8x128xf32>
    %206 = tpu.matmul %204, %205, %cst_83 {dimension_numbers = #tpu.dot_dimension_numbers<[1], [0], [0], [1], [0, 0, 1, 1], [], []>} : vector<8x128xbf16>, vector<128x128xbf16>, vector<8x128xf32> -> vector<8x128xf32>
    %207 = vector.broadcast %37 : vector<1x128xf32> to vector<8x128xf32>
    %208 = arith.addf %206, %207 : vector<8x128xf32>
    %cst_84 = arith.constant 0.000000e+00 : f32
    %209 = vector.broadcast %cst_84 : f32 to vector<8x128xf32>
    %210 = arith.maximumf %208, %209 : vector<8x128xf32>
    %211 = arith.truncf %210 : vector<8x128xf32> to vector<8x128xbf16>
    %c0_85 = arith.constant 0 : index
    %c0_86 = arith.constant 0 : index
    %212 = vector.load %arg9[%c0_85, %c0_86] : memref<128x256xbf16, #tpu.memory_space<vmem>>, vector<128x256xbf16>
    %cst_87 = arith.constant dense<0.000000e+00> : vector<8x256xf32>
    %213 = tpu.matmul %211, %212, %cst_87 {dimension_numbers = #tpu.dot_dimension_numbers<[1], [0], [0], [1], [0, 0, 1, 1], [], []>} : vector<8x128xbf16>, vector<128x256xbf16>, vector<8x256xf32> -> vector<8x256xf32>
    %214 = vector.broadcast %38 : vector<1x256xf32> to vector<8x256xf32>
    %215 = arith.addf %213, %214 : vector<8x256xf32>
    %c3 = arith.constant 3 : index
    %c0_88 = arith.constant 0 : index
    %c0_89 = arith.constant 0 : index
    %216 = vector.load %arg11[%c3, %c0_88, %c0_89] : memref<8x8x256xf32, #tpu.memory_space<vmem>>, vector<1x8x256xf32>
    %217 = vector.shape_cast %216 : vector<1x8x256xf32> to vector<8x256xf32>
    %218 = vector.shape_cast %215 : vector<8x256xf32> to vector<1x8x256xf32>
    tpu.vector_store %arg11[%c3, %c0_88, %c0_89], %218 {strides = array<i32>} : memref<8x8x256xf32, #tpu.memory_space<vmem>>, vector<1x8x256xf32>,
    %c32 = arith.constant 32 : index
    %c0_90 = arith.constant 0 : index
    %219 = vector.load %arg13[%c32, %c0_90] : memref<64x512xf32, #tpu.memory_space<vmem>>, vector<8x512xf32>
    %220 = arith.truncf %203 : vector<8x128xf32> to vector<8x128xbf16>
    %c0_91 = arith.constant 0 : index
    %c0_92 = arith.constant 0 : index
    %221 = vector.load %arg5[%c0_91, %c0_92] : memref<128x512xbf16, #tpu.memory_space<vmem>>, vector<128x512xbf16>
    %cst_93 = arith.constant dense<0.000000e+00> : vector<8x512xf32>
    %222 = tpu.matmul %220, %221, %cst_93 {dimension_numbers = #tpu.dot_dimension_numbers<[1], [0], [0], [1], [0, 0, 1, 1], [], []>} : vector<8x128xbf16>, vector<128x512xbf16>, vector<8x512xf32> -> vector<8x512xf32>
    %223 = arith.addf %219, %222 : vector<8x512xf32>
    %224 = vector.extract_strided_slice %223 {offsets = [0, 0], sizes = [8, 128], strides = [1, 1]} : vector<8x512xf32> to vector<8x128xf32>
    %225 = arith.negf %224 : vector<8x128xf32>
    %226 = math.exp %225 : vector<8x128xf32>
    %cst_94 = arith.constant 1.000000e+00 : f32
    %227 = vector.broadcast %cst_94 : f32 to vector<8x128xf32>
    %228 = arith.addf %227, %226 : vector<8x128xf32>
    %229 = arith.divf %227, %228 : vector<8x128xf32>
    %230 = vector.extract_strided_slice %223 {offsets = [0, 128], sizes = [8, 128], strides = [1, 1]} : vector<8x512xf32> to vector<8x128xf32>
    %231 = arith.negf %230 : vector<8x128xf32>
    %232 = math.exp %231 : vector<8x128xf32>
    %cst_95 = arith.constant 1.000000e+00 : f32
    %233 = vector.broadcast %cst_95 : f32 to vector<8x128xf32>
    %234 = arith.addf %233, %232 : vector<8x128xf32>
    %235 = arith.divf %233, %234 : vector<8x128xf32>
    %236 = vector.extract_strided_slice %223 {offsets = [0, 256], sizes = [8, 128], strides = [1, 1]} : vector<8x512xf32> to vector<8x128xf32>
    %237 = math.tanh %236 : vector<8x128xf32>
    %238 = vector.extract_strided_slice %223 {offsets = [0, 384], sizes = [8, 128], strides = [1, 1]} : vector<8x512xf32> to vector<8x128xf32>
    %239 = arith.negf %238 : vector<8x128xf32>
    %240 = math.exp %239 : vector<8x128xf32>
    %cst_96 = arith.constant 1.000000e+00 : f32
    %241 = vector.broadcast %cst_96 : f32 to vector<8x128xf32>
    %242 = arith.addf %241, %240 : vector<8x128xf32>
    %243 = arith.divf %241, %242 : vector<8x128xf32>
    %244 = arith.mulf %235, %201 : vector<8x128xf32>
    %245 = arith.mulf %229, %237 : vector<8x128xf32>
    %246 = arith.addf %244, %245 : vector<8x128xf32>
    %247 = math.tanh %246 : vector<8x128xf32>
    %248 = arith.mulf %243, %247 : vector<8x128xf32>
    %249 = arith.truncf %248 : vector<8x128xf32> to vector<8x128xbf16>
    %c0_97 = arith.constant 0 : index
    %c0_98 = arith.constant 0 : index
    %250 = vector.load %arg7[%c0_97, %c0_98] : memref<128x128xbf16, #tpu.memory_space<vmem>>, vector<128x128xbf16>
    %cst_99 = arith.constant dense<0.000000e+00> : vector<8x128xf32>
    %251 = tpu.matmul %249, %250, %cst_99 {dimension_numbers = #tpu.dot_dimension_numbers<[1], [0], [0], [1], [0, 0, 1, 1], [], []>} : vector<8x128xbf16>, vector<128x128xbf16>, vector<8x128xf32> -> vector<8x128xf32>
    %252 = vector.broadcast %37 : vector<1x128xf32> to vector<8x128xf32>
    %253 = arith.addf %251, %252 : vector<8x128xf32>
    %cst_100 = arith.constant 0.000000e+00 : f32
    %254 = vector.broadcast %cst_100 : f32 to vector<8x128xf32>
    %255 = arith.maximumf %253, %254 : vector<8x128xf32>
    %256 = arith.truncf %255 : vector<8x128xf32> to vector<8x128xbf16>
    %c0_101 = arith.constant 0 : index
    %c0_102 = arith.constant 0 : index
    %257 = vector.load %arg9[%c0_101, %c0_102] : memref<128x256xbf16, #tpu.memory_space<vmem>>, vector<128x256xbf16>
    %cst_103 = arith.constant dense<0.000000e+00> : vector<8x256xf32>
    %258 = tpu.matmul %256, %257, %cst_103 {dimension_numbers = #tpu.dot_dimension_numbers<[1], [0], [0], [1], [0, 0, 1, 1], [], []>} : vector<8x128xbf16>, vector<128x256xbf16>, vector<8x256xf32> -> vector<8x256xf32>
    %259 = vector.broadcast %38 : vector<1x256xf32> to vector<8x256xf32>
    %260 = arith.addf %258, %259 : vector<8x256xf32>
    %c4 = arith.constant 4 : index
    %c0_104 = arith.constant 0 : index
    %c0_105 = arith.constant 0 : index
    %261 = vector.load %arg11[%c4, %c0_104, %c0_105] : memref<8x8x256xf32, #tpu.memory_space<vmem>>, vector<1x8x256xf32>
    %262 = vector.shape_cast %261 : vector<1x8x256xf32> to vector<8x256xf32>
    %263 = vector.shape_cast %260 : vector<8x256xf32> to vector<1x8x256xf32>
    tpu.vector_store %arg11[%c4, %c0_104, %c0_105], %263 {strides = array<i32>} : memref<8x8x256xf32, #tpu.memory_space<vmem>>, vector<1x8x256xf32>,
    %c40 = arith.constant 40 : index
    %c0_106 = arith.constant 0 : index
    %264 = vector.load %arg13[%c40, %c0_106] : memref<64x512xf32, #tpu.memory_space<vmem>>, vector<8x512xf32>
    %265 = arith.truncf %248 : vector<8x128xf32> to vector<8x128xbf16>
    %c0_107 = arith.constant 0 : index
    %c0_108 = arith.constant 0 : index
    %266 = vector.load %arg5[%c0_107, %c0_108] : memref<128x512xbf16, #tpu.memory_space<vmem>>, vector<128x512xbf16>
    %cst_109 = arith.constant dense<0.000000e+00> : vector<8x512xf32>
    %267 = tpu.matmul %265, %266, %cst_109 {dimension_numbers = #tpu.dot_dimension_numbers<[1], [0], [0], [1], [0, 0, 1, 1], [], []>} : vector<8x128xbf16>, vector<128x512xbf16>, vector<8x512xf32> -> vector<8x512xf32>
    %268 = arith.addf %264, %267 : vector<8x512xf32>
    %269 = vector.extract_strided_slice %268 {offsets = [0, 0], sizes = [8, 128], strides = [1, 1]} : vector<8x512xf32> to vector<8x128xf32>
    %270 = arith.negf %269 : vector<8x128xf32>
    %271 = math.exp %270 : vector<8x128xf32>
    %cst_110 = arith.constant 1.000000e+00 : f32
    %272 = vector.broadcast %cst_110 : f32 to vector<8x128xf32>
    %273 = arith.addf %272, %271 : vector<8x128xf32>
    %274 = arith.divf %272, %273 : vector<8x128xf32>
    %275 = vector.extract_strided_slice %268 {offsets = [0, 128], sizes = [8, 128], strides = [1, 1]} : vector<8x512xf32> to vector<8x128xf32>
    %276 = arith.negf %275 : vector<8x128xf32>
    %277 = math.exp %276 : vector<8x128xf32>
    %cst_111 = arith.constant 1.000000e+00 : f32
    %278 = vector.broadcast %cst_111 : f32 to vector<8x128xf32>
    %279 = arith.addf %278, %277 : vector<8x128xf32>
    %280 = arith.divf %278, %279 : vector<8x128xf32>
    %281 = vector.extract_strided_slice %268 {offsets = [0, 256], sizes = [8, 128], strides = [1, 1]} : vector<8x512xf32> to vector<8x128xf32>
    %282 = math.tanh %281 : vector<8x128xf32>
    %283 = vector.extract_strided_slice %268 {offsets = [0, 384], sizes = [8, 128], strides = [1, 1]} : vector<8x512xf32> to vector<8x128xf32>
    %284 = arith.negf %283 : vector<8x128xf32>
    %285 = math.exp %284 : vector<8x128xf32>
    %cst_112 = arith.constant 1.000000e+00 : f32
    %286 = vector.broadcast %cst_112 : f32 to vector<8x128xf32>
    %287 = arith.addf %286, %285 : vector<8x128xf32>
    %288 = arith.divf %286, %287 : vector<8x128xf32>
    %289 = arith.mulf %280, %246 : vector<8x128xf32>
    %290 = arith.mulf %274, %282 : vector<8x128xf32>
    %291 = arith.addf %289, %290 : vector<8x128xf32>
    %292 = math.tanh %291 : vector<8x128xf32>
    %293 = arith.mulf %288, %292 : vector<8x128xf32>
    %294 = arith.truncf %293 : vector<8x128xf32> to vector<8x128xbf16>
    %c0_113 = arith.constant 0 : index
    %c0_114 = arith.constant 0 : index
    %295 = vector.load %arg7[%c0_113, %c0_114] : memref<128x128xbf16, #tpu.memory_space<vmem>>, vector<128x128xbf16>
    %cst_115 = arith.constant dense<0.000000e+00> : vector<8x128xf32>
    %296 = tpu.matmul %294, %295, %cst_115 {dimension_numbers = #tpu.dot_dimension_numbers<[1], [0], [0], [1], [0, 0, 1, 1], [], []>} : vector<8x128xbf16>, vector<128x128xbf16>, vector<8x128xf32> -> vector<8x128xf32>
    %297 = vector.broadcast %37 : vector<1x128xf32> to vector<8x128xf32>
    %298 = arith.addf %296, %297 : vector<8x128xf32>
    %cst_116 = arith.constant 0.000000e+00 : f32
    %299 = vector.broadcast %cst_116 : f32 to vector<8x128xf32>
    %300 = arith.maximumf %298, %299 : vector<8x128xf32>
    %301 = arith.truncf %300 : vector<8x128xf32> to vector<8x128xbf16>
    %c0_117 = arith.constant 0 : index
    %c0_118 = arith.constant 0 : index
    %302 = vector.load %arg9[%c0_117, %c0_118] : memref<128x256xbf16, #tpu.memory_space<vmem>>, vector<128x256xbf16>
    %cst_119 = arith.constant dense<0.000000e+00> : vector<8x256xf32>
    %303 = tpu.matmul %301, %302, %cst_119 {dimension_numbers = #tpu.dot_dimension_numbers<[1], [0], [0], [1], [0, 0, 1, 1], [], []>} : vector<8x128xbf16>, vector<128x256xbf16>, vector<8x256xf32> -> vector<8x256xf32>
    %304 = vector.broadcast %38 : vector<1x256xf32> to vector<8x256xf32>
    %305 = arith.addf %303, %304 : vector<8x256xf32>
    %c5 = arith.constant 5 : index
    %c0_120 = arith.constant 0 : index
    %c0_121 = arith.constant 0 : index
    %306 = vector.load %arg11[%c5, %c0_120, %c0_121] : memref<8x8x256xf32, #tpu.memory_space<vmem>>, vector<1x8x256xf32>
    %307 = vector.shape_cast %306 : vector<1x8x256xf32> to vector<8x256xf32>
    %308 = vector.shape_cast %305 : vector<8x256xf32> to vector<1x8x256xf32>
    tpu.vector_store %arg11[%c5, %c0_120, %c0_121], %308 {strides = array<i32>} : memref<8x8x256xf32, #tpu.memory_space<vmem>>, vector<1x8x256xf32>,
    %c48 = arith.constant 48 : index
    %c0_122 = arith.constant 0 : index
    %309 = vector.load %arg13[%c48, %c0_122] : memref<64x512xf32, #tpu.memory_space<vmem>>, vector<8x512xf32>
    %310 = arith.truncf %293 : vector<8x128xf32> to vector<8x128xbf16>
    %c0_123 = arith.constant 0 : index
    %c0_124 = arith.constant 0 : index
    %311 = vector.load %arg5[%c0_123, %c0_124] : memref<128x512xbf16, #tpu.memory_space<vmem>>, vector<128x512xbf16>
    %cst_125 = arith.constant dense<0.000000e+00> : vector<8x512xf32>
    %312 = tpu.matmul %310, %311, %cst_125 {dimension_numbers = #tpu.dot_dimension_numbers<[1], [0], [0], [1], [0, 0, 1, 1], [], []>} : vector<8x128xbf16>, vector<128x512xbf16>, vector<8x512xf32> -> vector<8x512xf32>
    %313 = arith.addf %309, %312 : vector<8x512xf32>
    %314 = vector.extract_strided_slice %313 {offsets = [0, 0], sizes = [8, 128], strides = [1, 1]} : vector<8x512xf32> to vector<8x128xf32>
    %315 = arith.negf %314 : vector<8x128xf32>
    %316 = math.exp %315 : vector<8x128xf32>
    %cst_126 = arith.constant 1.000000e+00 : f32
    %317 = vector.broadcast %cst_126 : f32 to vector<8x128xf32>
    %318 = arith.addf %317, %316 : vector<8x128xf32>
    %319 = arith.divf %317, %318 : vector<8x128xf32>
    %320 = vector.extract_strided_slice %313 {offsets = [0, 128], sizes = [8, 128], strides = [1, 1]} : vector<8x512xf32> to vector<8x128xf32>
    %321 = arith.negf %320 : vector<8x128xf32>
    %322 = math.exp %321 : vector<8x128xf32>
    %cst_127 = arith.constant 1.000000e+00 : f32
    %323 = vector.broadcast %cst_127 : f32 to vector<8x128xf32>
    %324 = arith.addf %323, %322 : vector<8x128xf32>
    %325 = arith.divf %323, %324 : vector<8x128xf32>
    %326 = vector.extract_strided_slice %313 {offsets = [0, 256], sizes = [8, 128], strides = [1, 1]} : vector<8x512xf32> to vector<8x128xf32>
    %327 = math.tanh %326 : vector<8x128xf32>
    %328 = vector.extract_strided_slice %313 {offsets = [0, 384], sizes = [8, 128], strides = [1, 1]} : vector<8x512xf32> to vector<8x128xf32>
    %329 = arith.negf %328 : vector<8x128xf32>
    %330 = math.exp %329 : vector<8x128xf32>
    %cst_128 = arith.constant 1.000000e+00 : f32
    %331 = vector.broadcast %cst_128 : f32 to vector<8x128xf32>
    %332 = arith.addf %331, %330 : vector<8x128xf32>
    %333 = arith.divf %331, %332 : vector<8x128xf32>
    %334 = arith.mulf %325, %291 : vector<8x128xf32>
    %335 = arith.mulf %319, %327 : vector<8x128xf32>
    %336 = arith.addf %334, %335 : vector<8x128xf32>
    %337 = math.tanh %336 : vector<8x128xf32>
    %338 = arith.mulf %333, %337 : vector<8x128xf32>
    %339 = arith.truncf %338 : vector<8x128xf32> to vector<8x128xbf16>
    %c0_129 = arith.constant 0 : index
    %c0_130 = arith.constant 0 : index
    %340 = vector.load %arg7[%c0_129, %c0_130] : memref<128x128xbf16, #tpu.memory_space<vmem>>, vector<128x128xbf16>
    %cst_131 = arith.constant dense<0.000000e+00> : vector<8x128xf32>
    %341 = tpu.matmul %339, %340, %cst_131 {dimension_numbers = #tpu.dot_dimension_numbers<[1], [0], [0], [1], [0, 0, 1, 1], [], []>} : vector<8x128xbf16>, vector<128x128xbf16>, vector<8x128xf32> -> vector<8x128xf32>
    %342 = vector.broadcast %37 : vector<1x128xf32> to vector<8x128xf32>
    %343 = arith.addf %341, %342 : vector<8x128xf32>
    %cst_132 = arith.constant 0.000000e+00 : f32
    %344 = vector.broadcast %cst_132 : f32 to vector<8x128xf32>
    %345 = arith.maximumf %343, %344 : vector<8x128xf32>
    %346 = arith.truncf %345 : vector<8x128xf32> to vector<8x128xbf16>
    %c0_133 = arith.constant 0 : index
    %c0_134 = arith.constant 0 : index
    %347 = vector.load %arg9[%c0_133, %c0_134] : memref<128x256xbf16, #tpu.memory_space<vmem>>, vector<128x256xbf16>
    %cst_135 = arith.constant dense<0.000000e+00> : vector<8x256xf32>
    %348 = tpu.matmul %346, %347, %cst_135 {dimension_numbers = #tpu.dot_dimension_numbers<[1], [0], [0], [1], [0, 0, 1, 1], [], []>} : vector<8x128xbf16>, vector<128x256xbf16>, vector<8x256xf32> -> vector<8x256xf32>
    %349 = vector.broadcast %38 : vector<1x256xf32> to vector<8x256xf32>
    %350 = arith.addf %348, %349 : vector<8x256xf32>
    %c6 = arith.constant 6 : index
    %c0_136 = arith.constant 0 : index
    %c0_137 = arith.constant 0 : index
    %351 = vector.load %arg11[%c6, %c0_136, %c0_137] : memref<8x8x256xf32, #tpu.memory_space<vmem>>, vector<1x8x256xf32>
    %352 = vector.shape_cast %351 : vector<1x8x256xf32> to vector<8x256xf32>
    %353 = vector.shape_cast %350 : vector<8x256xf32> to vector<1x8x256xf32>
    tpu.vector_store %arg11[%c6, %c0_136, %c0_137], %353 {strides = array<i32>} : memref<8x8x256xf32, #tpu.memory_space<vmem>>, vector<1x8x256xf32>,
    %c56 = arith.constant 56 : index
    %c0_138 = arith.constant 0 : index
    %354 = vector.load %arg13[%c56, %c0_138] : memref<64x512xf32, #tpu.memory_space<vmem>>, vector<8x512xf32>
    %355 = arith.truncf %338 : vector<8x128xf32> to vector<8x128xbf16>
    %c0_139 = arith.constant 0 : index
    %c0_140 = arith.constant 0 : index
    %356 = vector.load %arg5[%c0_139, %c0_140] : memref<128x512xbf16, #tpu.memory_space<vmem>>, vector<128x512xbf16>
    %cst_141 = arith.constant dense<0.000000e+00> : vector<8x512xf32>
    %357 = tpu.matmul %355, %356, %cst_141 {dimension_numbers = #tpu.dot_dimension_numbers<[1], [0], [0], [1], [0, 0, 1, 1], [], []>} : vector<8x128xbf16>, vector<128x512xbf16>, vector<8x512xf32> -> vector<8x512xf32>
    %358 = arith.addf %354, %357 : vector<8x512xf32>
    %359 = vector.extract_strided_slice %358 {offsets = [0, 0], sizes = [8, 128], strides = [1, 1]} : vector<8x512xf32> to vector<8x128xf32>
    %360 = arith.negf %359 : vector<8x128xf32>
    %361 = math.exp %360 : vector<8x128xf32>
    %cst_142 = arith.constant 1.000000e+00 : f32
    %362 = vector.broadcast %cst_142 : f32 to vector<8x128xf32>
    %363 = arith.addf %362, %361 : vector<8x128xf32>
    %364 = arith.divf %362, %363 : vector<8x128xf32>
    %365 = vector.extract_strided_slice %358 {offsets = [0, 128], sizes = [8, 128], strides = [1, 1]} : vector<8x512xf32> to vector<8x128xf32>
    %366 = arith.negf %365 : vector<8x128xf32>
    %367 = math.exp %366 : vector<8x128xf32>
    %cst_143 = arith.constant 1.000000e+00 : f32
    %368 = vector.broadcast %cst_143 : f32 to vector<8x128xf32>
    %369 = arith.addf %368, %367 : vector<8x128xf32>
    %370 = arith.divf %368, %369 : vector<8x128xf32>
    %371 = vector.extract_strided_slice %358 {offsets = [0, 256], sizes = [8, 128], strides = [1, 1]} : vector<8x512xf32> to vector<8x128xf32>
    %372 = math.tanh %371 : vector<8x128xf32>
    %373 = vector.extract_strided_slice %358 {offsets = [0, 384], sizes = [8, 128], strides = [1, 1]} : vector<8x512xf32> to vector<8x128xf32>
    %374 = arith.negf %373 : vector<8x128xf32>
    %375 = math.exp %374 : vector<8x128xf32>
    %cst_144 = arith.constant 1.000000e+00 : f32
    %376 = vector.broadcast %cst_144 : f32 to vector<8x128xf32>
    %377 = arith.addf %376, %375 : vector<8x128xf32>
    %378 = arith.divf %376, %377 : vector<8x128xf32>
    %379 = arith.mulf %370, %336 : vector<8x128xf32>
    %380 = arith.mulf %364, %372 : vector<8x128xf32>
    %381 = arith.addf %379, %380 : vector<8x128xf32>
    %382 = math.tanh %381 : vector<8x128xf32>
    %383 = arith.mulf %378, %382 : vector<8x128xf32>
    %384 = arith.truncf %383 : vector<8x128xf32> to vector<8x128xbf16>
    %c0_145 = arith.constant 0 : index
    %c0_146 = arith.constant 0 : index
    %385 = vector.load %arg7[%c0_145, %c0_146] : memref<128x128xbf16, #tpu.memory_space<vmem>>, vector<128x128xbf16>
    %cst_147 = arith.constant dense<0.000000e+00> : vector<8x128xf32>
    %386 = tpu.matmul %384, %385, %cst_147 {dimension_numbers = #tpu.dot_dimension_numbers<[1], [0], [0], [1], [0, 0, 1, 1], [], []>} : vector<8x128xbf16>, vector<128x128xbf16>, vector<8x128xf32> -> vector<8x128xf32>
    %387 = vector.broadcast %37 : vector<1x128xf32> to vector<8x128xf32>
    %388 = arith.addf %386, %387 : vector<8x128xf32>
    %cst_148 = arith.constant 0.000000e+00 : f32
    %389 = vector.broadcast %cst_148 : f32 to vector<8x128xf32>
    %390 = arith.maximumf %388, %389 : vector<8x128xf32>
    %391 = arith.truncf %390 : vector<8x128xf32> to vector<8x128xbf16>
    %c0_149 = arith.constant 0 : index
    %c0_150 = arith.constant 0 : index
    %392 = vector.load %arg9[%c0_149, %c0_150] : memref<128x256xbf16, #tpu.memory_space<vmem>>, vector<128x256xbf16>
    %cst_151 = arith.constant dense<0.000000e+00> : vector<8x256xf32>
    %393 = tpu.matmul %391, %392, %cst_151 {dimension_numbers = #tpu.dot_dimension_numbers<[1], [0], [0], [1], [0, 0, 1, 1], [], []>} : vector<8x128xbf16>, vector<128x256xbf16>, vector<8x256xf32> -> vector<8x256xf32>
    %394 = vector.broadcast %38 : vector<1x256xf32> to vector<8x256xf32>
    %395 = arith.addf %393, %394 : vector<8x256xf32>
    %c7 = arith.constant 7 : index
    %c0_152 = arith.constant 0 : index
    %c0_153 = arith.constant 0 : index
    %396 = vector.load %arg11[%c7, %c0_152, %c0_153] : memref<8x8x256xf32, #tpu.memory_space<vmem>>, vector<1x8x256xf32>
    %397 = vector.shape_cast %396 : vector<1x8x256xf32> to vector<8x256xf32>
    %398 = vector.shape_cast %395 : vector<8x256xf32> to vector<1x8x256xf32>
    tpu.vector_store %arg11[%c7, %c0_152, %c0_153], %398 {strides = array<i32>} : memref<8x8x256xf32, #tpu.memory_space<vmem>>, vector<1x8x256xf32>,
    return
  }
}

</mosaic_0001>

<llo_original>
// kernel: image_caption_forward.1
$region0: #{image_caption_forward.1}
  #allocation0 [shape = 'u32[]', space=smem, size = 0x4, offset = 0x4, fixed_abs, tag = 'smem constant byte address 0x4 - core index']
  #allocation1 [shape = 'u32[144,128]{1,0:T(1,128)}', space=vmem, size = 0x12000, scoped, tag = 'internal scratch']
  #allocation2 [shape = 'bf16[2048,128]{1,0:T(16,128)(2,1)}', space=vmem, size = 0x80000, scoped, tag = 'scratch operand']
  #allocation3 [shape = 'f32[64,512]{1,0:T(8,128)}', space=vmem, size = 0x20000, scoped, tag = 'scratch operand']
  #allocation4 [shape = 's32[1]{0}', space=sflag, size = 0x4, scoped, tag = 'scratch operand']
  #allocation5 [shape = 's32[]', space=sflag, size = 0x4, offset = 0, fixed_abs, tag = 'sflag constant byte address 0x0 - dummy sync flag']
  %s0 = inlined_call_operand.vmem [shape: bf16[8,2048], index: 0, kind: input, shape index: {}]
  %s1 = inlined_call_operand.vmem [shape: bf16[2048,128], index: 1, kind: input, shape index: {}]
  %s2 = inlined_call_operand.vmem [shape: f32[1,128], index: 2, kind: input, shape index: {}]
  %s3 = inlined_call_operand.vmem [shape: bf16[64,128], index: 3, kind: input, shape index: {}]
  %s4 = inlined_call_operand.vmem [shape: bf16[128,512], index: 4, kind: input, shape index: {}]
  %s5 = inlined_call_operand.vmem [shape: bf16[128,512], index: 5, kind: input, shape index: {}]
  %s6 = inlined_call_operand.vmem [shape: f32[1,512], index: 6, kind: input, shape index: {}]
  %s7 = inlined_call_operand.vmem [shape: bf16[128,128], index: 7, kind: input, shape index: {}]
  %s8 = inlined_call_operand.vmem [shape: f32[1,128], index: 8, kind: input, shape index: {}]
  %s9 = inlined_call_operand.vmem [shape: bf16[128,256], index: 9, kind: input, shape index: {}]
  %s10 = inlined_call_operand.vmem [shape: f32[1,256], index: 10, kind: input, shape index: {}]
  %s11 = inlined_call_operand.vmem [shape: f32[8,8,256], index: 11, kind: output, shape index: {}]
  %s12 = sld [smem:[#allocation0]]
  $region84: #{image_caption_forward.1} parent=0
    _
  %s14 = ssub.s32 1, %s12
  %s15 = scalar_select 0, %s14, %s12
  // Predicated region
  $region2: #{image_caption_forward.1} parent=0 // pred_check
    _
  $region3: #{image_caption_forward.1} parent=0 // pred_check_branch
    %17 = sbr.rel (0) target = $region5
  $region4: #{image_caption_forward.1} parent=0 // pred_region
    _
  $region5: #{image_caption_forward.1} parent=0 // pred_fallthru
    _
  // Predicated region
  $region6: #{image_caption_forward.1} parent=0 // pred_check
    _
  $region7: #{image_caption_forward.1} parent=0 // pred_check_branch
    %19 = sbr.rel (0) target = $region9
  $region8: #{image_caption_forward.1} parent=0 // pred_region
    _
  $region9: #{image_caption_forward.1} parent=0 // pred_fallthru
    _
  // Predicated region
  $region10: #{image_caption_forward.1} parent=0 // pred_check
    _
  $region11: #{image_caption_forward.1} parent=0 // pred_check_branch
    %21 = sbr.rel (0) target = $region13
  $region12: #{image_caption_forward.1} parent=0 // pred_region
    _
  $region13: #{image_caption_forward.1} parent=0 // pred_fallthru
    _
  // Predicated region
  $region14: #{image_caption_forward.1} parent=0 // pred_check
    _
  $region15: #{image_caption_forward.1} parent=0 // pred_check_branch
    %23 = sbr.rel (0) target = $region17
  $region16: #{image_caption_forward.1} parent=0 // pred_region
    _
  $region17: #{image_caption_forward.1} parent=0 // pred_fallthru
    _
  // Predicated region
  $region18: #{image_caption_forward.1} parent=0 // pred_check
    _
  $region19: #{image_caption_forward.1} parent=0 // pred_check_branch
    %25 = sbr.rel (0) target = $region21
  $region20: #{image_caption_forward.1} parent=0 // pred_region
    _
  $region21: #{image_caption_forward.1} parent=0 // pred_fallthru
    _
  // Predicated region
  $region22: #{image_caption_forward.1} parent=0 // pred_check
    _
  $region23: #{image_caption_forward.1} parent=0 // pred_check_branch
    %27 = sbr.rel (0) target = $region25
  $region24: #{image_caption_forward.1} parent=0 // pred_region
    _
  $region25: #{image_caption_forward.1} parent=0 // pred_fallthru
    _
  // Predicated region
  $region26: #{image_caption_forward.1} parent=0 // pred_check
    _
  $region27: #{image_caption_forward.1} parent=0 // pred_check_branch
    %29 = sbr.rel (0) target = $region29
  $region28: #{image_caption_forward.1} parent=0 // pred_region
    _
  $region29: #{image_caption_forward.1} parent=0 // pred_fallthru
    _
  // Predicated region
  $region30: #{image_caption_forward.1} parent=0 // pred_check
    _
  $region31: #{image_caption_forward.1} parent=0 // pred_check_branch
    %31 = sbr.rel (0) target = $region33
  $region32: #{image_caption_forward.1} parent=0 // pred_region
    _
  $region33: #{image_caption_forward.1} parent=0 // pred_fallthru
    _
  // Predicated region
  $region34: #{image_caption_forward.1} parent=0 // pred_check
    _
  $region35: #{image_caption_forward.1} parent=0 // pred_check_branch
    %33 = sbr.rel (0) target = $region37
  $region36: #{image_caption_forward.1} parent=0 // pred_region
    _
  $region37: #{image_caption_forward.1} parent=0 // pred_fallthru
    _
  // Predicated region
  $region38: #{image_caption_forward.1} parent=0 // pred_check
    _
  $region39: #{image_caption_forward.1} parent=0 // pred_check_branch
    %35 = sbr.rel (0) target = $region41
  $region40: #{image_caption_forward.1} parent=0 // pred_region
    _
  $region41: #{image_caption_forward.1} parent=0 // pred_fallthru
    _
  %p38 = scmp.lt.u32.totalorder 1024, 8
  %p39 = pneg %p38
  // Predicated region
  $region42: #{image_caption_forward.1} parent=0 // pred_check
    _
  $region43: #{image_caption_forward.1} parent=0 // pred_check_branch
    %41 = sbr.rel (%p38) target = $region45
  $region44: #{image_caption_forward.1} parent=0 // pred_region
    %s56 = sand.u32 1024, 7
    %p57 = scmp.eq.s32.totalorder %s56, 0
    // Predicated region
    $region57: #{image_caption_forward.1} parent=44 // pred_check
      %p58 = pneg %p57
    $region58: #{image_caption_forward.1} parent=44 // pred_check_branch
      %60 = sbr.rel (%p58) target = $region60
    $region59: #{image_caption_forward.1} parent=44 // pred_region
      loop: start=0, step=1, limit=1
      $region61: #{image_caption_forward.1} parent=59 // loop_pre_header
        _
      $region62: #{image_caption_forward.1} parent=59 // loop_header
        %s62 = sphi 0, %s66
        %p63 = scmp.ge.s32.totalorder %s62, 1
        %s67 = sphi %s1, %s1
        %s68 = sphi [#allocation2], [#allocation2]
      $region63: #{image_caption_forward.1} parent=59 // loop_header_branch
        %65 = sbr.rel (%p63) target = $region67
      $region64: #{image_caption_forward.1} parent=59 // loop_body
        %v69 = vld [vmem:[%s67] sm:$0xff]
        %70 = vst [vmem:[%s68] sm:$0xff] %v69
        %v71 = vld [vmem:[%s67 + $0x8] sm:$0xff]
        %72 = vst [vmem:[%s68 + $0x8] sm:$0xff] %v71
        %v73 = vld [vmem:[%s67 + $0x10] sm:$0xff]
        %74 = vst [vmem:[%s68 + $0x10] sm:$0xff] %v73
        %v75 = vld [vmem:[%s67 + $0x18] sm:$0xff]
        %76 = vst [vmem:[%s68 + $0x18] sm:$0xff] %v75
        %v77 = vld [vmem:[%s67 + $0x20] sm:$0xff]
        %78 = vst [vmem:[%s68 + $0x20] sm:$0xff] %v77
        %v79 = vld [vmem:[%s67 + $0x28] sm:$0xff]
        %80 = vst [vmem:[%s68 + $0x28] sm:$0xff] %v79
        %v81 = vld [vmem:[%s67 + $0x30] sm:$0xff]
        %82 = vst [vmem:[%s68 + $0x30] sm:$0xff] %v81
        %v83 = vld [vmem:[%s67 + $0x38] sm:$0xff]
        %84 = vst [vmem:[%s68 + $0x38] sm:$0xff] %v83
        %v85 = vld [vmem:[%s67 + $0x40] sm:$0xff]
        %86 = vst [vmem:[%s68 + $0x40] sm:$0xff] %v85
        %v87 = vld [vmem:[%s67 + $0x48] sm:$0xff]
        %88 = vst [vmem:[%s68 + $0x48] sm:$0xff] %v87
        %v89 = vld [vmem:[%s67 + $0x50] sm:$0xff]
        %90 = vst [vmem:[%s68 + $0x50] sm:$0xff] %v89
        %v91 = vld [vmem:[%s67 + $0x58] sm:$0xff]
        %92 = vst [vmem:[%s68 + $0x58] sm:$0xff] %v91
        %v93 = vld [vmem:[%s67 + $0x60] sm:$0xff]
        %94 = vst [vmem:[%s68 + $0x60] sm:$0xff] %v93
        %v95 = vld [vmem:[%s67 + $0x68] sm:$0xff]
        %96 = vst [vmem:[%s68 + $0x68] sm:$0xff] %v95
        %v97 = vld [vmem:[%s67 + $0x70] sm:$0xff]
        %98 = vst [vmem:[%s68 + $0x70] sm:$0xff] %v97
        %v99 = vld [vmem:[%s67 + $0x78] sm:$0xff]
        %100 = vst [vmem:[%s68 + $0x78] sm:$0xff] %v99
        %v101 = vld [vmem:[%s67 + $0x80] sm:$0xff]
        %102 = vst [vmem:[%s68 + $0x80] sm:$0xff] %v101
        %v103 = vld [vmem:[%s67 + $0x88] sm:$0xff]
        %104 = vst [vmem:[%s68 + $0x88] sm:$0xff] %v103
        %v105 = vld [vmem:[%s67 + $0x90] sm:$0xff]
        %106 = vst [vmem:[%s68 + $0x90] sm:$0xff] %v105
        %v107 = vld [vmem:[%s67 + $0x98] sm:$0xff]
        %108 = vst [vmem:[%s68 + $0x98] sm:$0xff] %v107
        %v109 = vld [vmem:[%s67 + $0xa0] sm:$0xff]
        %110 = vst [vmem:[%s68 + $0xa0] sm:$0xff] %v109
        %v111 = vld [vmem:[%s67 + $0xa8] sm:$0xff]
        %112 = vst [vmem:[%s68 + $0xa8] sm:$0xff] %v111
        %v113 = vld [vmem:[%s67 + $0xb0] sm:$0xff]
        %114 = vst [vmem:[%s68 + $0xb0] sm:$0xff] %v113
        %v115 = vld [vmem:[%s67 + $0xb8] sm:$0xff]
        %116 = vst [vmem:[%s68 + $0xb8] sm:$0xff] %v115
        %v117 = vld [vmem:[%s67 + $0xc0] sm:$0xff]
        %118 = vst [vmem:[%s68 + $0xc0] sm:$0xff] %v117
        %v119 = vld [vmem:[%s67 + $0xc8] sm:$0xff]
        %120 = vst [vmem:[%s68 + $0xc8] sm:$0xff] %v119
        %v121 = vld [vmem:[%s67 + $0xd0] sm:$0xff]
        %122 = vst [vmem:[%s68 + $0xd0] sm:$0xff] %v121
        %v123 = vld [vmem:[%s67 + $0xd8] sm:$0xff]
        %124 = vst [vmem:[%s68 + $0xd8] sm:$0xff] %v123
        %v125 = vld [vmem:[%s67 + $0xe0] sm:$0xff]
        %126 = vst [vmem:[%s68 + $0xe0] sm:$0xff] %v125
        %v127 = vld [vmem:[%s67 + $0xe8] sm:$0xff]
        %128 = vst [vmem:[%s68 + $0xe8] sm:$0xff] %v127
        %v129 = vld [vmem:[%s67 + $0xf0] sm:$0xff]
        %130 = vst [vmem:[%s68 + $0xf0] sm:$0xff] %v129
        %v131 = vld [vmem:[%s67 + $0xf8] sm:$0xff]
        %132 = vst [vmem:[%s68 + $0xf8] sm:$0xff] %v131
        %v133 = vld [vmem:[%s67 + $0x100] sm:$0xff]
        %134 = vst [vmem:[%s68 + $0x100] sm:$0xff] %v133
        %v135 = vld [vmem:[%s67 + $0x108] sm:$0xff]
        %136 = vst [vmem:[%s68 + $0x108] sm:$0xff] %v135
        %v137 = vld [vmem:[%s67 + $0x110] sm:$0xff]
        %138 = vst [vmem:[%s68 + $0x110] sm:$0xff] %v137
        %v139 = vld [vmem:[%s67 + $0x118] sm:$0xff]
        %140 = vst [vmem:[%s68 + $0x118] sm:$0xff] %v139
        %v141 = vld [vmem:[%s67 + $0x120] sm:$0xff]
        %142 = vst [vmem:[%s68 + $0x120] sm:$0xff] %v141
        %v143 = vld [vmem:[%s67 + $0x128] sm:$0xff]
        %144 = vst [vmem:[%s68 + $0x128] sm:$0xff] %v143
        %v145 = vld [vmem:[%s67 + $0x130] sm:$0xff]
        %146 = vst [vmem:[%s68 + $0x130] sm:$0xff] %v145
        %v147 = vld [vmem:[%s67 + $0x138] sm:$0xff]
        %148 = vst [vmem:[%s68 + $0x138] sm:$0xff] %v147
        %v149 = vld [vmem:[%s67 + $0x140] sm:$0xff]
        %150 = vst [vmem:[%s68 + $0x140] sm:$0xff] %v149
        %v151 = vld [vmem:[%s67 + $0x148] sm:$0xff]
        %152 = vst [vmem:[%s68 + $0x148] sm:$0xff] %v151
        %v153 = vld [vmem:[%s67 + $0x150] sm:$0xff]
        %154 = vst [vmem:[%s68 + $0x150] sm:$0xff] %v153
        %v155 = vld [vmem:[%s67 + $0x158] sm:$0xff]
        %156 = vst [vmem:[%s68 + $0x158] sm:$0xff] %v155
        %v157 = vld [vmem:[%s67 + $0x160] sm:$0xff]
        %158 = vst [vmem:[%s68 + $0x160] sm:$0xff] %v157
        %v159 = vld [vmem:[%s67 + $0x168] sm:$0xff]
        %160 = vst [vmem:[%s68 + $0x168] sm:$0xff] %v159
        %v161 = vld [vmem:[%s67 + $0x170] sm:$0xff]
        %162 = vst [vmem:[%s68 + $0x170] sm:$0xff] %v161
        %v163 = vld [vmem:[%s67 + $0x178] sm:$0xff]
        %164 = vst [vmem:[%s68 + $0x178] sm:$0xff] %v163
        %v165 = vld [vmem:[%s67 + $0x180] sm:$0xff]
        %166 = vst [vmem:[%s68 + $0x180] sm:$0xff] %v165
        %v167 = vld [vmem:[%s67 + $0x188] sm:$0xff]
        %168 = vst [vmem:[%s68 + $0x188] sm:$0xff] %v167
        %v169 = vld [vmem:[%s67 + $0x190] sm:$0xff]
        %170 = vst [vmem:[%s68 + $0x190] sm:$0xff] %v169
        %v171 = vld [vmem:[%s67 + $0x198] sm:$0xff]
        %172 = vst [vmem:[%s68 + $0x198] sm:$0xff] %v171
        %v173 = vld [vmem:[%s67 + $0x1a0] sm:$0xff]
        %174 = vst [vmem:[%s68 + $0x1a0] sm:$0xff] %v173
        %v175 = vld [vmem:[%s67 + $0x1a8] sm:$0xff]
        %176 = vst [vmem:[%s68 + $0x1a8] sm:$0xff] %v175
        %v177 = vld [vmem:[%s67 + $0x1b0] sm:$0xff]
        %178 = vst [vmem:[%s68 + $0x1b0] sm:$0xff] %v177
        %v179 = vld [vmem:[%s67 + $0x1b8] sm:$0xff]
        %180 = vst [vmem:[%s68 + $0x1b8] sm:$0xff] %v179
        %v181 = vld [vmem:[%s67 + $0x1c0] sm:$0xff]
        %182 = vst [vmem:[%s68 + $0x1c0] sm:$0xff] %v181
        %v183 = vld [vmem:[%s67 + $0x1c8] sm:$0xff]
        %184 = vst [vmem:[%s68 + $0x1c8] sm:$0xff] %v183
        %v185 = vld [vmem:[%s67 + $0x1d0] sm:$0xff]
        %186 = vst [vmem:[%s68 + $0x1d0] sm:$0xff] %v185
        %v187 = vld [vmem:[%s67 + $0x1d8] sm:$0xff]
        %188 = vst [vmem:[%s68 + $0x1d8] sm:$0xff] %v187
        %v189 = vld [vmem:[%s67 + $0x1e0] sm:$0xff]
        %190 = vst [vmem:[%s68 + $0x1e0] sm:$0xff] %v189
        %v191 = vld [vmem:[%s67 + $0x1e8] sm:$0xff]
        %192 = vst [vmem:[%s68 + $0x1e8] sm:$0xff] %v191
        %v193 = vld [vmem:[%s67 + $0x1f0] sm:$0xff]
        %194 = vst [vmem:[%s68 + $0x1f0] sm:$0xff] %v193
        %v195 = vld [vmem:[%s67 + $0x1f8] sm:$0xff]
        %196 = vst [vmem:[%s68 + $0x1f8] sm:$0xff] %v195
        %v197 = vld [vmem:[%s67 + $0x200] sm:$0xff]
        %198 = vst [vmem:[%s68 + $0x200] sm:$0xff] %v197
        %v199 = vld [vmem:[%s67 + $0x208] sm:$0xff]
        %200 = vst [vmem:[%s68 + $0x208] sm:$0xff] %v199
        %v201 = vld [vmem:[%s67 + $0x210] sm:$0xff]
        %202 = vst [vmem:[%s68 + $0x210] sm:$0xff] %v201
        %v203 = vld [vmem:[%s67 + $0x218] sm:$0xff]
        %204 = vst [vmem:[%s68 + $0x218] sm:$0xff] %v203
        %v205 = vld [vmem:[%s67 + $0x220] sm:$0xff]
        %206 = vst [vmem:[%s68 + $0x220] sm:$0xff] %v205
        %v207 = vld [vmem:[%s67 + $0x228] sm:$0xff]
        %208 = vst [vmem:[%s68 + $0x228] sm:$0xff] %v207
        %v209 = vld [vmem:[%s67 + $0x230] sm:$0xff]
        %210 = vst [vmem:[%s68 + $0x230] sm:$0xff] %v209
        %v211 = vld [vmem:[%s67 + $0x238] sm:$0xff]
        %212 = vst [vmem:[%s68 + $0x238] sm:$0xff] %v211
        %v213 = vld [vmem:[%s67 + $0x240] sm:$0xff]
        %214 = vst [vmem:[%s68 + $0x240] sm:$0xff] %v213
        %v215 = vld [vmem:[%s67 + $0x248] sm:$0xff]
        %216 = vst [vmem:[%s68 + $0x248] sm:$0xff] %v215
        %v217 = vld [vmem:[%s67 + $0x250] sm:$0xff]
        %218 = vst [vmem:[%s68 + $0x250] sm:$0xff] %v217
        %v219 = vld [vmem:[%s67 + $0x258] sm:$0xff]
        %220 = vst [vmem:[%s68 + $0x258] sm:$0xff] %v219
        %v221 = vld [vmem:[%s67 + $0x260] sm:$0xff]
        %222 = vst [vmem:[%s68 + $0x260] sm:$0xff] %v221
        %v223 = vld [vmem:[%s67 + $0x268] sm:$0xff]
        %224 = vst [vmem:[%s68 + $0x268] sm:$0xff] %v223
        %v225 = vld [vmem:[%s67 + $0x270] sm:$0xff]
        %226 = vst [vmem:[%s68 + $0x270] sm:$0xff] %v225
        %v227 = vld [vmem:[%s67 + $0x278] sm:$0xff]
        %228 = vst [vmem:[%s68 + $0x278] sm:$0xff] %v227
        %v229 = vld [vmem:[%s67 + $0x280] sm:$0xff]
        %230 = vst [vmem:[%s68 + $0x280] sm:$0xff] %v229
        %v231 = vld [vmem:[%s67 + $0x288] sm:$0xff]
        %232 = vst [vmem:[%s68 + $0x288] sm:$0xff] %v231
        %v233 = vld [vmem:[%s67 + $0x290] sm:$0xff]
        %234 = vst [vmem:[%s68 + $0x290] sm:$0xff] %v233
        %v235 = vld [vmem:[%s67 + $0x298] sm:$0xff]
        %236 = vst [vmem:[%s68 + $0x298] sm:$0xff] %v235
        %v237 = vld [vmem:[%s67 + $0x2a0] sm:$0xff]
        %238 = vst [vmem:[%s68 + $0x2a0] sm:$0xff] %v237
        %v239 = vld [vmem:[%s67 + $0x2a8] sm:$0xff]
        %240 = vst [vmem:[%s68 + $0x2a8] sm:$0xff] %v239
        %v241 = vld [vmem:[%s67 + $0x2b0] sm:$0xff]
        %242 = vst [vmem:[%s68 + $0x2b0] sm:$0xff] %v241
        %v243 = vld [vmem:[%s67 + $0x2b8] sm:$0xff]
        %244 = vst [vmem:[%s68 + $0x2b8] sm:$0xff] %v243
        %v245 = vld [vmem:[%s67 + $0x2c0] sm:$0xff]
        %246 = vst [vmem:[%s68 + $0x2c0] sm:$0xff] %v245
        %v247 = vld [vmem:[%s67 + $0x2c8] sm:$0xff]
        %248 = vst [vmem:[%s68 + $0x2c8] sm:$0xff] %v247
        %v249 = vld [vmem:[%s67 + $0x2d0] sm:$0xff]
        %250 = vst [vmem:[%s68 + $0x2d0] sm:$0xff] %v249
        %v251 = vld [vmem:[%s67 + $0x2d8] sm:$0xff]
        %252 = vst [vmem:[%s68 + $0x2d8] sm:$0xff] %v251
        %v253 = vld [vmem:[%s67 + $0x2e0] sm:$0xff]
        %254 = vst [vmem:[%s68 + $0x2e0] sm:$0xff] %v253
        %v255 = vld [vmem:[%s67 + $0x2e8] sm:$0xff]
        %256 = vst [vmem:[%s68 + $0x2e8] sm:$0xff] %v255
        %v257 = vld [vmem:[%s67 + $0x2f0] sm:$0xff]
        %258 = vst [vmem:[%s68 + $0x2f0] sm:$0xff] %v257
        %v259 = vld [vmem:[%s67 + $0x2f8] sm:$0xff]
        %260 = vst [vmem:[%s68 + $0x2f8] sm:$0xff] %v259
        %v261 = vld [vmem:[%s67 + $0x300] sm:$0xff]
        %262 = vst [vmem:[%s68 + $0x300] sm:$0xff] %v261
        %v263 = vld [vmem:[%s67 + $0x308] sm:$0xff]
        %264 = vst [vmem:[%s68 + $0x308] sm:$0xff] %v263
        %v265 = vld [vmem:[%s67 + $0x310] sm:$0xff]
        %266 = vst [vmem:[%s68 + $0x310] sm:$0xff] %v265
        %v267 = vld [vmem:[%s67 + $0x318] sm:$0xff]
        %268 = vst [vmem:[%s68 + $0x318] sm:$0xff] %v267
        %v269 = vld [vmem:[%s67 + $0x320] sm:$0xff]
        %270 = vst [vmem:[%s68 + $0x320] sm:$0xff] %v269
        %v271 = vld [vmem:[%s67 + $0x328] sm:$0xff]
        %272 = vst [vmem:[%s68 + $0x328] sm:$0xff] %v271
        %v273 = vld [vmem:[%s67 + $0x330] sm:$0xff]
        %274 = vst [vmem:[%s68 + $0x330] sm:$0xff] %v273
        %v275 = vld [vmem:[%s67 + $0x338] sm:$0xff]
        %276 = vst [vmem:[%s68 + $0x338] sm:$0xff] %v275
        %v277 = vld [vmem:[%s67 + $0x340] sm:$0xff]
        %278 = vst [vmem:[%s68 + $0x340] sm:$0xff] %v277
        %v279 = vld [vmem:[%s67 + $0x348] sm:$0xff]
        %280 = vst [vmem:[%s68 + $0x348] sm:$0xff] %v279
        %v281 = vld [vmem:[%s67 + $0x350] sm:$0xff]
        %282 = vst [vmem:[%s68 + $0x350] sm:$0xff] %v281
        %v283 = vld [vmem:[%s67 + $0x358] sm:$0xff]
        %284 = vst [vmem:[%s68 + $0x358] sm:$0xff] %v283
        %v285 = vld [vmem:[%s67 + $0x360] sm:$0xff]
        %286 = vst [vmem:[%s68 + $0x360] sm:$0xff] %v285
        %v287 = vld [vmem:[%s67 + $0x368] sm:$0xff]
        %288 = vst [vmem:[%s68 + $0x368] sm:$0xff] %v287
        %v289 = vld [vmem:[%s67 + $0x370] sm:$0xff]
        %290 = vst [vmem:[%s68 + $0x370] sm:$0xff] %v289
        %v291 = vld [vmem:[%s67 + $0x378] sm:$0xff]
        %292 = vst [vmem:[%s68 + $0x378] sm:$0xff] %v291
        %v293 = vld [vmem:[%s67 + $0x380] sm:$0xff]
        %294 = vst [vmem:[%s68 + $0x380] sm:$0xff] %v293
        %v295 = vld [vmem:[%s67 + $0x388] sm:$0xff]
        %296 = vst [vmem:[%s68 + $0x388] sm:$0xff] %v295
        %v297 = vld [vmem:[%s67 + $0x390] sm:$0xff]
        %298 = vst [vmem:[%s68 + $0x390] sm:$0xff] %v297
        %v299 = vld [vmem:[%s67 + $0x398] sm:$0xff]
        %300 = vst [vmem:[%s68 + $0x398] sm:$0xff] %v299
        %v301 = vld [vmem:[%s67 + $0x3a0] sm:$0xff]
        %302 = vst [vmem:[%s68 + $0x3a0] sm:$0xff] %v301
        %v303 = vld [vmem:[%s67 + $0x3a8] sm:$0xff]
        %304 = vst [vmem:[%s68 + $0x3a8] sm:$0xff] %v303
        %v305 = vld [vmem:[%s67 + $0x3b0] sm:$0xff]
        %306 = vst [vmem:[%s68 + $0x3b0] sm:$0xff] %v305
        %v307 = vld [vmem:[%s67 + $0x3b8] sm:$0xff]
        %308 = vst [vmem:[%s68 + $0x3b8] sm:$0xff] %v307
        %v309 = vld [vmem:[%s67 + $0x3c0] sm:$0xff]
        %310 = vst [vmem:[%s68 + $0x3c0] sm:$0xff] %v309
        %v311 = vld [vmem:[%s67 + $0x3c8] sm:$0xff]
        %312 = vst [vmem:[%s68 + $0x3c8] sm:$0xff] %v311
        %v313 = vld [vmem:[%s67 + $0x3d0] sm:$0xff]
        %314 = vst [vmem:[%s68 + $0x3d0] sm:$0xff] %v313
        %v315 = vld [vmem:[%s67 + $0x3d8] sm:$0xff]
        %316 = vst [vmem:[%s68 + $0x3d8] sm:$0xff] %v315
        %v317 = vld [vmem:[%s67 + $0x3e0] sm:$0xff]
        %318 = vst [vmem:[%s68 + $0x3e0] sm:$0xff] %v317
        %v319 = vld [vmem:[%s67 + $0x3e8] sm:$0xff]
        %320 = vst [vmem:[%s68 + $0x3e8] sm:$0xff] %v319
        %v321 = vld [vmem:[%s67 + $0x3f0] sm:$0xff]
        %322 = vst [vmem:[%s68 + $0x3f0] sm:$0xff] %v321
        %v323 = vld [vmem:[%s67 + $0x3f8] sm:$0xff]
        %324 = vst [vmem:[%s68 + $0x3f8] sm:$0xff] %v323
      $region65: #{image_caption_forward.1} parent=59 // loop_footer
        %s66 = sadd.s32 1, %s62
      $region66: #{image_caption_forward.1} parent=59 // loop_footer_branch
        %61 = sbr.rel target = $region62
      $region67: #{image_caption_forward.1} parent=59 // loop_exit
        _
    $region60: #{image_caption_forward.1} parent=44 // pred_fallthru
      _
    %p325 = pneg %p57
    // Predicated region
    $region68: #{image_caption_forward.1} parent=44 // pred_check
      _
    $region69: #{image_caption_forward.1} parent=44 // pred_check_branch
      %327 = sbr.rel (%p57) target = $region71
    $region70: #{image_caption_forward.1} parent=44 // pred_region
      %s328 = sand.u32 1024, 7
    $region71: #{image_caption_forward.1} parent=44 // pred_fallthru
      _
  $region45: #{image_caption_forward.1} parent=0 // pred_fallthru
    _
  // Predicated region
  $region46: #{image_caption_forward.1} parent=0 // pred_check
    %p42 = pneg %p38
  $region47: #{image_caption_forward.1} parent=0 // pred_check_branch
    %44 = sbr.rel (%p42) target = $region49
  $region48: #{image_caption_forward.1} parent=0 // pred_region
    %s45 = sshllo.u32 0, 1024
    loop: start=0, step=1, limit=1
    $region50: #{image_caption_forward.1} parent=48 // loop_pre_header
      _
    $region51: #{image_caption_forward.1} parent=48 // loop_header
      %s47 = sphi 0, %s51
      %p48 = scmp.ge.s32.totalorder %s47, 1
      %s52 = sphi %s1, %s1
      %s53 = sphi [#allocation2], [#allocation2]
    $region52: #{image_caption_forward.1} parent=48 // loop_header_branch
      %50 = sbr.rel (%p48) target = $region56
    $region53: #{image_caption_forward.1} parent=48 // loop_body
      %v54 = vld [vmem:[%s52] sm:%s45]
      %55 = vst [vmem:[%s53] sm:%s45] %v54
    $region54: #{image_caption_forward.1} parent=48 // loop_footer
      %s51 = sadd.s32 1, %s47
    $region55: #{image_caption_forward.1} parent=48 // loop_footer_branch
      %46 = sbr.rel target = $region51
    $region56: #{image_caption_forward.1} parent=48 // loop_exit
      _
  $region49: #{image_caption_forward.1} parent=0 // pred_fallthru
    _
  // Predicated region
  $region72: #{image_caption_forward.1} parent=0 // pred_check
    _
  $region73: #{image_caption_forward.1} parent=0 // pred_check_branch
    %331 = sbr.rel (0) target = $region75
  $region74: #{image_caption_forward.1} parent=0 // pred_region
    %332 = vsyncadd [#allocation4], 16384
  $region75: #{image_caption_forward.1} parent=0 // pred_fallthru
    _
  %v333 = vld [vmem:[%s6] sm:$0xf]
  %v334 = vld [vmem:[%s3] sm:$0xf]
  %v335 = vld [vmem:[%s3 + $0x4] sm:$0xf]
  %v336 = vld [vmem:[%s3 + $0x8] sm:$0xf]
  %v337 = vld [vmem:[%s3 + $0xc] sm:$0xf]
  %v338 = vld [vmem:[%s3 + $0x10] sm:$0xf]
  %v339 = vld [vmem:[%s3 + $0x14] sm:$0xf]
  %v340 = vld [vmem:[%s3 + $0x18] sm:$0xf]
  %v341 = vld [vmem:[%s3 + $0x1c] sm:$0xf]
  %v342 = vld [vmem:[%s4] sm:$0xff]
  %v343 = vld [vmem:[%s4 + $0x8] sm:$0xff]
  %v344 = vld [vmem:[%s4 + $0x10] sm:$0xff]
  %v345 = vld [vmem:[%s4 + $0x18] sm:$0xff]
  %v346 = vld [vmem:[%s4 + $0x20] sm:$0xff]
  %v347 = vld [vmem:[%s4 + $0x28] sm:$0xff]
  %v348 = vld [vmem:[%s4 + $0x30] sm:$0xff]
  %v349 = vld [vmem:[%s4 + $0x38] sm:$0xff]
  %v350 = vld [vmem:[%s4 + $0x40] sm:$0xff]
  %v351 = vld [vmem:[%s4 + $0x48] sm:$0xff]
  %v352 = vld [vmem:[%s4 + $0x50] sm:$0xff]
  %v353 = vld [vmem:[%s4 + $0x58] sm:$0xff]
  %v354 = vld [vmem:[%s4 + $0x60] sm:$0xff]
  %v355 = vld [vmem:[%s4 + $0x68] sm:$0xff]
  %v356 = vld [vmem:[%s4 + $0x70] sm:$0xff]
  %v357 = vld [vmem:[%s4 + $0x78] sm:$0xff]
  %v358 = vld [vmem:[%s4 + $0x80] sm:$0xff]
  %v359 = vld [vmem:[%s4 + $0x88] sm:$0xff]
  %v360 = vld [vmem:[%s4 + $0x90] sm:$0xff]
  %v361 = vld [vmem:[%s4 + $0x98] sm:$0xff]
  %v362 = vld [vmem:[%s4 + $0xa0] sm:$0xff]
  %v363 = vld [vmem:[%s4 + $0xa8] sm:$0xff]
  %v364 = vld [vmem:[%s4 + $0xb0] sm:$0xff]
  %v365 = vld [vmem:[%s4 + $0xb8] sm:$0xff]
  %v366 = vld [vmem:[%s4 + $0xc0] sm:$0xff]
  %v367 = vld [vmem:[%s4 + $0xc8] sm:$0xff]
  %v368 = vld [vmem:[%s4 + $0xd0] sm:$0xff]
  %v369 = vld [vmem:[%s4 + $0xd8] sm:$0xff]
  %v370 = vld [vmem:[%s4 + $0xe0] sm:$0xff]
  %v371 = vld [vmem:[%s4 + $0xe8] sm:$0xff]
  %v372 = vld [vmem:[%s4 + $0xf0] sm:$0xff]
  %v373 = vld [vmem:[%s4 + $0xf8] sm:$0xff]
  %v375 = vlaneseq
  %v376 = vshrl.u32 %v375, 7
  %v377 = vsub.s32 0, %v376
  %v378 = vrot.slane %v333, %v377
  %v379 = vlaneseq
  %v380 = vshrl.u32 %v379, 7
  %v381 = vsub.s32 1, %v380
  %v382 = vrot.slane %v333, %v381
  %v383 = vlaneseq
  %v384 = vshrl.u32 %v383, 7
  %v385 = vsub.s32 2, %v384
  %v386 = vrot.slane %v333, %v385
  %v387 = vlaneseq
  %v388 = vshrl.u32 %v387, 7
  %v389 = vsub.s32 3, %v388
  %v390 = vrot.slane %v333, %v389
  %v403 = vunpack.c.l.b16 %v334
  %v404 = vunpack.c.l.b16 %v335
  %v405 = vunpack.c.l.b16 %v336
  %v406 = vunpack.c.l.b16 %v337
  %v407 = vunpack.c.l.b16 %v338
  %v408 = vunpack.c.l.b16 %v339
  %v409 = vunpack.c.l.b16 %v340
  %v410 = vunpack.c.l.b16 %v341
  %v411 = vpack.c.b16 %v404, %v403
  %v412 = vpack.c.b16 %v406, %v405
  %v413 = vpack.c.b16 %v408, %v407
  %v414 = vpack.c.b16 %v410, %v409
  %v451 = vunpack.c.l.b16 %v342
  %v452 = vunpack.c.h.b16 %v342
  %v453 = vunpack.c.l.b16 %v343
  %v454 = vunpack.c.h.b16 %v343
  %v455 = vunpack.c.l.b16 %v344
  %v456 = vunpack.c.h.b16 %v344
  %v457 = vunpack.c.l.b16 %v345
  %v458 = vunpack.c.h.b16 %v345
  %v459 = vunpack.c.l.b16 %v346
  %v460 = vunpack.c.h.b16 %v346
  %v461 = vunpack.c.l.b16 %v347
  %v462 = vunpack.c.h.b16 %v347
  %v463 = vunpack.c.l.b16 %v348
  %v464 = vunpack.c.h.b16 %v348
  %v465 = vunpack.c.l.b16 %v349
  %v466 = vunpack.c.h.b16 %v349
  %v467 = vunpack.c.l.b16 %v350
  %v468 = vunpack.c.h.b16 %v350
  %v469 = vunpack.c.l.b16 %v351
  %v470 = vunpack.c.h.b16 %v351
  %v471 = vunpack.c.l.b16 %v352
  %v472 = vunpack.c.h.b16 %v352
  %v473 = vunpack.c.l.b16 %v353
  %v474 = vunpack.c.h.b16 %v353
  %v475 = vunpack.c.l.b16 %v354
  %v476 = vunpack.c.h.b16 %v354
  %v477 = vunpack.c.l.b16 %v355
  %v478 = vunpack.c.h.b16 %v355
  %v479 = vunpack.c.l.b16 %v356
  %v480 = vunpack.c.h.b16 %v356
  %v481 = vunpack.c.l.b16 %v357
  %v482 = vunpack.c.h.b16 %v357
  %v483 = vunpack.c.l.b16 %v358
  %v484 = vunpack.c.h.b16 %v358
  %v485 = vunpack.c.l.b16 %v359
  %v486 = vunpack.c.h.b16 %v359
  %v487 = vunpack.c.l.b16 %v360
  %v488 = vunpack.c.h.b16 %v360
  %v489 = vunpack.c.l.b16 %v361
  %v490 = vunpack.c.h.b16 %v361
  %v491 = vunpack.c.l.b16 %v362
  %v492 = vunpack.c.h.b16 %v362
  %v493 = vunpack.c.l.b16 %v363
  %v494 = vunpack.c.h.b16 %v363
  %v495 = vunpack.c.l.b16 %v364
  %v496 = vunpack.c.h.b16 %v364
  %v497 = vunpack.c.l.b16 %v365
  %v498 = vunpack.c.h.b16 %v365
  %v499 = vunpack.c.l.b16 %v366
  %v500 = vunpack.c.h.b16 %v366
  %v501 = vunpack.c.l.b16 %v367
  %v502 = vunpack.c.h.b16 %v367
  %v503 = vunpack.c.l.b16 %v368
  %v504 = vunpack.c.h.b16 %v368
  %v505 = vunpack.c.l.b16 %v369
  %v506 = vunpack.c.h.b16 %v369
  %v507 = vunpack.c.l.b16 %v370
  %v508 = vunpack.c.h.b16 %v370
  %v509 = vunpack.c.l.b16 %v371
  %v510 = vunpack.c.h.b16 %v371
  %v511 = vunpack.c.l.b16 %v372
  %v512 = vunpack.c.h.b16 %v372
  %v513 = vunpack.c.l.b16 %v373
  %v514 = vunpack.c.h.b16 %v373
  %v515 = vpack.c.b16 %v455, %v451
  %v516 = vpack.c.b16 %v456, %v452
  %v517 = vpack.c.b16 %v457, %v453
  %v518 = vpack.c.b16 %v458, %v454
  %v519 = vpack.c.b16 %v463, %v459
  %v520 = vpack.c.b16 %v464, %v460
  %v521 = vpack.c.b16 %v465, %v461
  %v522 = vpack.c.b16 %v466, %v462
  %v523 = vpack.c.b16 %v471, %v467
  %v524 = vpack.c.b16 %v472, %v468
  %v525 = vpack.c.b16 %v473, %v469
  %v526 = vpack.c.b16 %v474, %v470
  %v527 = vpack.c.b16 %v479, %v475
  %v528 = vpack.c.b16 %v480, %v476
  %v529 = vpack.c.b16 %v481, %v477
  %v530 = vpack.c.b16 %v482, %v478
  %v531 = vpack.c.b16 %v487, %v483
  %v532 = vpack.c.b16 %v488, %v484
  %v533 = vpack.c.b16 %v489, %v485
  %v534 = vpack.c.b16 %v490, %v486
  %v535 = vpack.c.b16 %v495, %v491
  %v536 = vpack.c.b16 %v496, %v492
  %v537 = vpack.c.b16 %v497, %v493
  %v538 = vpack.c.b16 %v498, %v494
  %v539 = vpack.c.b16 %v503, %v499
  %v540 = vpack.c.b16 %v504, %v500
  %v541 = vpack.c.b16 %v505, %v501
  %v542 = vpack.c.b16 %v506, %v502
  %v543 = vpack.c.b16 %v511, %v507
  %v544 = vpack.c.b16 %v512, %v508
  %v545 = vpack.c.b16 %v513, %v509
  %v546 = vpack.c.b16 %v514, %v510
  %579 = vmatprep.subr.bf16.mxu0 %v516
  %580 = vmatpush1.bf16.msra.mxu0 %v515
  %581 = vmatprep.subr.bf16.mxu0 %v520
  %582 = vmatpush1.bf16.msra.mxu0 %v519
  %583 = vmatprep.subr.bf16.mxu0 %v524
  %584 = vmatpush1.bf16.msra.mxu0 %v523
  %585 = vmatprep.subr.bf16.mxu0 %v528
  %586 = vmatpush1.bf16.msra.mxu0 %v527
  %587 = vmatprep.subr.bf16.mxu0 %v532
  %588 = vmatpush1.bf16.msra.mxu0 %v531
  %589 = vmatprep.subr.bf16.mxu0 %v536
  %590 = vmatpush1.bf16.msra.mxu0 %v535
  %591 = vmatprep.subr.bf16.mxu0 %v540
  %592 = vmatpush1.bf16.msra.mxu0 %v539
  %593 = vmatprep.subr.bf16.mxu0 %v544
  %594 = vmatpush1.bf16.msra.mxu0 %v543
  %595 = vmatprep.subr.bf16.mxu0 0
  %596 = vmatpush1.bf16.msra.mxu0 0
  %597 = vmatprep.subr.bf16.mxu0 0
  %598 = vmatpush1.bf16.msra.mxu0 0
  %599 = vmatprep.subr.bf16.mxu0 0
  %600 = vmatpush1.bf16.msra.mxu0 0
  %601 = vmatprep.subr.bf16.mxu0 0
  %602 = vmatpush1.bf16.msra.mxu0 0
  %603 = vmatprep.subr.bf16.mxu0 0
  %604 = vmatpush1.bf16.msra.mxu0 0
  %605 = vmatprep.subr.bf16.mxu0 0
  %606 = vmatpush1.bf16.msra.mxu0 0
  %607 = vmatprep.subr.bf16.mxu0 0
  %608 = vmatpush1.bf16.msra.mxu0 0
  %609 = vmatprep.subr.bf16.mxu0 0
  %610 = vmatpush1.bf16.msra.mxu0 0
  %611 = vmatprep.mubr.bf16.mxu0 0
  %612 = vmatmul.mubr.bf16.gmra.mrb[0].mxu0 %v411
  %v613 = vpop.f32.mrb[0].mxu0
  %v614 = vadd.f32 %v378, %v613
  %v615 = vpop.f32.mrb[0].mxu0
  %v616 = vadd.f32 %v382, %v615
  %v617 = vpop.f32.mrb[0].mxu0
  %v618 = vadd.f32 %v378, %v617
  %v619 = vpop.f32.mrb[0].mxu0
  %v620 = vadd.f32 %v382, %v619
  %621 = vmatprep.mubr.bf16.mxu0 0
  %622 = vmatmul.mubr.bf16.gmra.mrb[0].mxu0 %v412
  %v623 = vpop.f32.mrb[0].mxu0
  %v624 = vadd.f32 %v378, %v623
  %v625 = vpop.f32.mrb[0].mxu0
  %v626 = vadd.f32 %v382, %v625
  %v627 = vpop.f32.mrb[0].mxu0
  %v628 = vadd.f32 %v378, %v627
  %v629 = vpop.f32.mrb[0].mxu0
  %v630 = vadd.f32 %v382, %v629
  %631 = vmatprep.mubr.bf16.mxu0 0
  %632 = vmatmul.mubr.bf16.gmra.mrb[0].mxu0 %v413
  %v633 = vpop.f32.mrb[0].mxu0
  %v634 = vadd.f32 %v378, %v633
  %v635 = vpop.f32.mrb[0].mxu0
  %v636 = vadd.f32 %v382, %v635
  %v637 = vpop.f32.mrb[0].mxu0
  %v638 = vadd.f32 %v378, %v637
  %v639 = vpop.f32.mrb[0].mxu0
  %v640 = vadd.f32 %v382, %v639
  %641 = vmatprep.mubr.bf16.mxu0 0
  %642 = vmatmul.mubr.bf16.gmra.mrb[0].mxu0 %v414
  %v643 = vpop.f32.mrb[0].mxu0
  %v644 = vadd.f32 %v378, %v643
  %v645 = vpop.f32.mrb[0].mxu0
  %v646 = vadd.f32 %v382, %v645
  %v647 = vpop.f32.mrb[0].mxu0
  %v648 = vadd.f32 %v378, %v647
  %v649 = vpop.f32.mrb[0].mxu0
  %v650 = vadd.f32 %v382, %v649
  %651 = vdwg.mxu0
  %652 = vmatprep.subr.bf16.mxu0 %v518
  %653 = vmatpush1.bf16.msra.mxu0 %v517
  %654 = vmatprep.subr.bf16.mxu0 %v522
  %655 = vmatpush1.bf16.msra.mxu0 %v521
  %656 = vmatprep.subr.bf16.mxu0 %v526
  %657 = vmatpush1.bf16.msra.mxu0 %v525
  %658 = vmatprep.subr.bf16.mxu0 %v530
  %659 = vmatpush1.bf16.msra.mxu0 %v529
  %660 = vmatprep.subr.bf16.mxu0 %v534
  %661 = vmatpush1.bf16.msra.mxu0 %v533
  %662 = vmatprep.subr.bf16.mxu0 %v538
  %663 = vmatpush1.bf16.msra.mxu0 %v537
  %664 = vmatprep.subr.bf16.mxu0 %v542
  %665 = vmatpush1.bf16.msra.mxu0 %v541
  %666 = vmatprep.subr.bf16.mxu0 %v546
  %667 = vmatpush1.bf16.msra.mxu0 %v545
  %668 = vmatprep.subr.bf16.mxu0 0
  %669 = vmatpush1.bf16.msra.mxu0 0
  %670 = vmatprep.subr.bf16.mxu0 0
  %671 = vmatpush1.bf16.msra.mxu0 0
  %672 = vmatprep.subr.bf16.mxu0 0
  %673 = vmatpush1.bf16.msra.mxu0 0
  %674 = vmatprep.subr.bf16.mxu0 0
  %675 = vmatpush1.bf16.msra.mxu0 0
  %676 = vmatprep.subr.bf16.mxu0 0
  %677 = vmatpush1.bf16.msra.mxu0 0
  %678 = vmatprep.subr.bf16.mxu0 0
  %679 = vmatpush1.bf16.msra.mxu0 0
  %680 = vmatprep.subr.bf16.mxu0 0
  %681 = vmatpush1.bf16.msra.mxu0 0
  %682 = vmatprep.subr.bf16.mxu0 0
  %683 = vmatpush1.bf16.msra.mxu0 0
  %684 = vmatprep.mubr.bf16.mxu0 0
  %685 = vmatmul.mubr.bf16.gmra.mrb[0].mxu0 %v411
  %v686 = vpop.f32.mrb[0].mxu0
  %v687 = vadd.f32 %v386, %v686
  %v688 = vpop.f32.mrb[0].mxu0
  %v689 = vadd.f32 %v390, %v688
  %v690 = vpop.f32.mrb[0].mxu0
  %v691 = vadd.f32 %v386, %v690
  %v692 = vpop.f32.mrb[0].mxu0
  %v693 = vadd.f32 %v390, %v692
  %694 = vmatprep.mubr.bf16.mxu0 0
  %695 = vmatmul.mubr.bf16.gmra.mrb[0].mxu0 %v412
  %v696 = vpop.f32.mrb[0].mxu0
  %v697 = vadd.f32 %v386, %v696
  %v698 = vpop.f32.mrb[0].mxu0
  %v699 = vadd.f32 %v390, %v698
  %v700 = vpop.f32.mrb[0].mxu0
  %v701 = vadd.f32 %v386, %v700
  %v702 = vpop.f32.mrb[0].mxu0
  %v703 = vadd.f32 %v390, %v702
  %704 = vmatprep.mubr.bf16.mxu0 0
  %705 = vmatmul.mubr.bf16.gmra.mrb[0].mxu0 %v413
  %v706 = vpop.f32.mrb[0].mxu0
  %v707 = vadd.f32 %v386, %v706
  %v708 = vpop.f32.mrb[0].mxu0
  %v709 = vadd.f32 %v390, %v708
  %v710 = vpop.f32.mrb[0].mxu0
  %v711 = vadd.f32 %v386, %v710
  %v712 = vpop.f32.mrb[0].mxu0
  %v713 = vadd.f32 %v390, %v712
  %714 = vmatprep.mubr.bf16.mxu0 0
  %715 = vmatmul.mubr.bf16.gmra.mrb[0].mxu0 %v414
  %v716 = vpop.f32.mrb[0].mxu0
  %v717 = vadd.f32 %v386, %v716
  %v718 = vpop.f32.mrb[0].mxu0
  %v719 = vadd.f32 %v390, %v718
  %v720 = vpop.f32.mrb[0].mxu0
  %v721 = vadd.f32 %v386, %v720
  %v722 = vpop.f32.mrb[0].mxu0
  %v723 = vadd.f32 %v390, %v722
  %724 = vdwg.mxu0
  %725 = vst [vmem:[#allocation3] sm:$0xff] %v614
  %726 = vst [vmem:[#allocation3 + $0x8] sm:$0xff] %v616
  %727 = vst [vmem:[#allocation3 + $0x10] sm:$0xff] %v687
  %728 = vst [vmem:[#allocation3 + $0x18] sm:$0xff] %v689
  %729 = vst [vmem:[#allocation3 + $0x20] sm:$0xff] %v618
  %730 = vst [vmem:[#allocation3 + $0x28] sm:$0xff] %v620
  %731 = vst [vmem:[#allocation3 + $0x30] sm:$0xff] %v691
  %732 = vst [vmem:[#allocation3 + $0x38] sm:$0xff] %v693
  %733 = vst [vmem:[#allocation3 + $0x40] sm:$0xff] %v624
  %734 = vst [vmem:[#allocation3 + $0x48] sm:$0xff] %v626
  %735 = vst [vmem:[#allocation3 + $0x50] sm:$0xff] %v697
  %736 = vst [vmem:[#allocation3 + $0x58] sm:$0xff] %v699
  %737 = vst [vmem:[#allocation3 + $0x60] sm:$0xff] %v628
  %738 = vst [vmem:[#allocation3 + $0x68] sm:$0xff] %v630
  %739 = vst [vmem:[#allocation3 + $0x70] sm:$0xff] %v701
  %740 = vst [vmem:[#allocation3 + $0x78] sm:$0xff] %v703
  %741 = vst [vmem:[#allocation3 + $0x80] sm:$0xff] %v634
  %742 = vst [vmem:[#allocation3 + $0x88] sm:$0xff] %v636
  %743 = vst [vmem:[#allocation3 + $0x90] sm:$0xff] %v707
  %744 = vst [vmem:[#allocation3 + $0x98] sm:$0xff] %v709
  %745 = vst [vmem:[#allocation3 + $0xa0] sm:$0xff] %v638
  %746 = vst [vmem:[#allocation3 + $0xa8] sm:$0xff] %v640
  %747 = vst [vmem:[#allocation3 + $0xb0] sm:$0xff] %v711
  %748 = vst [vmem:[#allocation3 + $0xb8] sm:$0xff] %v713
  %749 = vst [vmem:[#allocation3 + $0xc0] sm:$0xff] %v644
  %750 = vst [vmem:[#allocation3 + $0xc8] sm:$0xff] %v646
  %751 = vst [vmem:[#allocation3 + $0xd0] sm:$0xff] %v717
  %752 = vst [vmem:[#allocation3 + $0xd8] sm:$0xff] %v719
  %753 = vst [vmem:[#allocation3 + $0xe0] sm:$0xff] %v648
  %754 = vst [vmem:[#allocation3 + $0xe8] sm:$0xff] %v650
  %755 = vst [vmem:[#allocation3 + $0xf0] sm:$0xff] %v721
  %756 = vst [vmem:[#allocation3 + $0xf8] sm:$0xff] %v723
  %s757 = smul.u32 4, 256
  %s758 = smul.u32 %s757, 1
  %s759 = sshll.u32 %s758, 4
  %760 = dma.done [#allocation4], %s759
  %v761 = vld [vmem:[%s0] sm:$0xff]
  %v762 = vld [vmem:[%s0 + $0x8] sm:$0xff]
  %v763 = vld [vmem:[%s0 + $0x10] sm:$0xff]
  %v764 = vld [vmem:[%s0 + $0x18] sm:$0xff]
  %v765 = vld [vmem:[%s0 + $0x20] sm:$0xff]
  %v766 = vld [vmem:[%s0 + $0x28] sm:$0xff]
  %v767 = vld [vmem:[%s0 + $0x30] sm:$0xff]
  %v768 = vld [vmem:[%s0 + $0x38] sm:$0xff]
  %v769 = vld [vmem:[#allocation2] sm:$0xff]
  %v770 = vld [vmem:[#allocation2 + $0x8] sm:$0xff]
  %v771 = vld [vmem:[#allocation2 + $0x10] sm:$0xff]
  %v772 = vld [vmem:[#allocation2 + $0x18] sm:$0xff]
  %v773 = vld [vmem:[#allocation2 + $0x20] sm:$0xff]
  %v774 = vld [vmem:[#allocation2 + $0x28] sm:$0xff]
  %v775 = vld [vmem:[#allocation2 + $0x30] sm:$0xff]
  %v776 = vld [vmem:[#allocation2 + $0x38] sm:$0xff]
  %v777 = vld [vmem:[#allocation2 + $0x40] sm:$0xff]
  %v778 = vld [vmem:[#allocation2 + $0x48] sm:$0xff]
  %v779 = vld [vmem:[#allocation2 + $0x50] sm:$0xff]
  %v780 = vld [vmem:[#allocation2 + $0x58] sm:$0xff]
  %v781 = vld [vmem:[#allocation2 + $0x60] sm:$0xff]
  %v782 = vld [vmem:[#allocation2 + $0x68] sm:$0xff]
  %v783 = vld [vmem:[#allocation2 + $0x70] sm:$0xff]
  %v784 = vld [vmem:[#allocation2 + $0x78] sm:$0xff]
  %v785 = vld [vmem:[#allocation2 + $0x80] sm:$0xff]
  %v786 = vld [vmem:[#allocation2 + $0x88] sm:$0xff]
  %v787 = vld [vmem:[#allocation2 + $0x90] sm:$0xff]
  %v788 = vld [vmem:[#allocation2 + $0x98] sm:$0xff]
  %v789 = vld [vmem:[#allocation2 + $0xa0] sm:$0xff]
  %v790 = vld [vmem:[#allocation2 + $0xa8] sm:$0xff]
  %v791 = vld [vmem:[#allocation2 + $0xb0] sm:$0xff]
  %v792 = vld [vmem:[#allocation2 + $0xb8] sm:$0xff]
  %v793 = vld [vmem:[#allocation2 + $0xc0] sm:$0xff]
  %v794 = vld [vmem:[#allocation2 + $0xc8] sm:$0xff]
  %v795 = vld [vmem:[#allocation2 + $0xd0] sm:$0xff]
  %v796 = vld [vmem:[#allocation2 + $0xd8] sm:$0xff]
  %v797 = vld [vmem:[#allocation2 + $0xe0] sm:$0xff]
  %v798 = vld [vmem:[#allocation2 + $0xe8] sm:$0xff]
  %v799 = vld [vmem:[#allocation2 + $0xf0] sm:$0xff]
  %v800 = vld [vmem:[#allocation2 + $0xf8] sm:$0xff]
  %v801 = vld [vmem:[#allocation2 + $0x100] sm:$0xff]
  %v802 = vld [vmem:[#allocation2 + $0x108] sm:$0xff]
  %v803 = vld [vmem:[#allocation2 + $0x110] sm:$0xff]
  %v804 = vld [vmem:[#allocation2 + $0x118] sm:$0xff]
  %v805 = vld [vmem:[#allocation2 + $0x120] sm:$0xff]
  %v806 = vld [vmem:[#allocation2 + $0x128] sm:$0xff]
  %v807 = vld [vmem:[#allocation2 + $0x130] sm:$0xff]
  %v808 = vld [vmem:[#allocation2 + $0x138] sm:$0xff]
  %v809 = vld [vmem:[#allocation2 + $0x140] sm:$0xff]
  %v810 = vld [vmem:[#allocation2 + $0x148] sm:$0xff]
  %v811 = vld [vmem:[#allocation2 + $0x150] sm:$0xff]
  %v812 = vld [vmem:[#allocation2 + $0x158] sm:$0xff]
  %v813 = vld [vmem:[#allocation2 + $0x160] sm:$0xff]
  %v814 = vld [vmem:[#allocation2 + $0x168] sm:$0xff]
  %v815 = vld [vmem:[#allocation2 + $0x170] sm:$0xff]
  %v816 = vld [vmem:[#allocation2 + $0x178] sm:$0xff]
  %v817 = vld [vmem:[#allocation2 + $0x180] sm:$0xff]
  %v818 = vld [vmem:[#allocation2 + $0x188] sm:$0xff]
  %v819 = vld [vmem:[#allocation2 + $0x190] sm:$0xff]
  %v820 = vld [vmem:[#allocation2 + $0x198] sm:$0xff]
  %v821 = vld [vmem:[#allocation2 + $0x1a0] sm:$0xff]
  %v822 = vld [vmem:[#allocation2 + $0x1a8] sm:$0xff]
  %v823 = vld [vmem:[#allocation2 + $0x1b0] sm:$0xff]
  %v824 = vld [vmem:[#allocation2 + $0x1b8] sm:$0xff]
  %v825 = vld [vmem:[#allocation2 + $0x1c0] sm:$0xff]
  %v826 = vld [vmem:[#allocation2 + $0x1c8] sm:$0xff]
  %v827 = vld [vmem:[#allocation2 + $0x1d0] sm:$0xff]
  %v828 = vld [vmem:[#allocation2 + $0x1d8] sm:$0xff]
  %v829 = vld [vmem:[#allocation2 + $0x1e0] sm:$0xff]
  %v830 = vld [vmem:[#allocation2 + $0x1e8] sm:$0xff]
  %v831 = vld [vmem:[#allocation2 + $0x1f0] sm:$0xff]
  %v832 = vld [vmem:[#allocation2 + $0x1f8] sm:$0xff]
  %v833 = vld [vmem:[#allocation2 + $0x200] sm:$0xff]
  %v834 = vld [vmem:[#allocation2 + $0x208] sm:$0xff]
  %v835 = vld [vmem:[#allocation2 + $0x210] sm:$0xff]
  %v836 = vld [vmem:[#allocation2 + $0x218] sm:$0xff]
  %v837 = vld [vmem:[#allocation2 + $0x220] sm:$0xff]
  %v838 = vld [vmem:[#allocation2 + $0x228] sm:$0xff]
  %v839 = vld [vmem:[#allocation2 + $0x230] sm:$0xff]
  %v840 = vld [vmem:[#allocation2 + $0x238] sm:$0xff]
  %v841 = vld [vmem:[#allocation2 + $0x240] sm:$0xff]
  %v842 = vld [vmem:[#allocation2 + $0x248] sm:$0xff]
  %v843 = vld [vmem:[#allocation2 + $0x250] sm:$0xff]
  %v844 = vld [vmem:[#allocation2 + $0x258] sm:$0xff]
  %v845 = vld [vmem:[#allocation2 + $0x260] sm:$0xff]
  %v846 = vld [vmem:[#allocation2 + $0x268] sm:$0xff]
  %v847 = vld [vmem:[#allocation2 + $0x270] sm:$0xff]
  %v848 = vld [vmem:[#allocation2 + $0x278] sm:$0xff]
  %v849 = vld [vmem:[#allocation2 + $0x280] sm:$0xff]
  %v850 = vld [vmem:[#allocation2 + $0x288] sm:$0xff]
  %v851 = vld [vmem:[#allocation2 + $0x290] sm:$0xff]
  %v852 = vld [vmem:[#allocation2 + $0x298] sm:$0xff]
  %v853 = vld [vmem:[#allocation2 + $0x2a0] sm:$0xff]
  %v854 = vld [vmem:[#allocation2 + $0x2a8] sm:$0xff]
  %v855 = vld [vmem:[#allocation2 + $0x2b0] sm:$0xff]
  %v856 = vld [vmem:[#allocation2 + $0x2b8] sm:$0xff]
  %v857 = vld [vmem:[#allocation2 + $0x2c0] sm:$0xff]
  %v858 = vld [vmem:[#allocation2 + $0x2c8] sm:$0xff]
  %v859 = vld [vmem:[#allocation2 + $0x2d0] sm:$0xff]
  %v860 = vld [vmem:[#allocation2 + $0x2d8] sm:$0xff]
  %v861 = vld [vmem:[#allocation2 + $0x2e0] sm:$0xff]
  %v862 = vld [vmem:[#allocation2 + $0x2e8] sm:$0xff]
  %v863 = vld [vmem:[#allocation2 + $0x2f0] sm:$0xff]
  %v864 = vld [vmem:[#allocation2 + $0x2f8] sm:$0xff]
  %v865 = vld [vmem:[#allocation2 + $0x300] sm:$0xff]
  %v866 = vld [vmem:[#allocation2 + $0x308] sm:$0xff]
  %v867 = vld [vmem:[#allocation2 + $0x310] sm:$0xff]
  %v868 = vld [vmem:[#allocation2 + $0x318] sm:$0xff]
  %v869 = vld [vmem:[#allocation2 + $0x320] sm:$0xff]
  %v870 = vld [vmem:[#allocation2 + $0x328] sm:$0xff]
  %v871 = vld [vmem:[#allocation2 + $0x330] sm:$0xff]
  %v872 = vld [vmem:[#allocation2 + $0x338] sm:$0xff]
  %v873 = vld [vmem:[#allocation2 + $0x340] sm:$0xff]
  %v874 = vld [vmem:[#allocation2 + $0x348] sm:$0xff]
  %v875 = vld [vmem:[#allocation2 + $0x350] sm:$0xff]
  %v876 = vld [vmem:[#allocation2 + $0x358] sm:$0xff]
  %v877 = vld [vmem:[#allocation2 + $0x360] sm:$0xff]
  %v878 = vld [vmem:[#allocation2 + $0x368] sm:$0xff]
  %v879 = vld [vmem:[#allocation2 + $0x370] sm:$0xff]
  %v880 = vld [vmem:[#allocation2 + $0x378] sm:$0xff]
  %v881 = vld [vmem:[#allocation2 + $0x380] sm:$0xff]
  %v882 = vld [vmem:[#allocation2 + $0x388] sm:$0xff]
  %v883 = vld [vmem:[#allocation2 + $0x390] sm:$0xff]
  %v884 = vld [vmem:[#allocation2 + $0x398] sm:$0xff]
  %v885 = vld [vmem:[#allocation2 + $0x3a0] sm:$0xff]
  %v886 = vld [vmem:[#allocation2 + $0x3a8] sm:$0xff]
  %v887 = vld [vmem:[#allocation2 + $0x3b0] sm:$0xff]
  %v888 = vld [vmem:[#allocation2 + $0x3b8] sm:$0xff]
  %v889 = vld [vmem:[#allocation2 + $0x3c0] sm:$0xff]
  %v890 = vld [vmem:[#allocation2 + $0x3c8] sm:$0xff]
  %v891 = vld [vmem:[#allocation2 + $0x3d0] sm:$0xff]
  %v892 = vld [vmem:[#allocation2 + $0x3d8] sm:$0xff]
  %v893 = vld [vmem:[#allocation2 + $0x3e0] sm:$0xff]
  %v894 = vld [vmem:[#allocation2 + $0x3e8] sm:$0xff]
  %v895 = vld [vmem:[#allocation2 + $0x3f0] sm:$0xff]
  %v896 = vld [vmem:[#allocation2 + $0x3f8] sm:$0xff]
  %v897 = vld [vmem:[%s2] sm:$0x1]
  %v899 = vlaneseq
  %v900 = vshrl.u32 %v899, 7
  %v901 = vsub.s32 0, %v900
  %v902 = vrot.slane %v897, %v901
  %v912 = vunpack.c.l.b16 %v761
  %v913 = vunpack.c.h.b16 %v761
  %v914 = vunpack.c.l.b16 %v762
  %v915 = vunpack.c.h.b16 %v762
  %v916 = vunpack.c.l.b16 %v763
  %v917 = vunpack.c.h.b16 %v763
  %v918 = vunpack.c.l.b16 %v764
  %v919 = vunpack.c.h.b16 %v764
  %v920 = vunpack.c.l.b16 %v765
  %v921 = vunpack.c.h.b16 %v765
  %v922 = vunpack.c.l.b16 %v766
  %v923 = vunpack.c.h.b16 %v766
  %v924 = vunpack.c.l.b16 %v767
  %v925 = vunpack.c.h.b16 %v767
  %v926 = vunpack.c.l.b16 %v768
  %v927 = vunpack.c.h.b16 %v768
  %v928 = vpack.c.b16 %v912, %v912
  %v929 = vpack.c.b16 %v913, %v913
  %v930 = vpack.c.b16 %v914, %v914
  %v931 = vpack.c.b16 %v915, %v915
  %v932 = vpack.c.b16 %v916, %v916
  %v933 = vpack.c.b16 %v917, %v917
  %v934 = vpack.c.b16 %v918, %v918
  %v935 = vpack.c.b16 %v919, %v919
  %v936 = vpack.c.b16 %v920, %v920
  %v937 = vpack.c.b16 %v921, %v921
  %v938 = vpack.c.b16 %v922, %v922
  %v939 = vpack.c.b16 %v923, %v923
  %v940 = vpack.c.b16 %v924, %v924
  %v941 = vpack.c.b16 %v925, %v925
  %v942 = vpack.c.b16 %v926, %v926
  %v943 = vpack.c.b16 %v927, %v927
  %960 = vmatprep.subr.bf16.mxu0 0
  %961 = vmatpush1.bf16.msra.mxu0 %v769
  %962 = vmatprep.subr.bf16.mxu0 0
  %963 = vmatpush1.bf16.msra.mxu0 %v770
  %964 = vmatprep.subr.bf16.mxu0 0
  %965 = vmatpush1.bf16.msra.mxu0 %v771
  %966 = vmatprep.subr.bf16.mxu0 0
  %967 = vmatpush1.bf16.msra.mxu0 %v772
  %968 = vmatprep.subr.bf16.mxu0 0
  %969 = vmatpush1.bf16.msra.mxu0 %v773
  %970 = vmatprep.subr.bf16.mxu0 0
  %971 = vmatpush1.bf16.msra.mxu0 %v774
  %972 = vmatprep.subr.bf16.mxu0 0
  %973 = vmatpush1.bf16.msra.mxu0 %v775
  %974 = vmatprep.subr.bf16.mxu0 0
  %975 = vmatpush1.bf16.msra.mxu0 %v776
  %976 = vmatprep.subr.bf16.mxu0 0
  %977 = vmatpush1.bf16.msra.mxu0 %v777
  %978 = vmatprep.subr.bf16.mxu0 0
  %979 = vmatpush1.bf16.msra.mxu0 %v778
  %980 = vmatprep.subr.bf16.mxu0 0
  %981 = vmatpush1.bf16.msra.mxu0 %v779
  %982 = vmatprep.subr.bf16.mxu0 0
  %983 = vmatpush1.bf16.msra.mxu0 %v780
  %984 = vmatprep.subr.bf16.mxu0 0
  %985 = vmatpush1.bf16.msra.mxu0 %v781
  %986 = vmatprep.subr.bf16.mxu0 0
  %987 = vmatpush1.bf16.msra.mxu0 %v782
  %988 = vmatprep.subr.bf16.mxu0 0
  %989 = vmatpush1.bf16.msra.mxu0 %v783
  %990 = vmatprep.subr.bf16.mxu0 0
  %991 = vmatpush1.bf16.msra.mxu0 %v784
  %992 = vmatprep.mubr.bf16.mxu0 %v929
  %993 = vmatmul.mubr.bf16.gmra.mrb[0].mxu0 %v928
  %v994 = vpop.f32.mrb[0].mxu0
  %v995 = vadd.f32 %v902, %v994
  %v996 = vpop.f32.mrb[0].mxu0
  %v997 = vpop.f32.mrb[0].mxu0
  %v998 = vpop.f32.mrb[0].mxu0
  %999 = vdwg.mxu0
  %1000 = vmatprep.subr.bf16.mxu0 0
  %1001 = vmatpush1.bf16.msra.mxu0 %v785
  %1002 = vmatprep.subr.bf16.mxu0 0
  %1003 = vmatpush1.bf16.msra.mxu0 %v786
  %1004 = vmatprep.subr.bf16.mxu0 0
  %1005 = vmatpush1.bf16.msra.mxu0 %v787
  %1006 = vmatprep.subr.bf16.mxu0 0
  %1007 = vmatpush1.bf16.msra.mxu0 %v788
  %1008 = vmatprep.subr.bf16.mxu0 0
  %1009 = vmatpush1.bf16.msra.mxu0 %v789
  %1010 = vmatprep.subr.bf16.mxu0 0
  %1011 = vmatpush1.bf16.msra.mxu0 %v790
  %1012 = vmatprep.subr.bf16.mxu0 0
  %1013 = vmatpush1.bf16.msra.mxu0 %v791
  %1014 = vmatprep.subr.bf16.mxu0 0
  %1015 = vmatpush1.bf16.msra.mxu0 %v792
  %1016 = vmatprep.subr.bf16.mxu0 0
  %1017 = vmatpush1.bf16.msra.mxu0 %v793
  %1018 = vmatprep.subr.bf16.mxu0 0
  %1019 = vmatpush1.bf16.msra.mxu0 %v794
  %1020 = vmatprep.subr.bf16.mxu0 0
  %1021 = vmatpush1.bf16.msra.mxu0 %v795
  %1022 = vmatprep.subr.bf16.mxu0 0
  %1023 = vmatpush1.bf16.msra.mxu0 %v796
  %1024 = vmatprep.subr.bf16.mxu0 0
  %1025 = vmatpush1.bf16.msra.mxu0 %v797
  %1026 = vmatprep.subr.bf16.mxu0 0
  %1027 = vmatpush1.bf16.msra.mxu0 %v798
  %1028 = vmatprep.subr.bf16.mxu0 0
  %1029 = vmatpush1.bf16.msra.mxu0 %v799
  %1030 = vmatprep.subr.bf16.mxu0 0
  %1031 = vmatpush1.bf16.msra.mxu0 %v800
  %1032 = vmatprep.mubr.bf16.mxu0 %v931
  %1033 = vmatmul.mubr.bf16.gmra.mrb[0].mxu0 %v930
  %v1034 = vpop.f32.mrb[0].mxu0
  %v1035 = vadd.f32 %v995, %v1034
  %v1036 = vpop.f32.mrb[0].mxu0
  %v1037 = vpop.f32.mrb[0].mxu0
  %v1038 = vpop.f32.mrb[0].mxu0
  %1039 = vdwg.mxu0
  %1040 = vmatprep.subr.bf16.mxu0 0
  %1041 = vmatpush1.bf16.msra.mxu0 %v801
  %1042 = vmatprep.subr.bf16.mxu0 0
  %1043 = vmatpush1.bf16.msra.mxu0 %v802
  %1044 = vmatprep.subr.bf16.mxu0 0
  %1045 = vmatpush1.bf16.msra.mxu0 %v803
  %1046 = vmatprep.subr.bf16.mxu0 0
  %1047 = vmatpush1.bf16.msra.mxu0 %v804
  %1048 = vmatprep.subr.bf16.mxu0 0
  %1049 = vmatpush1.bf16.msra.mxu0 %v805
  %1050 = vmatprep.subr.bf16.mxu0 0
  %1051 = vmatpush1.bf16.msra.mxu0 %v806
  %1052 = vmatprep.subr.bf16.mxu0 0
  %1053 = vmatpush1.bf16.msra.mxu0 %v807
  %1054 = vmatprep.subr.bf16.mxu0 0
  %1055 = vmatpush1.bf16.msra.mxu0 %v808
  %1056 = vmatprep.subr.bf16.mxu0 0
  %1057 = vmatpush1.bf16.msra.mxu0 %v809
  %1058 = vmatprep.subr.bf16.mxu0 0
  %1059 = vmatpush1.bf16.msra.mxu0 %v810
  %1060 = vmatprep.subr.bf16.mxu0 0
  %1061 = vmatpush1.bf16.msra.mxu0 %v811
  %1062 = vmatprep.subr.bf16.mxu0 0
  %1063 = vmatpush1.bf16.msra.mxu0 %v812
  %1064 = vmatprep.subr.bf16.mxu0 0
  %1065 = vmatpush1.bf16.msra.mxu0 %v813
  %1066 = vmatprep.subr.bf16.mxu0 0
  %1067 = vmatpush1.bf16.msra.mxu0 %v814
  %1068 = vmatprep.subr.bf16.mxu0 0
  %1069 = vmatpush1.bf16.msra.mxu0 %v815
  %1070 = vmatprep.subr.bf16.mxu0 0
  %1071 = vmatpush1.bf16.msra.mxu0 %v816
  %1072 = vmatprep.mubr.bf16.mxu0 %v933
  %1073 = vmatmul.mubr.bf16.gmra.mrb[0].mxu0 %v932
  %v1074 = vpop.f32.mrb[0].mxu0
  %v1075 = vadd.f32 %v1035, %v1074
  %v1076 = vpop.f32.mrb[0].mxu0
  %v1077 = vpop.f32.mrb[0].mxu0
  %v1078 = vpop.f32.mrb[0].mxu0
  %1079 = vdwg.mxu0
  %1080 = vmatprep.subr.bf16.mxu0 0
  %1081 = vmatpush1.bf16.msra.mxu0 %v817
  %1082 = vmatprep.subr.bf16.mxu0 0
  %1083 = vmatpush1.bf16.msra.mxu0 %v818
  %1084 = vmatprep.subr.bf16.mxu0 0
  %1085 = vmatpush1.bf16.msra.mxu0 %v819
  %1086 = vmatprep.subr.bf16.mxu0 0
  %1087 = vmatpush1.bf16.msra.mxu0 %v820
  %1088 = vmatprep.subr.bf16.mxu0 0
  %1089 = vmatpush1.bf16.msra.mxu0 %v821
  %1090 = vmatprep.subr.bf16.mxu0 0
  %1091 = vmatpush1.bf16.msra.mxu0 %v822
  %1092 = vmatprep.subr.bf16.mxu0 0
  %1093 = vmatpush1.bf16.msra.mxu0 %v823
  %1094 = vmatprep.subr.bf16.mxu0 0
  %1095 = vmatpush1.bf16.msra.mxu0 %v824
  %1096 = vmatprep.subr.bf16.mxu0 0
  %1097 = vmatpush1.bf16.msra.mxu0 %v825
  %1098 = vmatprep.subr.bf16.mxu0 0
  %1099 = vmatpush1.bf16.msra.mxu0 %v826
  %1100 = vmatprep.subr.bf16.mxu0 0
  %1101 = vmatpush1.bf16.msra.mxu0 %v827
  %1102 = vmatprep.subr.bf16.mxu0 0
  %1103 = vmatpush1.bf16.msra.mxu0 %v828
  %1104 = vmatprep.subr.bf16.mxu0 0
  %1105 = vmatpush1.bf16.msra.mxu0 %v829
  %1106 = vmatprep.subr.bf16.mxu0 0
  %1107 = vmatpush1.bf16.msra.mxu0 %v830
  %1108 = vmatprep.subr.bf16.mxu0 0
  %1109 = vmatpush1.bf16.msra.mxu0 %v831
  %1110 = vmatprep.subr.bf16.mxu0 0
  %1111 = vmatpush1.bf16.msra.mxu0 %v832
  %1112 = vmatprep.mubr.bf16.mxu0 %v935
  %1113 = vmatmul.mubr.bf16.gmra.mrb[0].mxu0 %v934
  %v1114 = vpop.f32.mrb[0].mxu0
  %v1115 = vadd.f32 %v1075, %v1114
  %v1116 = vpop.f32.mrb[0].mxu0
  %v1117 = vpop.f32.mrb[0].mxu0
  %v1118 = vpop.f32.mrb[0].mxu0
  %1119 = vdwg.mxu0
  %1120 = vmatprep.subr.bf16.mxu0 0
  %1121 = vmatpush1.bf16.msra.mxu0 %v833
  %1122 = vmatprep.subr.bf16.mxu0 0
  %1123 = vmatpush1.bf16.msra.mxu0 %v834
  %1124 = vmatprep.subr.bf16.mxu0 0
  %1125 = vmatpush1.bf16.msra.mxu0 %v835
  %1126 = vmatprep.subr.bf16.mxu0 0
  %1127 = vmatpush1.bf16.msra.mxu0 %v836
  %1128 = vmatprep.subr.bf16.mxu0 0
  %1129 = vmatpush1.bf16.msra.mxu0 %v837
  %1130 = vmatprep.subr.bf16.mxu0 0
  %1131 = vmatpush1.bf16.msra.mxu0 %v838
  %1132 = vmatprep.subr.bf16.mxu0 0
  %1133 = vmatpush1.bf16.msra.mxu0 %v839
  %1134 = vmatprep.subr.bf16.mxu0 0
  %1135 = vmatpush1.bf16.msra.mxu0 %v840
  %1136 = vmatprep.subr.bf16.mxu0 0
  %1137 = vmatpush1.bf16.msra.mxu0 %v841
  %1138 = vmatprep.subr.bf16.mxu0 0
  %1139 = vmatpush1.bf16.msra.mxu0 %v842
  %1140 = vmatprep.subr.bf16.mxu0 0
  %1141 = vmatpush1.bf16.msra.mxu0 %v843
  %1142 = vmatprep.subr.bf16.mxu0 0
  %1143 = vmatpush1.bf16.msra.mxu0 %v844
  %1144 = vmatprep.subr.bf16.mxu0 0
  %1145 = vmatpush1.bf16.msra.mxu0 %v845
  %1146 = vmatprep.subr.bf16.mxu0 0
  %1147 = vmatpush1.bf16.msra.mxu0 %v846
  %1148 = vmatprep.subr.bf16.mxu0 0
  %1149 = vmatpush1.bf16.msra.mxu0 %v847
  %1150 = vmatprep.subr.bf16.mxu0 0
  %1151 = vmatpush1.bf16.msra.mxu0 %v848
  %1152 = vmatprep.mubr.bf16.mxu0 %v937
  %1153 = vmatmul.mubr.bf16.gmra.mrb[0].mxu0 %v936
  %v1154 = vpop.f32.mrb[0].mxu0
  %v1155 = vadd.f32 %v1115, %v1154
  %v1156 = vpop.f32.mrb[0].mxu0
  %v1157 = vpop.f32.mrb[0].mxu0
  %v1158 = vpop.f32.mrb[0].mxu0
  %1159 = vdwg.mxu0
  %1160 = vmatprep.subr.bf16.mxu0 0
  %1161 = vmatpush1.bf16.msra.mxu0 %v849
  %1162 = vmatprep.subr.bf16.mxu0 0
  %1163 = vmatpush1.bf16.msra.mxu0 %v850
  %1164 = vmatprep.subr.bf16.mxu0 0
  %1165 = vmatpush1.bf16.msra.mxu0 %v851
  %1166 = vmatprep.subr.bf16.mxu0 0
  %1167 = vmatpush1.bf16.msra.mxu0 %v852
  %1168 = vmatprep.subr.bf16.mxu0 0
  %1169 = vmatpush1.bf16.msra.mxu0 %v853
  %1170 = vmatprep.subr.bf16.mxu0 0
  %1171 = vmatpush1.bf16.msra.mxu0 %v854
  %1172 = vmatprep.subr.bf16.mxu0 0
  %1173 = vmatpush1.bf16.msra.mxu0 %v855
  %1174 = vmatprep.subr.bf16.mxu0 0
  %1175 = vmatpush1.bf16.msra.mxu0 %v856
  %1176 = vmatprep.subr.bf16.mxu0 0
  %1177 = vmatpush1.bf16.msra.mxu0 %v857
  %1178 = vmatprep.subr.bf16.mxu0 0
  %1179 = vmatpush1.bf16.msra.mxu0 %v858
  %1180 = vmatprep.subr.bf16.mxu0 0
  %1181 = vmatpush1.bf16.msra.mxu0 %v859
  %1182 = vmatprep.subr.bf16.mxu0 0
  %1183 = vmatpush1.bf16.msra.mxu0 %v860
  %1184 = vmatprep.subr.bf16.mxu0 0
  %1185 = vmatpush1.bf16.msra.mxu0 %v861
  %1186 = vmatprep.subr.bf16.mxu0 0
  %1187 = vmatpush1.bf16.msra.mxu0 %v862
  %1188 = vmatprep.subr.bf16.mxu0 0
  %1189 = vmatpush1.bf16.msra.mxu0 %v863
  %1190 = vmatprep.subr.bf16.mxu0 0
  %1191 = vmatpush1.bf16.msra.mxu0 %v864
  %1192 = vmatprep.mubr.bf16.mxu0 %v939
  %1193 = vmatmul.mubr.bf16.gmra.mrb[0].mxu0 %v938
  %v1194 = vpop.f32.mrb[0].mxu0
  %v1195 = vadd.f32 %v1155, %v1194
  %v1196 = vpop.f32.mrb[0].mxu0
  %v1197 = vpop.f32.mrb[0].mxu0
  %v1198 = vpop.f32.mrb[0].mxu0
  %1199 = vdwg.mxu0
  %1200 = vmatprep.subr.bf16.mxu0 0
  %1201 = vmatpush1.bf16.msra.mxu0 %v865
  %1202 = vmatprep.subr.bf16.mxu0 0
  %1203 = vmatpush1.bf16.msra.mxu0 %v866
  %1204 = vmatprep.subr.bf16.mxu0 0
  %1205 = vmatpush1.bf16.msra.mxu0 %v867
  %1206 = vmatprep.subr.bf16.mxu0 0
  %1207 = vmatpush1.bf16.msra.mxu0 %v868
  %1208 = vmatprep.subr.bf16.mxu0 0
  %1209 = vmatpush1.bf16.msra.mxu0 %v869
  %1210 = vmatprep.subr.bf16.mxu0 0
  %1211 = vmatpush1.bf16.msra.mxu0 %v870
  %1212 = vmatprep.subr.bf16.mxu0 0
  %1213 = vmatpush1.bf16.msra.mxu0 %v871
  %1214 = vmatprep.subr.bf16.mxu0 0
  %1215 = vmatpush1.bf16.msra.mxu0 %v872
  %1216 = vmatprep.subr.bf16.mxu0 0
  %1217 = vmatpush1.bf16.msra.mxu0 %v873
  %1218 = vmatprep.subr.bf16.mxu0 0
  %1219 = vmatpush1.bf16.msra.mxu0 %v874
  %1220 = vmatprep.subr.bf16.mxu0 0
  %1221 = vmatpush1.bf16.msra.mxu0 %v875
  %1222 = vmatprep.subr.bf16.mxu0 0
  %1223 = vmatpush1.bf16.msra.mxu0 %v876
  %1224 = vmatprep.subr.bf16.mxu0 0
  %1225 = vmatpush1.bf16.msra.mxu0 %v877
  %1226 = vmatprep.subr.bf16.mxu0 0
  %1227 = vmatpush1.bf16.msra.mxu0 %v878
  %1228 = vmatprep.subr.bf16.mxu0 0
  %1229 = vmatpush1.bf16.msra.mxu0 %v879
  %1230 = vmatprep.subr.bf16.mxu0 0
  %1231 = vmatpush1.bf16.msra.mxu0 %v880
  %1232 = vmatprep.mubr.bf16.mxu0 %v941
  %1233 = vmatmul.mubr.bf16.gmra.mrb[0].mxu0 %v940
  %v1234 = vpop.f32.mrb[0].mxu0
  %v1235 = vadd.f32 %v1195, %v1234
  %v1236 = vpop.f32.mrb[0].mxu0
  %v1237 = vpop.f32.mrb[0].mxu0
  %v1238 = vpop.f32.mrb[0].mxu0
  %1239 = vdwg.mxu0
  %1240 = vmatprep.subr.bf16.mxu0 0
  %1241 = vmatpush1.bf16.msra.mxu0 %v881
  %1242 = vmatprep.subr.bf16.mxu0 0
  %1243 = vmatpush1.bf16.msra.mxu0 %v882
  %1244 = vmatprep.subr.bf16.mxu0 0
  %1245 = vmatpush1.bf16.msra.mxu0 %v883
  %1246 = vmatprep.subr.bf16.mxu0 0
  %1247 = vmatpush1.bf16.msra.mxu0 %v884
  %1248 = vmatprep.subr.bf16.mxu0 0
  %1249 = vmatpush1.bf16.msra.mxu0 %v885
  %1250 = vmatprep.subr.bf16.mxu0 0
  %1251 = vmatpush1.bf16.msra.mxu0 %v886
  %1252 = vmatprep.subr.bf16.mxu0 0
  %1253 = vmatpush1.bf16.msra.mxu0 %v887
  %1254 = vmatprep.subr.bf16.mxu0 0
  %1255 = vmatpush1.bf16.msra.mxu0 %v888
  %1256 = vmatprep.subr.bf16.mxu0 0
  %1257 = vmatpush1.bf16.msra.mxu0 %v889
  %1258 = vmatprep.subr.bf16.mxu0 0
  %1259 = vmatpush1.bf16.msra.mxu0 %v890
  %1260 = vmatprep.subr.bf16.mxu0 0
  %1261 = vmatpush1.bf16.msra.mxu0 %v891
  %1262 = vmatprep.subr.bf16.mxu0 0
  %1263 = vmatpush1.bf16.msra.mxu0 %v892
  %1264 = vmatprep.subr.bf16.mxu0 0
  %1265 = vmatpush1.bf16.msra.mxu0 %v893
  %1266 = vmatprep.subr.bf16.mxu0 0
  %1267 = vmatpush1.bf16.msra.mxu0 %v894
  %1268 = vmatprep.subr.bf16.mxu0 0
  %1269 = vmatpush1.bf16.msra.mxu0 %v895
  %1270 = vmatprep.subr.bf16.mxu0 0
  %1271 = vmatpush1.bf16.msra.mxu0 %v896
  %1272 = vmatprep.mubr.bf16.mxu0 %v943
  %1273 = vmatmul.mubr.bf16.gmra.mrb[0].mxu0 %v942
  %v1274 = vpop.f32.mrb[0].mxu0
  %v1275 = vadd.f32 %v1235, %v1274
  %v1276 = vpop.f32.mrb[0].mxu0
  %v1277 = vpop.f32.mrb[0].mxu0
  %v1278 = vpop.f32.mrb[0].mxu0
  %1279 = vdwg.mxu0
  %v1280 = vmax.f32 %v1275, 0.0
  %v1281 = vpack.c.bf16 %v1280, %v1280
  %v1282 = vld [vmem:[%s4] sm:$0xff]
  %v1283 = vld [vmem:[%s4 + $0x8] sm:$0xff]
  %v1284 = vld [vmem:[%s4 + $0x10] sm:$0xff]
  %v1285 = vld [vmem:[%s4 + $0x18] sm:$0xff]
  %v1286 = vld [vmem:[%s4 + $0x20] sm:$0xff]
  %v1287 = vld [vmem:[%s4 + $0x28] sm:$0xff]
  %v1288 = vld [vmem:[%s4 + $0x30] sm:$0xff]
  %v1289 = vld [vmem:[%s4 + $0x38] sm:$0xff]
  %v1290 = vld [vmem:[%s4 + $0x40] sm:$0xff]
  %v1291 = vld [vmem:[%s4 + $0x48] sm:$0xff]
  %v1292 = vld [vmem:[%s4 + $0x50] sm:$0xff]
  %v1293 = vld [vmem:[%s4 + $0x58] sm:$0xff]
  %v1294 = vld [vmem:[%s4 + $0x60] sm:$0xff]
  %v1295 = vld [vmem:[%s4 + $0x68] sm:$0xff]
  %v1296 = vld [vmem:[%s4 + $0x70] sm:$0xff]
  %v1297 = vld [vmem:[%s4 + $0x78] sm:$0xff]
  %v1298 = vld [vmem:[%s4 + $0x80] sm:$0xff]
  %v1299 = vld [vmem:[%s4 + $0x88] sm:$0xff]
  %v1300 = vld [vmem:[%s4 + $0x90] sm:$0xff]
  %v1301 = vld [vmem:[%s4 + $0x98] sm:$0xff]
  %v1302 = vld [vmem:[%s4 + $0xa0] sm:$0xff]
  %v1303 = vld [vmem:[%s4 + $0xa8] sm:$0xff]
  %v1304 = vld [vmem:[%s4 + $0xb0] sm:$0xff]
  %v1305 = vld [vmem:[%s4 + $0xb8] sm:$0xff]
  %v1306 = vld [vmem:[%s4 + $0xc0] sm:$0xff]
  %v1307 = vld [vmem:[%s4 + $0xc8] sm:$0xff]
  %v1308 = vld [vmem:[%s4 + $0xd0] sm:$0xff]
  %v1309 = vld [vmem:[%s4 + $0xd8] sm:$0xff]
  %v1310 = vld [vmem:[%s4 + $0xe0] sm:$0xff]
  %v1311 = vld [vmem:[%s4 + $0xe8] sm:$0xff]
  %v1312 = vld [vmem:[%s4 + $0xf0] sm:$0xff]
  %v1313 = vld [vmem:[%s4 + $0xf8] sm:$0xff]
  %v1346 = vunpack.c.l.b16 %v1282
  %v1347 = vunpack.c.h.b16 %v1282
  %v1348 = vunpack.c.l.b16 %v1283
  %v1349 = vunpack.c.h.b16 %v1283
  %v1350 = vunpack.c.l.b16 %v1284
  %v1351 = vunpack.c.h.b16 %v1284
  %v1352 = vunpack.c.l.b16 %v1285
  %v1353 = vunpack.c.h.b16 %v1285
  %v1354 = vunpack.c.l.b16 %v1286
  %v1355 = vunpack.c.h.b16 %v1286
  %v1356 = vunpack.c.l.b16 %v1287
  %v1357 = vunpack.c.h.b16 %v1287
  %v1358 = vunpack.c.l.b16 %v1288
  %v1359 = vunpack.c.h.b16 %v1288
  %v1360 = vunpack.c.l.b16 %v1289
  %v1361 = vunpack.c.h.b16 %v1289
  %v1362 = vunpack.c.l.b16 %v1290
  %v1363 = vunpack.c.h.b16 %v1290
  %v1364 = vunpack.c.l.b16 %v1291
  %v1365 = vunpack.c.h.b16 %v1291
  %v1366 = vunpack.c.l.b16 %v1292
  %v1367 = vunpack.c.h.b16 %v1292
  %v1368 = vunpack.c.l.b16 %v1293
  %v1369 = vunpack.c.h.b16 %v1293
  %v1370 = vunpack.c.l.b16 %v1294
  %v1371 = vunpack.c.h.b16 %v1294
  %v1372 = vunpack.c.l.b16 %v1295
  %v1373 = vunpack.c.h.b16 %v1295
  %v1374 = vunpack.c.l.b16 %v1296
  %v1375 = vunpack.c.h.b16 %v1296
  %v1376 = vunpack.c.l.b16 %v1297
  %v1377 = vunpack.c.h.b16 %v1297
  %v1378 = vunpack.c.l.b16 %v1298
  %v1379 = vunpack.c.h.b16 %v1298
  %v1380 = vunpack.c.l.b16 %v1299
  %v1381 = vunpack.c.h.b16 %v1299
  %v1382 = vunpack.c.l.b16 %v1300
  %v1383 = vunpack.c.h.b16 %v1300
  %v1384 = vunpack.c.l.b16 %v1301
  %v1385 = vunpack.c.h.b16 %v1301
  %v1386 = vunpack.c.l.b16 %v1302
  %v1387 = vunpack.c.h.b16 %v1302
  %v1388 = vunpack.c.l.b16 %v1303
  %v1389 = vunpack.c.h.b16 %v1303
  %v1390 = vunpack.c.l.b16 %v1304
  %v1391 = vunpack.c.h.b16 %v1304
  %v1392 = vunpack.c.l.b16 %v1305
  %v1393 = vunpack.c.h.b16 %v1305
  %v1394 = vunpack.c.l.b16 %v1306
  %v1395 = vunpack.c.h.b16 %v1306
  %v1396 = vunpack.c.l.b16 %v1307
  %v1397 = vunpack.c.h.b16 %v1307
  %v1398 = vunpack.c.l.b16 %v1308
  %v1399 = vunpack.c.h.b16 %v1308
  %v1400 = vunpack.c.l.b16 %v1309
  %v1401 = vunpack.c.h.b16 %v1309
  %v1402 = vunpack.c.l.b16 %v1310
  %v1403 = vunpack.c.h.b16 %v1310
  %v1404 = vunpack.c.l.b16 %v1311
  %v1405 = vunpack.c.h.b16 %v1311
  %v1406 = vunpack.c.l.b16 %v1312
  %v1407 = vunpack.c.h.b16 %v1312
  %v1408 = vunpack.c.l.b16 %v1313
  %v1409 = vunpack.c.h.b16 %v1313
  %v1410 = vpack.c.b16 %v1350, %v1346
  %v1411 = vpack.c.b16 %v1351, %v1347
  %v1412 = vpack.c.b16 %v1352, %v1348
  %v1413 = vpack.c.b16 %v1353, %v1349
  %v1414 = vpack.c.b16 %v1358, %v1354
  %v1415 = vpack.c.b16 %v1359, %v1355
  %v1416 = vpack.c.b16 %v1360, %v1356
  %v1417 = vpack.c.b16 %v1361, %v1357
  %v1418 = vpack.c.b16 %v1366, %v1362
  %v1419 = vpack.c.b16 %v1367, %v1363
  %v1420 = vpack.c.b16 %v1368, %v1364
  %v1421 = vpack.c.b16 %v1369, %v1365
  %v1422 = vpack.c.b16 %v1374, %v1370
  %v1423 = vpack.c.b16 %v1375, %v1371
  %v1424 = vpack.c.b16 %v1376, %v1372
  %v1425 = vpack.c.b16 %v1377, %v1373
  %v1426 = vpack.c.b16 %v1382, %v1378
  %v1427 = vpack.c.b16 %v1383, %v1379
  %v1428 = vpack.c.b16 %v1384, %v1380
  %v1429 = vpack.c.b16 %v1385, %v1381
  %v1430 = vpack.c.b16 %v1390, %v1386
  %v1431 = vpack.c.b16 %v1391, %v1387
  %v1432 = vpack.c.b16 %v1392, %v1388
  %v1433 = vpack.c.b16 %v1393, %v1389
  %v1434 = vpack.c.b16 %v1398, %v1394
  %v1435 = vpack.c.b16 %v1399, %v1395
  %v1436 = vpack.c.b16 %v1400, %v1396
  %v1437 = vpack.c.b16 %v1401, %v1397
  %v1438 = vpack.c.b16 %v1406, %v1402
  %v1439 = vpack.c.b16 %v1407, %v1403
  %v1440 = vpack.c.b16 %v1408, %v1404
  %v1441 = vpack.c.b16 %v1409, %v1405
  %1474 = vmatprep.subr.bf16.mxu0 %v1411
  %1475 = vmatpush1.bf16.msra.mxu0 %v1410
  %1476 = vmatprep.subr.bf16.mxu0 %v1415
  %1477 = vmatpush1.bf16.msra.mxu0 %v1414
  %1478 = vmatprep.subr.bf16.mxu0 %v1419
  %1479 = vmatpush1.bf16.msra.mxu0 %v1418
  %1480 = vmatprep.subr.bf16.mxu0 %v1423
  %1481 = vmatpush1.bf16.msra.mxu0 %v1422
  %1482 = vmatprep.subr.bf16.mxu0 %v1427
  %1483 = vmatpush1.bf16.msra.mxu0 %v1426
  %1484 = vmatprep.subr.bf16.mxu0 %v1431
  %1485 = vmatpush1.bf16.msra.mxu0 %v1430
  %1486 = vmatprep.subr.bf16.mxu0 %v1435
  %1487 = vmatpush1.bf16.msra.mxu0 %v1434
  %1488 = vmatprep.subr.bf16.mxu0 %v1439
  %1489 = vmatpush1.bf16.msra.mxu0 %v1438
  %1490 = vmatprep.subr.bf16.mxu0 0
  %1491 = vmatpush1.bf16.msra.mxu0 0
  %1492 = vmatprep.subr.bf16.mxu0 0
  %1493 = vmatpush1.bf16.msra.mxu0 0
  %1494 = vmatprep.subr.bf16.mxu0 0
  %1495 = vmatpush1.bf16.msra.mxu0 0
  %1496 = vmatprep.subr.bf16.mxu0 0
  %1497 = vmatpush1.bf16.msra.mxu0 0
  %1498 = vmatprep.subr.bf16.mxu0 0
  %1499 = vmatpush1.bf16.msra.mxu0 0
  %1500 = vmatprep.subr.bf16.mxu0 0
  %1501 = vmatpush1.bf16.msra.mxu0 0
  %1502 = vmatprep.subr.bf16.mxu0 0
  %1503 = vmatpush1.bf16.msra.mxu0 0
  %1504 = vmatprep.subr.bf16.mxu0 0
  %1505 = vmatpush1.bf16.msra.mxu0 0
  %1506 = vmatprep.mubr.bf16.mxu0 0
  %1507 = vmatmul.mubr.bf16.gmra.mrb[0].mxu0 %v1281
  %v1508 = vpop.f32.mrb[0].mxu0
  %v1509 = vadd.f32 %v378, %v1508
  %v1510 = vpop.f32.mrb[0].mxu0
  %v1511 = vpop.f32.mrb[0].mxu0
  %v1512 = vpop.f32.mrb[0].mxu0
  %1513 = vdwg.mxu0
  %1514 = vmatprep.subr.bf16.mxu0 %v1413
  %1515 = vmatpush1.bf16.msra.mxu0 %v1412
  %1516 = vmatprep.subr.bf16.mxu0 %v1417
  %1517 = vmatpush1.bf16.msra.mxu0 %v1416
  %1518 = vmatprep.subr.bf16.mxu0 %v1421
  %1519 = vmatpush1.bf16.msra.mxu0 %v1420
  %1520 = vmatprep.subr.bf16.mxu0 %v1425
  %1521 = vmatpush1.bf16.msra.mxu0 %v1424
  %1522 = vmatprep.subr.bf16.mxu0 %v1429
  %1523 = vmatpush1.bf16.msra.mxu0 %v1428
  %1524 = vmatprep.subr.bf16.mxu0 %v1433
  %1525 = vmatpush1.bf16.msra.mxu0 %v1432
  %1526 = vmatprep.subr.bf16.mxu0 %v1437
  %1527 = vmatpush1.bf16.msra.mxu0 %v1436
  %1528 = vmatprep.subr.bf16.mxu0 %v1441
  %1529 = vmatpush1.bf16.msra.mxu0 %v1440
  %1530 = vmatprep.subr.bf16.mxu0 0
  %1531 = vmatpush1.bf16.msra.mxu0 0
  %1532 = vmatprep.subr.bf16.mxu0 0
  %1533 = vmatpush1.bf16.msra.mxu0 0
  %1534 = vmatprep.subr.bf16.mxu0 0
  %1535 = vmatpush1.bf16.msra.mxu0 0
  %1536 = vmatprep.subr.bf16.mxu0 0
  %1537 = vmatpush1.bf16.msra.mxu0 0
  %1538 = vmatprep.subr.bf16.mxu0 0
  %1539 = vmatpush1.bf16.msra.mxu0 0
  %1540 = vmatprep.subr.bf16.mxu0 0
  %1541 = vmatpush1.bf16.msra.mxu0 0
  %1542 = vmatprep.subr.bf16.mxu0 0
  %1543 = vmatpush1.bf16.msra.mxu0 0
  %1544 = vmatprep.subr.bf16.mxu0 0
  %1545 = vmatpush1.bf16.msra.mxu0 0
  %1546 = vmatprep.mubr.bf16.mxu0 0
  %1547 = vmatmul.mubr.bf16.gmra.mrb[0].mxu0 %v1281
  %v1548 = vpop.f32.mrb[0].mxu0
  %v1549 = vadd.f32 %v386, %v1548
  %v1550 = vpop.f32.mrb[0].mxu0
  %v1551 = vadd.f32 %v390, %v1550
  %v1552 = vpop.f32.mrb[0].mxu0
  %v1553 = vpop.f32.mrb[0].mxu0
  %1554 = vdwg.mxu0
  %v1555 = vxor.u32 %v1509, 2147483648
  %v1556 = vmul.f32 %v1555, 1.442695
  %v1557 = vpow.pop %v1556
  %v1558 = vadd.f32 %v1557, 1.0
  %v1559 = vrcp.pop %v1558
  %v1560 = vmul.f32 1.0, %v1559
  %v1561 = vtanh.pop %v1549
  %v1562 = vxor.u32 %v1551, 2147483648
  %v1563 = vmul.f32 %v1562, 1.442695
  %v1564 = vpow.pop %v1563
  %v1565 = vadd.f32 %v1564, 1.0
  %v1566 = vrcp.pop %v1565
  %v1567 = vmul.f32 1.0, %v1566
  %v1568 = vmul.f32 %v1560, %v1561
  %v1569 = vtanh.pop %v1568
  %v1570 = vmul.f32 %v1567, %v1569
  %v1571 = vld [vmem:[%s8] sm:$0x1]
  %v1572 = vld [vmem:[%s10] sm:$0x3]
  %v1573 = vld [vmem:[#allocation3] sm:$0xff]
  %v1574 = vld [vmem:[#allocation3 + $0x8] sm:$0xff]
  %v1575 = vld [vmem:[#allocation3 + $0x10] sm:$0xff]
  %v1576 = vld [vmem:[#allocation3 + $0x18] sm:$0xff]
  %v1577 = vpack.c.bf16 %v1570, %v1570
  %v1578 = vld [vmem:[%s5] sm:$0xff]
  %v1579 = vld [vmem:[%s5 + $0x8] sm:$0xff]
  %v1580 = vld [vmem:[%s5 + $0x10] sm:$0xff]
  %v1581 = vld [vmem:[%s5 + $0x18] sm:$0xff]
  %v1582 = vld [vmem:[%s5 + $0x20] sm:$0xff]
  %v1583 = vld [vmem:[%s5 + $0x28] sm:$0xff]
  %v1584 = vld [vmem:[%s5 + $0x30] sm:$0xff]
  %v1585 = vld [vmem:[%s5 + $0x38] sm:$0xff]
  %v1586 = vld [vmem:[%s5 + $0x40] sm:$0xff]
  %v1587 = vld [vmem:[%s5 + $0x48] sm:$0xff]
  %v1588 = vld [vmem:[%s5 + $0x50] sm:$0xff]
  %v1589 = vld [vmem:[%s5 + $0x58] sm:$0xff]
  %v1590 = vld [vmem:[%s5 + $0x60] sm:$0xff]
  %v1591 = vld [vmem:[%s5 + $0x68] sm:$0xff]
  %v1592 = vld [vmem:[%s5 + $0x70] sm:$0xff]
  %v1593 = vld [vmem:[%s5 + $0x78] sm:$0xff]
  %v1594 = vld [vmem:[%s5 + $0x80] sm:$0xff]
  %v1595 = vld [vmem:[%s5 + $0x88] sm:$0xff]
  %v1596 = vld [vmem:[%s5 + $0x90] sm:$0xff]
  %v1597 = vld [vmem:[%s5 + $0x98] sm:$0xff]
  %v1598 = vld [vmem:[%s5 + $0xa0] sm:$0xff]
  %v1599 = vld [vmem:[%s5 + $0xa8] sm:$0xff]
  %v1600 = vld [vmem:[%s5 + $0xb0] sm:$0xff]
  %v1601 = vld [vmem:[%s5 + $0xb8] sm:$0xff]
  %v1602 = vld [vmem:[%s5 + $0xc0] sm:$0xff]
  %v1603 = vld [vmem:[%s5 + $0xc8] sm:$0xff]
  %v1604 = vld [vmem:[%s5 + $0xd0] sm:$0xff]
  %v1605 = vld [vmem:[%s5 + $0xd8] sm:$0xff]
  %v1606 = vld [vmem:[%s5 + $0xe0] sm:$0xff]
  %v1607 = vld [vmem:[%s5 + $0xe8] sm:$0xff]
  %v1608 = vld [vmem:[%s5 + $0xf0] sm:$0xff]
  %v1609 = vld [vmem:[%s5 + $0xf8] sm:$0xff]
  %v1642 = vunpack.c.l.b16 %v1578
  %v1643 = vunpack.c.h.b16 %v1578
  %v1644 = vunpack.c.l.b16 %v1579
  %v1645 = vunpack.c.h.b16 %v1579
  %v1646 = vunpack.c.l.b16 %v1580
  %v1647 = vunpack.c.h.b16 %v1580
  %v1648 = vunpack.c.l.b16 %v1581
  %v1649 = vunpack.c.h.b16 %v1581
  %v1650 = vunpack.c.l.b16 %v1582
  %v1651 = vunpack.c.h.b16 %v1582
  %v1652 = vunpack.c.l.b16 %v1583
  %v1653 = vunpack.c.h.b16 %v1583
  %v1654 = vunpack.c.l.b16 %v1584
  %v1655 = vunpack.c.h.b16 %v1584
  %v1656 = vunpack.c.l.b16 %v1585
  %v1657 = vunpack.c.h.b16 %v1585
  %v1658 = vunpack.c.l.b16 %v1586
  %v1659 = vunpack.c.h.b16 %v1586
  %v1660 = vunpack.c.l.b16 %v1587
  %v1661 = vunpack.c.h.b16 %v1587
  %v1662 = vunpack.c.l.b16 %v1588
  %v1663 = vunpack.c.h.b16 %v1588
  %v1664 = vunpack.c.l.b16 %v1589
  %v1665 = vunpack.c.h.b16 %v1589
  %v1666 = vunpack.c.l.b16 %v1590
  %v1667 = vunpack.c.h.b16 %v1590
  %v1668 = vunpack.c.l.b16 %v1591
  %v1669 = vunpack.c.h.b16 %v1591
  %v1670 = vunpack.c.l.b16 %v1592
  %v1671 = vunpack.c.h.b16 %v1592
  %v1672 = vunpack.c.l.b16 %v1593
  %v1673 = vunpack.c.h.b16 %v1593
  %v1674 = vunpack.c.l.b16 %v1594
  %v1675 = vunpack.c.h.b16 %v1594
  %v1676 = vunpack.c.l.b16 %v1595
  %v1677 = vunpack.c.h.b16 %v1595
  %v1678 = vunpack.c.l.b16 %v1596
  %v1679 = vunpack.c.h.b16 %v1596
  %v1680 = vunpack.c.l.b16 %v1597
  %v1681 = vunpack.c.h.b16 %v1597
  %v1682 = vunpack.c.l.b16 %v1598
  %v1683 = vunpack.c.h.b16 %v1598
  %v1684 = vunpack.c.l.b16 %v1599
  %v1685 = vunpack.c.h.b16 %v1599
  %v1686 = vunpack.c.l.b16 %v1600
  %v1687 = vunpack.c.h.b16 %v1600
  %v1688 = vunpack.c.l.b16 %v1601
  %v1689 = vunpack.c.h.b16 %v1601
  %v1690 = vunpack.c.l.b16 %v1602
  %v1691 = vunpack.c.h.b16 %v1602
  %v1692 = vunpack.c.l.b16 %v1603
  %v1693 = vunpack.c.h.b16 %v1603
  %v1694 = vunpack.c.l.b16 %v1604
  %v1695 = vunpack.c.h.b16 %v1604
  %v1696 = vunpack.c.l.b16 %v1605
  %v1697 = vunpack.c.h.b16 %v1605
  %v1698 = vunpack.c.l.b16 %v1606
  %v1699 = vunpack.c.h.b16 %v1606
  %v1700 = vunpack.c.l.b16 %v1607
  %v1701 = vunpack.c.h.b16 %v1607
  %v1702 = vunpack.c.l.b16 %v1608
  %v1703 = vunpack.c.h.b16 %v1608
  %v1704 = vunpack.c.l.b16 %v1609
  %v1705 = vunpack.c.h.b16 %v1609
  %v1706 = vpack.c.b16 %v1646, %v1642
  %v1707 = vpack.c.b16 %v1647, %v1643
  %v1708 = vpack.c.b16 %v1648, %v1644
  %v1709 = vpack.c.b16 %v1649, %v1645
  %v1710 = vpack.c.b16 %v1654, %v1650
  %v1711 = vpack.c.b16 %v1655, %v1651
  %v1712 = vpack.c.b16 %v1656, %v1652
  %v1713 = vpack.c.b16 %v1657, %v1653
  %v1714 = vpack.c.b16 %v1662, %v1658
  %v1715 = vpack.c.b16 %v1663, %v1659
  %v1716 = vpack.c.b16 %v1664, %v1660
  %v1717 = vpack.c.b16 %v1665, %v1661
  %v1718 = vpack.c.b16 %v1670, %v1666
  %v1719 = vpack.c.b16 %v1671, %v1667
  %v1720 = vpack.c.b16 %v1672, %v1668
  %v1721 = vpack.c.b16 %v1673, %v1669
  %v1722 = vpack.c.b16 %v1678, %v1674
  %v1723 = vpack.c.b16 %v1679, %v1675
  %v1724 = vpack.c.b16 %v1680, %v1676
  %v1725 = vpack.c.b16 %v1681, %v1677
  %v1726 = vpack.c.b16 %v1686, %v1682
  %v1727 = vpack.c.b16 %v1687, %v1683
  %v1728 = vpack.c.b16 %v1688, %v1684
  %v1729 = vpack.c.b16 %v1689, %v1685
  %v1730 = vpack.c.b16 %v1694, %v1690
  %v1731 = vpack.c.b16 %v1695, %v1691
  %v1732 = vpack.c.b16 %v1696, %v1692
  %v1733 = vpack.c.b16 %v1697, %v1693
  %v1734 = vpack.c.b16 %v1702, %v1698
  %v1735 = vpack.c.b16 %v1703, %v1699
  %v1736 = vpack.c.b16 %v1704, %v1700
  %v1737 = vpack.c.b16 %v1705, %v1701
  %1770 = vmatprep.subr.bf16.mxu0 %v1707
  %1771 = vmatpush1.bf16.msra.mxu0 %v1706
  %1772 = vmatprep.subr.bf16.mxu0 %v1711
  %1773 = vmatpush1.bf16.msra.mxu0 %v1710
  %1774 = vmatprep.subr.bf16.mxu0 %v1715
  %1775 = vmatpush1.bf16.msra.mxu0 %v1714
  %1776 = vmatprep.subr.bf16.mxu0 %v1719
  %1777 = vmatpush1.bf16.msra.mxu0 %v1718
  %1778 = vmatprep.subr.bf16.mxu0 %v1723
  %1779 = vmatpush1.bf16.msra.mxu0 %v1722
  %1780 = vmatprep.subr.bf16.mxu0 %v1727
  %1781 = vmatpush1.bf16.msra.mxu0 %v1726
  %1782 = vmatprep.subr.bf16.mxu0 %v1731
  %1783 = vmatpush1.bf16.msra.mxu0 %v1730
  %1784 = vmatprep.subr.bf16.mxu0 %v1735
  %1785 = vmatpush1.bf16.msra.mxu0 %v1734
  %1786 = vmatprep.subr.bf16.mxu0 0
  %1787 = vmatpush1.bf16.msra.mxu0 0
  %1788 = vmatprep.subr.bf16.mxu0 0
  %1789 = vmatpush1.bf16.msra.mxu0 0
  %1790 = vmatprep.subr.bf16.mxu0 0
  %1791 = vmatpush1.bf16.msra.mxu0 0
  %1792 = vmatprep.subr.bf16.mxu0 0
  %1793 = vmatpush1.bf16.msra.mxu0 0
  %1794 = vmatprep.subr.bf16.mxu0 0
  %1795 = vmatpush1.bf16.msra.mxu0 0
  %1796 = vmatprep.subr.bf16.mxu0 0
  %1797 = vmatpush1.bf16.msra.mxu0 0
  %1798 = vmatprep.subr.bf16.mxu0 0
  %1799 = vmatpush1.bf16.msra.mxu0 0
  %1800 = vmatprep.subr.bf16.mxu0 0
  %1801 = vmatpush1.bf16.msra.mxu0 0
  %1802 = vmatprep.mubr.bf16.mxu0 0
  %1803 = vmatmul.mubr.bf16.gmra.mrb[0].mxu0 %v1577
  %v1804 = vpop.f32.mrb[0].mxu0
  %v1805 = vadd.f32 0.0, %v1804
  %v1806 = vpop.f32.mrb[0].mxu0
  %v1807 = vadd.f32 0.0, %v1806
  %v1808 = vpop.f32.mrb[0].mxu0
  %v1809 = vpop.f32.mrb[0].mxu0
  %1810 = vdwg.mxu0
  %1811 = vmatprep.subr.bf16.mxu0 %v1709
  %1812 = vmatpush1.bf16.msra.mxu0 %v1708
  %1813 = vmatprep.subr.bf16.mxu0 %v1713
  %1814 = vmatpush1.bf16.msra.mxu0 %v1712
  %1815 = vmatprep.subr.bf16.mxu0 %v1717
  %1816 = vmatpush1.bf16.msra.mxu0 %v1716
  %1817 = vmatprep.subr.bf16.mxu0 %v1721
  %1818 = vmatpush1.bf16.msra.mxu0 %v1720
  %1819 = vmatprep.subr.bf16.mxu0 %v1725
  %1820 = vmatpush1.bf16.msra.mxu0 %v1724
  %1821 = vmatprep.subr.bf16.mxu0 %v1729
  %1822 = vmatpush1.bf16.msra.mxu0 %v1728
  %1823 = vmatprep.subr.bf16.mxu0 %v1733
  %1824 = vmatpush1.bf16.msra.mxu0 %v1732
  %1825 = vmatprep.subr.bf16.mxu0 %v1737
  %1826 = vmatpush1.bf16.msra.mxu0 %v1736
  %1827 = vmatprep.subr.bf16.mxu0 0
  %1828 = vmatpush1.bf16.msra.mxu0 0
  %1829 = vmatprep.subr.bf16.mxu0 0
  %1830 = vmatpush1.bf16.msra.mxu0 0
  %1831 = vmatprep.subr.bf16.mxu0 0
  %1832 = vmatpush1.bf16.msra.mxu0 0
  %1833 = vmatprep.subr.bf16.mxu0 0
  %1834 = vmatpush1.bf16.msra.mxu0 0
  %1835 = vmatprep.subr.bf16.mxu0 0
  %1836 = vmatpush1.bf16.msra.mxu0 0
  %1837 = vmatprep.subr.bf16.mxu0 0
  %1838 = vmatpush1.bf16.msra.mxu0 0
  %1839 = vmatprep.subr.bf16.mxu0 0
  %1840 = vmatpush1.bf16.msra.mxu0 0
  %1841 = vmatprep.subr.bf16.mxu0 0
  %1842 = vmatpush1.bf16.msra.mxu0 0
  %1843 = vmatprep.mubr.bf16.mxu0 0
  %1844 = vmatmul.mubr.bf16.gmra.mrb[0].mxu0 %v1577
  %v1845 = vpop.f32.mrb[0].mxu0
  %v1846 = vadd.f32 0.0, %v1845
  %v1847 = vpop.f32.mrb[0].mxu0
  %v1848 = vadd.f32 0.0, %v1847
  %v1849 = vpop.f32.mrb[0].mxu0
  %v1850 = vpop.f32.mrb[0].mxu0
  %1851 = vdwg.mxu0
  %v1852 = vadd.f32 %v1573, %v1805
  %v1853 = vadd.f32 %v1574, %v1807
  %v1854 = vadd.f32 %v1575, %v1846
  %v1855 = vadd.f32 %v1576, %v1848
  %v1856 = vxor.u32 %v1852, 2147483648
  %v1857 = vmul.f32 %v1856, 1.442695
  %v1858 = vpow.pop %v1857
  %v1859 = vadd.f32 %v1858, 1.0
  %v1860 = vrcp.pop %v1859
  %v1861 = vmul.f32 1.0, %v1860
  %v1862 = vxor.u32 %v1853, 2147483648
  %v1863 = vmul.f32 %v1862, 1.442695
  %v1864 = vpow.pop %v1863
  %v1865 = vadd.f32 %v1864, 1.0
  %v1866 = vrcp.pop %v1865
  %v1867 = vmul.f32 1.0, %v1866
  %v1868 = vtanh.pop %v1854
  %v1869 = vxor.u32 %v1855, 2147483648
  %v1870 = vmul.f32 %v1869, 1.442695
  %v1871 = vpow.pop %v1870
  %v1872 = vadd.f32 %v1871, 1.0
  %v1873 = vrcp.pop %v1872
  %v1874 = vmul.f32 1.0, %v1873
  %v1875 = vmul.f32 %v1867, %v1568
  %v1876 = vmul.f32 %v1861, %v1868
  %v1877 = vadd.f32 %v1875, %v1876
  %v1878 = vtanh.pop %v1877
  %v1879 = vmul.f32 %v1874, %v1878
  %v1880 = vpack.c.bf16 %v1879, %v1879
  %v1881 = vld [vmem:[%s7] sm:$0xf]
  %v1882 = vld [vmem:[%s7 + $0x4] sm:$0xf]
  %v1883 = vld [vmem:[%s7 + $0x8] sm:$0xf]
  %v1884 = vld [vmem:[%s7 + $0xc] sm:$0xf]
  %v1885 = vld [vmem:[%s7 + $0x10] sm:$0xf]
  %v1886 = vld [vmem:[%s7 + $0x14] sm:$0xf]
  %v1887 = vld [vmem:[%s7 + $0x18] sm:$0xf]
  %v1888 = vld [vmem:[%s7 + $0x1c] sm:$0xf]
  %v1889 = vld [vmem:[%s7 + $0x20] sm:$0xf]
  %v1890 = vld [vmem:[%s7 + $0x24] sm:$0xf]
  %v1891 = vld [vmem:[%s7 + $0x28] sm:$0xf]
  %v1892 = vld [vmem:[%s7 + $0x2c] sm:$0xf]
  %v1893 = vld [vmem:[%s7 + $0x30] sm:$0xf]
  %v1894 = vld [vmem:[%s7 + $0x34] sm:$0xf]
  %v1895 = vld [vmem:[%s7 + $0x38] sm:$0xf]
  %v1896 = vld [vmem:[%s7 + $0x3c] sm:$0xf]
  %v1898 = vlaneseq
  %v1899 = vshrl.u32 %v1898, 7
  %v1900 = vsub.s32 0, %v1899
  %v1901 = vrot.slane %v1571, %v1900
  %v1919 = vunpack.c.l.b16 %v1881
  %v1920 = vunpack.c.l.b16 %v1882
  %v1921 = vunpack.c.l.b16 %v1883
  %v1922 = vunpack.c.l.b16 %v1884
  %v1923 = vunpack.c.l.b16 %v1885
  %v1924 = vunpack.c.l.b16 %v1886
  %v1925 = vunpack.c.l.b16 %v1887
  %v1926 = vunpack.c.l.b16 %v1888
  %v1927 = vunpack.c.l.b16 %v1889
  %v1928 = vunpack.c.l.b16 %v1890
  %v1929 = vunpack.c.l.b16 %v1891
  %v1930 = vunpack.c.l.b16 %v1892
  %v1931 = vunpack.c.l.b16 %v1893
  %v1932 = vunpack.c.l.b16 %v1894
  %v1933 = vunpack.c.l.b16 %v1895
  %v1934 = vunpack.c.l.b16 %v1896
  %v1935 = vpack.c.b16 %v1920, %v1919
  %v1936 = vpack.c.b16 %v1922, %v1921
  %v1937 = vpack.c.b16 %v1924, %v1923
  %v1938 = vpack.c.b16 %v1926, %v1925
  %v1939 = vpack.c.b16 %v1928, %v1927
  %v1940 = vpack.c.b16 %v1930, %v1929
  %v1941 = vpack.c.b16 %v1932, %v1931
  %v1942 = vpack.c.b16 %v1934, %v1933
  %1951 = vmatprep.subr.bf16.mxu0 0
  %1952 = vmatpush1.bf16.msra.mxu0 %v1935
  %1953 = vmatprep.subr.bf16.mxu0 0
  %1954 = vmatpush1.bf16.msra.mxu0 %v1936
  %1955 = vmatprep.subr.bf16.mxu0 0
  %1956 = vmatpush1.bf16.msra.mxu0 %v1937
  %1957 = vmatprep.subr.bf16.mxu0 0
  %1958 = vmatpush1.bf16.msra.mxu0 %v1938
  %1959 = vmatprep.subr.bf16.mxu0 0
  %1960 = vmatpush1.bf16.msra.mxu0 %v1939
  %1961 = vmatprep.subr.bf16.mxu0 0
  %1962 = vmatpush1.bf16.msra.mxu0 %v1940
  %1963 = vmatprep.subr.bf16.mxu0 0
  %1964 = vmatpush1.bf16.msra.mxu0 %v1941
  %1965 = vmatprep.subr.bf16.mxu0 0
  %1966 = vmatpush1.bf16.msra.mxu0 %v1942
  %1967 = vmatprep.subr.bf16.mxu0 0
  %1968 = vmatpush1.bf16.msra.mxu0 0
  %1969 = vmatprep.subr.bf16.mxu0 0
  %1970 = vmatpush1.bf16.msra.mxu0 0
  %1971 = vmatprep.subr.bf16.mxu0 0
  %1972 = vmatpush1.bf16.msra.mxu0 0
  %1973 = vmatprep.subr.bf16.mxu0 0
  %1974 = vmatpush1.bf16.msra.mxu0 0
  %1975 = vmatprep.subr.bf16.mxu0 0
  %1976 = vmatpush1.bf16.msra.mxu0 0
  %1977 = vmatprep.subr.bf16.mxu0 0
  %1978 = vmatpush1.bf16.msra.mxu0 0
  %1979 = vmatprep.subr.bf16.mxu0 0
  %1980 = vmatpush1.bf16.msra.mxu0 0
  %1981 = vmatprep.subr.bf16.mxu0 0
  %1982 = vmatpush1.bf16.msra.mxu0 0
  %1983 = vmatprep.mubr.bf16.mxu0 0
  %1984 = vmatmul.mubr.bf16.gmra.mrb[0].mxu0 %v1880
  %v1985 = vpop.f32.mrb[0].mxu0
  %v1986 = vadd.f32 %v1901, %v1985
  %v1987 = vpop.f32.mrb[0].mxu0
  %v1988 = vpop.f32.mrb[0].mxu0
  %v1989 = vpop.f32.mrb[0].mxu0
  %1990 = vdwg.mxu0
  %v1991 = vmax.f32 %v1986, 0.0
  %v1992 = vpack.c.bf16 %v1991, %v1991
  %v1993 = vld [vmem:[%s9] sm:$0xff]
  %v1994 = vld [vmem:[%s9 + $0x8] sm:$0xff]
  %v1995 = vld [vmem:[%s9 + $0x10] sm:$0xff]
  %v1996 = vld [vmem:[%s9 + $0x18] sm:$0xff]
  %v1997 = vld [vmem:[%s9 + $0x20] sm:$0xff]
  %v1998 = vld [vmem:[%s9 + $0x28] sm:$0xff]
  %v1999 = vld [vmem:[%s9 + $0x30] sm:$0xff]
  %v2000 = vld [vmem:[%s9 + $0x38] sm:$0xff]
  %v2001 = vld [vmem:[%s9 + $0x40] sm:$0xff]
  %v2002 = vld [vmem:[%s9 + $0x48] sm:$0xff]
  %v2003 = vld [vmem:[%s9 + $0x50] sm:$0xff]
  %v2004 = vld [vmem:[%s9 + $0x58] sm:$0xff]
  %v2005 = vld [vmem:[%s9 + $0x60] sm:$0xff]
  %v2006 = vld [vmem:[%s9 + $0x68] sm:$0xff]
  %v2007 = vld [vmem:[%s9 + $0x70] sm:$0xff]
  %v2008 = vld [vmem:[%s9 + $0x78] sm:$0xff]
  %v2010 = vlaneseq
  %v2011 = vshrl.u32 %v2010, 7
  %v2012 = vsub.s32 0, %v2011
  %v2013 = vrot.slane %v1572, %v2012
  %v2014 = vlaneseq
  %v2015 = vshrl.u32 %v2014, 7
  %v2016 = vsub.s32 1, %v2015
  %v2017 = vrot.slane %v1572, %v2016
  %v2036 = vunpack.c.l.b16 %v1993
  %v2037 = vunpack.c.h.b16 %v1993
  %v2038 = vunpack.c.l.b16 %v1994
  %v2039 = vunpack.c.h.b16 %v1994
  %v2040 = vunpack.c.l.b16 %v1995
  %v2041 = vunpack.c.h.b16 %v1995
  %v2042 = vunpack.c.l.b16 %v1996
  %v2043 = vunpack.c.h.b16 %v1996
  %v2044 = vunpack.c.l.b16 %v1997
  %v2045 = vunpack.c.h.b16 %v1997
  %v2046 = vunpack.c.l.b16 %v1998
  %v2047 = vunpack.c.h.b16 %v1998
  %v2048 = vunpack.c.l.b16 %v1999
  %v2049 = vunpack.c.h.b16 %v1999
  %v2050 = vunpack.c.l.b16 %v2000
  %v2051 = vunpack.c.h.b16 %v2000
  %v2052 = vunpack.c.l.b16 %v2001
  %v2053 = vunpack.c.h.b16 %v2001
  %v2054 = vunpack.c.l.b16 %v2002
  %v2055 = vunpack.c.h.b16 %v2002
  %v2056 = vunpack.c.l.b16 %v2003
  %v2057 = vunpack.c.h.b16 %v2003
  %v2058 = vunpack.c.l.b16 %v2004
  %v2059 = vunpack.c.h.b16 %v2004
  %v2060 = vunpack.c.l.b16 %v2005
  %v2061 = vunpack.c.h.b16 %v2005
  %v2062 = vunpack.c.l.b16 %v2006
  %v2063 = vunpack.c.h.b16 %v2006
  %v2064 = vunpack.c.l.b16 %v2007
  %v2065 = vunpack.c.h.b16 %v2007
  %v2066 = vunpack.c.l.b16 %v2008
  %v2067 = vunpack.c.h.b16 %v2008
  %v2068 = vpack.c.b16 %v2038, %v2036
  %v2069 = vpack.c.b16 %v2039, %v2037
  %v2070 = vpack.c.b16 %v2042, %v2040
  %v2071 = vpack.c.b16 %v2043, %v2041
  %v2072 = vpack.c.b16 %v2046, %v2044
  %v2073 = vpack.c.b16 %v2047, %v2045
  %v2074 = vpack.c.b16 %v2050, %v2048
  %v2075 = vpack.c.b16 %v2051, %v2049
  %v2076 = vpack.c.b16 %v2054, %v2052
  %v2077 = vpack.c.b16 %v2055, %v2053
  %v2078 = vpack.c.b16 %v2058, %v2056
  %v2079 = vpack.c.b16 %v2059, %v2057
  %v2080 = vpack.c.b16 %v2062, %v2060
  %v2081 = vpack.c.b16 %v2063, %v2061
  %v2082 = vpack.c.b16 %v2066, %v2064
  %v2083 = vpack.c.b16 %v2067, %v2065
  %2100 = vmatprep.subr.bf16.mxu0 %v2069
  %2101 = vmatpush1.bf16.msra.mxu0 %v2068
  %2102 = vmatprep.subr.bf16.mxu0 %v2071
  %2103 = vmatpush1.bf16.msra.mxu0 %v2070
  %2104 = vmatprep.subr.bf16.mxu0 %v2073
  %2105 = vmatpush1.bf16.msra.mxu0 %v2072
  %2106 = vmatprep.subr.bf16.mxu0 %v2075
  %2107 = vmatpush1.bf16.msra.mxu0 %v2074
  %2108 = vmatprep.subr.bf16.mxu0 %v2077
  %2109 = vmatpush1.bf16.msra.mxu0 %v2076
  %2110 = vmatprep.subr.bf16.mxu0 %v2079
  %2111 = vmatpush1.bf16.msra.mxu0 %v2078
  %2112 = vmatprep.subr.bf16.mxu0 %v2081
  %2113 = vmatpush1.bf16.msra.mxu0 %v2080
  %2114 = vmatprep.subr.bf16.mxu0 %v2083
  %2115 = vmatpush1.bf16.msra.mxu0 %v2082
  %2116 = vmatprep.subr.bf16.mxu0 0
  %2117 = vmatpush1.bf16.msra.mxu0 0
  %2118 = vmatprep.subr.bf16.mxu0 0
  %2119 = vmatpush1.bf16.msra.mxu0 0
  %2120 = vmatprep.subr.bf16.mxu0 0
  %2121 = vmatpush1.bf16.msra.mxu0 0
  %2122 = vmatprep.subr.bf16.mxu0 0
  %2123 = vmatpush1.bf16.msra.mxu0 0
  %2124 = vmatprep.subr.bf16.mxu0 0
  %2125 = vmatpush1.bf16.msra.mxu0 0
  %2126 = vmatprep.subr.bf16.mxu0 0
  %2127 = vmatpush1.bf16.msra.mxu0 0
  %2128 = vmatprep.subr.bf16.mxu0 0
  %2129 = vmatpush1.bf16.msra.mxu0 0
  %2130 = vmatprep.subr.bf16.mxu0 0
  %2131 = vmatpush1.bf16.msra.mxu0 0
  %2132 = vmatprep.mubr.bf16.mxu0 0
  %2133 = vmatmul.mubr.bf16.gmra.mrb[0].mxu0 %v1992
  %v2134 = vpop.f32.mrb[0].mxu0
  %v2135 = vadd.f32 %v2013, %v2134
  %v2136 = vpop.f32.mrb[0].mxu0
  %v2137 = vadd.f32 %v2017, %v2136
  %v2138 = vpop.f32.mrb[0].mxu0
  %v2139 = vpop.f32.mrb[0].mxu0
  %2140 = vdwg.mxu0
  %2141 = vst [vmem:[%s11] sm:$0xff] %v2135
  %2142 = vst [vmem:[%s11 + $0x8] sm:$0xff] %v2137
  %v2143 = vld [vmem:[#allocation3 + $0x20] sm:$0xff]
  %v2144 = vld [vmem:[#allocation3 + $0x28] sm:$0xff]
  %v2145 = vld [vmem:[#allocation3 + $0x30] sm:$0xff]
  %v2146 = vld [vmem:[#allocation3 + $0x38] sm:$0xff]
  %v2147 = vld [vmem:[%s5] sm:$0xff]
  %v2148 = vld [vmem:[%s5 + $0x8] sm:$0xff]
  %v2149 = vld [vmem:[%s5 + $0x10] sm:$0xff]
  %v2150 = vld [vmem:[%s5 + $0x18] sm:$0xff]
  %v2151 = vld [vmem:[%s5 + $0x20] sm:$0xff]
  %v2152 = vld [vmem:[%s5 + $0x28] sm:$0xff]
  %v2153 = vld [vmem:[%s5 + $0x30] sm:$0xff]
  %v2154 = vld [vmem:[%s5 + $0x38] sm:$0xff]
  %v2155 = vld [vmem:[%s5 + $0x40] sm:$0xff]
  %v2156 = vld [vmem:[%s5 + $0x48] sm:$0xff]
  %v2157 = vld [vmem:[%s5 + $0x50] sm:$0xff]
  %v2158 = vld [vmem:[%s5 + $0x58] sm:$0xff]
  %v2159 = vld [vmem:[%s5 + $0x60] sm:$0xff]
  %v2160 = vld [vmem:[%s5 + $0x68] sm:$0xff]
  %v2161 = vld [vmem:[%s5 + $0x70] sm:$0xff]
  %v2162 = vld [vmem:[%s5 + $0x78] sm:$0xff]
  %v2163 = vld [vmem:[%s5 + $0x80] sm:$0xff]
  %v2164 = vld [vmem:[%s5 + $0x88] sm:$0xff]
  %v2165 = vld [vmem:[%s5 + $0x90] sm:$0xff]
  %v2166 = vld [vmem:[%s5 + $0x98] sm:$0xff]
  %v2167 = vld [vmem:[%s5 + $0xa0] sm:$0xff]
  %v2168 = vld [vmem:[%s5 + $0xa8] sm:$0xff]
  %v2169 = vld [vmem:[%s5 + $0xb0] sm:$0xff]
  %v2170 = vld [vmem:[%s5 + $0xb8] sm:$0xff]
  %v2171 = vld [vmem:[%s5 + $0xc0] sm:$0xff]
  %v2172 = vld [vmem:[%s5 + $0xc8] sm:$0xff]
  %v2173 = vld [vmem:[%s5 + $0xd0] sm:$0xff]
  %v2174 = vld [vmem:[%s5 + $0xd8] sm:$0xff]
  %v2175 = vld [vmem:[%s5 + $0xe0] sm:$0xff]
  %v2176 = vld [vmem:[%s5 + $0xe8] sm:$0xff]
  %v2177 = vld [vmem:[%s5 + $0xf0] sm:$0xff]
  %v2178 = vld [vmem:[%s5 + $0xf8] sm:$0xff]
  %v2211 = vunpack.c.l.b16 %v2147
  %v2212 = vunpack.c.h.b16 %v2147
  %v2213 = vunpack.c.l.b16 %v2148
  %v2214 = vunpack.c.h.b16 %v2148
  %v2215 = vunpack.c.l.b16 %v2149
  %v2216 = vunpack.c.h.b16 %v2149
  %v2217 = vunpack.c.l.b16 %v2150
  %v2218 = vunpack.c.h.b16 %v2150
  %v2219 = vunpack.c.l.b16 %v2151
  %v2220 = vunpack.c.h.b16 %v2151
  %v2221 = vunpack.c.l.b16 %v2152
  %v2222 = vunpack.c.h.b16 %v2152
  %v2223 = vunpack.c.l.b16 %v2153
  %v2224 = vunpack.c.h.b16 %v2153
  %v2225 = vunpack.c.l.b16 %v2154
  %v2226 = vunpack.c.h.b16 %v2154
  %v2227 = vunpack.c.l.b16 %v2155
  %v2228 = vunpack.c.h.b16 %v2155
  %v2229 = vunpack.c.l.b16 %v2156
  %v2230 = vunpack.c.h.b16 %v2156
  %v2231 = vunpack.c.l.b16 %v2157
  %v2232 = vunpack.c.h.b16 %v2157
  %v2233 = vunpack.c.l.b16 %v2158
  %v2234 = vunpack.c.h.b16 %v2158
  %v2235 = vunpack.c.l.b16 %v2159
  %v2236 = vunpack.c.h.b16 %v2159
  %v2237 = vunpack.c.l.b16 %v2160
  %v2238 = vunpack.c.h.b16 %v2160
  %v2239 = vunpack.c.l.b16 %v2161
  %v2240 = vunpack.c.h.b16 %v2161
  %v2241 = vunpack.c.l.b16 %v2162
  %v2242 = vunpack.c.h.b16 %v2162
  %v2243 = vunpack.c.l.b16 %v2163
  %v2244 = vunpack.c.h.b16 %v2163
  %v2245 = vunpack.c.l.b16 %v2164
  %v2246 = vunpack.c.h.b16 %v2164
  %v2247 = vunpack.c.l.b16 %v2165
  %v2248 = vunpack.c.h.b16 %v2165
  %v2249 = vunpack.c.l.b16 %v2166
  %v2250 = vunpack.c.h.b16 %v2166
  %v2251 = vunpack.c.l.b16 %v2167
  %v2252 = vunpack.c.h.b16 %v2167
  %v2253 = vunpack.c.l.b16 %v2168
  %v2254 = vunpack.c.h.b16 %v2168
  %v2255 = vunpack.c.l.b16 %v2169
  %v2256 = vunpack.c.h.b16 %v2169
  %v2257 = vunpack.c.l.b16 %v2170
  %v2258 = vunpack.c.h.b16 %v2170
  %v2259 = vunpack.c.l.b16 %v2171
  %v2260 = vunpack.c.h.b16 %v2171
  %v2261 = vunpack.c.l.b16 %v2172
  %v2262 = vunpack.c.h.b16 %v2172
  %v2263 = vunpack.c.l.b16 %v2173
  %v2264 = vunpack.c.h.b16 %v2173
  %v2265 = vunpack.c.l.b16 %v2174
  %v2266 = vunpack.c.h.b16 %v2174
  %v2267 = vunpack.c.l.b16 %v2175
  %v2268 = vunpack.c.h.b16 %v2175
  %v2269 = vunpack.c.l.b16 %v2176
  %v2270 = vunpack.c.h.b16 %v2176
  %v2271 = vunpack.c.l.b16 %v2177
  %v2272 = vunpack.c.h.b16 %v2177
  %v2273 = vunpack.c.l.b16 %v2178
  %v2274 = vunpack.c.h.b16 %v2178
  %v2275 = vpack.c.b16 %v2215, %v2211
  %v2276 = vpack.c.b16 %v2216, %v2212
  %v2277 = vpack.c.b16 %v2217, %v2213
  %v2278 = vpack.c.b16 %v2218, %v2214
  %v2279 = vpack.c.b16 %v2223, %v2219
  %v2280 = vpack.c.b16 %v2224, %v2220
  %v2281 = vpack.c.b16 %v2225, %v2221
  %v2282 = vpack.c.b16 %v2226, %v2222
  %v2283 = vpack.c.b16 %v2231, %v2227
  %v2284 = vpack.c.b16 %v2232, %v2228
  %v2285 = vpack.c.b16 %v2233, %v2229
  %v2286 = vpack.c.b16 %v2234, %v2230
  %v2287 = vpack.c.b16 %v2239, %v2235
  %v2288 = vpack.c.b16 %v2240, %v2236
  %v2289 = vpack.c.b16 %v2241, %v2237
  %v2290 = vpack.c.b16 %v2242, %v2238
  %v2291 = vpack.c.b16 %v2247, %v2243
  %v2292 = vpack.c.b16 %v2248, %v2244
  %v2293 = vpack.c.b16 %v2249, %v2245
  %v2294 = vpack.c.b16 %v2250, %v2246
  %v2295 = vpack.c.b16 %v2255, %v2251
  %v2296 = vpack.c.b16 %v2256, %v2252
  %v2297 = vpack.c.b16 %v2257, %v2253
  %v2298 = vpack.c.b16 %v2258, %v2254
  %v2299 = vpack.c.b16 %v2263, %v2259
  %v2300 = vpack.c.b16 %v2264, %v2260
  %v2301 = vpack.c.b16 %v2265, %v2261
  %v2302 = vpack.c.b16 %v2266, %v2262
  %v2303 = vpack.c.b16 %v2271, %v2267
  %v2304 = vpack.c.b16 %v2272, %v2268
  %v2305 = vpack.c.b16 %v2273, %v2269
  %v2306 = vpack.c.b16 %v2274, %v2270
  %2339 = vmatprep.subr.bf16.mxu0 %v2276
  %2340 = vmatpush1.bf16.msra.mxu0 %v2275
  %2341 = vmatprep.subr.bf16.mxu0 %v2280
  %2342 = vmatpush1.bf16.msra.mxu0 %v2279
  %2343 = vmatprep.subr.bf16.mxu0 %v2284
  %2344 = vmatpush1.bf16.msra.mxu0 %v2283
  %2345 = vmatprep.subr.bf16.mxu0 %v2288
  %2346 = vmatpush1.bf16.msra.mxu0 %v2287
  %2347 = vmatprep.subr.bf16.mxu0 %v2292
  %2348 = vmatpush1.bf16.msra.mxu0 %v2291
  %2349 = vmatprep.subr.bf16.mxu0 %v2296
  %2350 = vmatpush1.bf16.msra.mxu0 %v2295
  %2351 = vmatprep.subr.bf16.mxu0 %v2300
  %2352 = vmatpush1.bf16.msra.mxu0 %v2299
  %2353 = vmatprep.subr.bf16.mxu0 %v2304
  %2354 = vmatpush1.bf16.msra.mxu0 %v2303
  %2355 = vmatprep.subr.bf16.mxu0 0
  %2356 = vmatpush1.bf16.msra.mxu0 0
  %2357 = vmatprep.subr.bf16.mxu0 0
  %2358 = vmatpush1.bf16.msra.mxu0 0
  %2359 = vmatprep.subr.bf16.mxu0 0
  %2360 = vmatpush1.bf16.msra.mxu0 0
  %2361 = vmatprep.subr.bf16.mxu0 0
  %2362 = vmatpush1.bf16.msra.mxu0 0
  %2363 = vmatprep.subr.bf16.mxu0 0
  %2364 = vmatpush1.bf16.msra.mxu0 0
  %2365 = vmatprep.subr.bf16.mxu0 0
  %2366 = vmatpush1.bf16.msra.mxu0 0
  %2367 = vmatprep.subr.bf16.mxu0 0
  %2368 = vmatpush1.bf16.msra.mxu0 0
  %2369 = vmatprep.subr.bf16.mxu0 0
  %2370 = vmatpush1.bf16.msra.mxu0 0
  %2371 = vmatprep.mubr.bf16.mxu0 0
  %2372 = vmatmul.mubr.bf16.gmra.mrb[0].mxu0 %v1880
  %v2373 = vpop.f32.mrb[0].mxu0
  %v2374 = vadd.f32 0.0, %v2373
  %v2375 = vpop.f32.mrb[0].mxu0
  %v2376 = vadd.f32 0.0, %v2375
  %v2377 = vpop.f32.mrb[0].mxu0
  %v2378 = vpop.f32.mrb[0].mxu0
  %2379 = vdwg.mxu0
  %2380 = vmatprep.subr.bf16.mxu0 %v2278
  %2381 = vmatpush1.bf16.msra.mxu0 %v2277
  %2382 = vmatprep.subr.bf16.mxu0 %v2282
  %2383 = vmatpush1.bf16.msra.mxu0 %v2281
  %2384 = vmatprep.subr.bf16.mxu0 %v2286
  %2385 = vmatpush1.bf16.msra.mxu0 %v2285
  %2386 = vmatprep.subr.bf16.mxu0 %v2290
  %2387 = vmatpush1.bf16.msra.mxu0 %v2289
  %2388 = vmatprep.subr.bf16.mxu0 %v2294
  %2389 = vmatpush1.bf16.msra.mxu0 %v2293
  %2390 = vmatprep.subr.bf16.mxu0 %v2298
  %2391 = vmatpush1.bf16.msra.mxu0 %v2297
  %2392 = vmatprep.subr.bf16.mxu0 %v2302
  %2393 = vmatpush1.bf16.msra.mxu0 %v2301
  %2394 = vmatprep.subr.bf16.mxu0 %v2306
  %2395 = vmatpush1.bf16.msra.mxu0 %v2305
  %2396 = vmatprep.subr.bf16.mxu0 0
  %2397 = vmatpush1.bf16.msra.mxu0 0
  %2398 = vmatprep.subr.bf16.mxu0 0
  %2399 = vmatpush1.bf16.msra.mxu0 0
  %2400 = vmatprep.subr.bf16.mxu0 0
  %2401 = vmatpush1.bf16.msra.mxu0 0
  %2402 = vmatprep.subr.bf16.mxu0 0
  %2403 = vmatpush1.bf16.msra.mxu0 0
  %2404 = vmatprep.subr.bf16.mxu0 0
  %2405 = vmatpush1.bf16.msra.mxu0 0
  %2406 = vmatprep.subr.bf16.mxu0 0
  %2407 = vmatpush1.bf16.msra.mxu0 0
  %2408 = vmatprep.subr.bf16.mxu0 0
  %2409 = vmatpush1.bf16.msra.mxu0 0
  %2410 = vmatprep.subr.bf16.mxu0 0
  %2411 = vmatpush1.bf16.msra.mxu0 0
  %2412 = vmatprep.mubr.bf16.mxu0 0
  %2413 = vmatmul.mubr.bf16.gmra.mrb[0].mxu0 %v1880
  %v2414 = vpop.f32.mrb[0].mxu0
  %v2415 = vadd.f32 0.0, %v2414
  %v2416 = vpop.f32.mrb[0].mxu0
  %v2417 = vadd.f32 0.0, %v2416
  %v2418 = vpop.f32.mrb[0].mxu0
  %v2419 = vpop.f32.mrb[0].mxu0
  %2420 = vdwg.mxu0
  %v2421 = vadd.f32 %v2143, %v2374
  %v2422 = vadd.f32 %v2144, %v2376
  %v2423 = vadd.f32 %v2145, %v2415
  %v2424 = vadd.f32 %v2146, %v2417
  %v2425 = vxor.u32 %v2421, 2147483648
  %v2426 = vmul.f32 %v2425, 1.442695
  %v2427 = vpow.pop %v2426
  %v2428 = vadd.f32 %v2427, 1.0
  %v2429 = vrcp.pop %v2428
  %v2430 = vmul.f32 1.0, %v2429
  %v2431 = vxor.u32 %v2422, 2147483648
  %v2432 = vmul.f32 %v2431, 1.442695
  %v2433 = vpow.pop %v2432
  %v2434 = vadd.f32 %v2433, 1.0
  %v2435 = vrcp.pop %v2434
  %v2436 = vmul.f32 1.0, %v2435
  %v2437 = vtanh.pop %v2423
  %v2438 = vxor.u32 %v2424, 2147483648
  %v2439 = vmul.f32 %v2438, 1.442695
  %v2440 = vpow.pop %v2439
  %v2441 = vadd.f32 %v2440, 1.0
  %v2442 = vrcp.pop %v2441
  %v2443 = vmul.f32 1.0, %v2442
  %v2444 = vmul.f32 %v2436, %v1877
  %v2445 = vmul.f32 %v2430, %v2437
  %v2446 = vadd.f32 %v2444, %v2445
  %v2447 = vtanh.pop %v2446
  %v2448 = vmul.f32 %v2443, %v2447
  %v2449 = vpack.c.bf16 %v2448, %v2448
  %v2450 = vld [vmem:[%s7] sm:$0xf]
  %v2451 = vld [vmem:[%s7 + $0x4] sm:$0xf]
  %v2452 = vld [vmem:[%s7 + $0x8] sm:$0xf]
  %v2453 = vld [vmem:[%s7 + $0xc] sm:$0xf]
  %v2454 = vld [vmem:[%s7 + $0x10] sm:$0xf]
  %v2455 = vld [vmem:[%s7 + $0x14] sm:$0xf]
  %v2456 = vld [vmem:[%s7 + $0x18] sm:$0xf]
  %v2457 = vld [vmem:[%s7 + $0x1c] sm:$0xf]
  %v2458 = vld [vmem:[%s7 + $0x20] sm:$0xf]
  %v2459 = vld [vmem:[%s7 + $0x24] sm:$0xf]
  %v2460 = vld [vmem:[%s7 + $0x28] sm:$0xf]
  %v2461 = vld [vmem:[%s7 + $0x2c] sm:$0xf]
  %v2462 = vld [vmem:[%s7 + $0x30] sm:$0xf]
  %v2463 = vld [vmem:[%s7 + $0x34] sm:$0xf]
  %v2464 = vld [vmem:[%s7 + $0x38] sm:$0xf]
  %v2465 = vld [vmem:[%s7 + $0x3c] sm:$0xf]
  %v2482 = vunpack.c.l.b16 %v2450
  %v2483 = vunpack.c.l.b16 %v2451
  %v2484 = vunpack.c.l.b16 %v2452
  %v2485 = vunpack.c.l.b16 %v2453
  %v2486 = vunpack.c.l.b16 %v2454
  %v2487 = vunpack.c.l.b16 %v2455
  %v2488 = vunpack.c.l.b16 %v2456
  %v2489 = vunpack.c.l.b16 %v2457
  %v2490 = vunpack.c.l.b16 %v2458
  %v2491 = vunpack.c.l.b16 %v2459
  %v2492 = vunpack.c.l.b16 %v2460
  %v2493 = vunpack.c.l.b16 %v2461
  %v2494 = vunpack.c.l.b16 %v2462
  %v2495 = vunpack.c.l.b16 %v2463
  %v2496 = vunpack.c.l.b16 %v2464
  %v2497 = vunpack.c.l.b16 %v2465
  %v2498 = vpack.c.b16 %v2483, %v2482
  %v2499 = vpack.c.b16 %v2485, %v2484
  %v2500 = vpack.c.b16 %v2487, %v2486
  %v2501 = vpack.c.b16 %v2489, %v2488
  %v2502 = vpack.c.b16 %v2491, %v2490
  %v2503 = vpack.c.b16 %v2493, %v2492
  %v2504 = vpack.c.b16 %v2495, %v2494
  %v2505 = vpack.c.b16 %v2497, %v2496
  %2514 = vmatprep.subr.bf16.mxu0 0
  %2515 = vmatpush1.bf16.msra.mxu0 %v2498
  %2516 = vmatprep.subr.bf16.mxu0 0
  %2517 = vmatpush1.bf16.msra.mxu0 %v2499
  %2518 = vmatprep.subr.bf16.mxu0 0
  %2519 = vmatpush1.bf16.msra.mxu0 %v2500
  %2520 = vmatprep.subr.bf16.mxu0 0
  %2521 = vmatpush1.bf16.msra.mxu0 %v2501
  %2522 = vmatprep.subr.bf16.mxu0 0
  %2523 = vmatpush1.bf16.msra.mxu0 %v2502
  %2524 = vmatprep.subr.bf16.mxu0 0
  %2525 = vmatpush1.bf16.msra.mxu0 %v2503
  %2526 = vmatprep.subr.bf16.mxu0 0
  %2527 = vmatpush1.bf16.msra.mxu0 %v2504
  %2528 = vmatprep.subr.bf16.mxu0 0
  %2529 = vmatpush1.bf16.msra.mxu0 %v2505
  %2530 = vmatprep.subr.bf16.mxu0 0
  %2531 = vmatpush1.bf16.msra.mxu0 0
  %2532 = vmatprep.subr.bf16.mxu0 0
  %2533 = vmatpush1.bf16.msra.mxu0 0
  %2534 = vmatprep.subr.bf16.mxu0 0
  %2535 = vmatpush1.bf16.msra.mxu0 0
  %2536 = vmatprep.subr.bf16.mxu0 0
  %2537 = vmatpush1.bf16.msra.mxu0 0
  %2538 = vmatprep.subr.bf16.mxu0 0
  %2539 = vmatpush1.bf16.msra.mxu0 0
  %2540 = vmatprep.subr.bf16.mxu0 0
  %2541 = vmatpush1.bf16.msra.mxu0 0
  %2542 = vmatprep.subr.bf16.mxu0 0
  %2543 = vmatpush1.bf16.msra.mxu0 0
  %2544 = vmatprep.subr.bf16.mxu0 0
  %2545 = vmatpush1.bf16.msra.mxu0 0
  %2546 = vmatprep.mubr.bf16.mxu0 0
  %2547 = vmatmul.mubr.bf16.gmra.mrb[0].mxu0 %v2449
  %v2548 = vpop.f32.mrb[0].mxu0
  %v2549 = vadd.f32 %v1901, %v2548
  %v2550 = vpop.f32.mrb[0].mxu0
  %v2551 = vpop.f32.mrb[0].mxu0
  %v2552 = vpop.f32.mrb[0].mxu0
  %2553 = vdwg.mxu0
  %v2554 = vmax.f32 %v2549, 0.0
  %v2555 = vpack.c.bf16 %v2554, %v2554
  %v2556 = vld [vmem:[%s9] sm:$0xff]
  %v2557 = vld [vmem:[%s9 + $0x8] sm:$0xff]
  %v2558 = vld [vmem:[%s9 + $0x10] sm:$0xff]
  %v2559 = vld [vmem:[%s9 + $0x18] sm:$0xff]
  %v2560 = vld [vmem:[%s9 + $0x20] sm:$0xff]
  %v2561 = vld [vmem:[%s9 + $0x28] sm:$0xff]
  %v2562 = vld [vmem:[%s9 + $0x30] sm:$0xff]
  %v2563 = vld [vmem:[%s9 + $0x38] sm:$0xff]
  %v2564 = vld [vmem:[%s9 + $0x40] sm:$0xff]
  %v2565 = vld [vmem:[%s9 + $0x48] sm:$0xff]
  %v2566 = vld [vmem:[%s9 + $0x50] sm:$0xff]
  %v2567 = vld [vmem:[%s9 + $0x58] sm:$0xff]
  %v2568 = vld [vmem:[%s9 + $0x60] sm:$0xff]
  %v2569 = vld [vmem:[%s9 + $0x68] sm:$0xff]
  %v2570 = vld [vmem:[%s9 + $0x70] sm:$0xff]
  %v2571 = vld [vmem:[%s9 + $0x78] sm:$0xff]
  %v2588 = vunpack.c.l.b16 %v2556
  %v2589 = vunpack.c.h.b16 %v2556
  %v2590 = vunpack.c.l.b16 %v2557
  %v2591 = vunpack.c.h.b16 %v2557
  %v2592 = vunpack.c.l.b16 %v2558
  %v2593 = vunpack.c.h.b16 %v2558
  %v2594 = vunpack.c.l.b16 %v2559
  %v2595 = vunpack.c.h.b16 %v2559
  %v2596 = vunpack.c.l.b16 %v2560
  %v2597 = vunpack.c.h.b16 %v2560
  %v2598 = vunpack.c.l.b16 %v2561
  %v2599 = vunpack.c.h.b16 %v2561
  %v2600 = vunpack.c.l.b16 %v2562
  %v2601 = vunpack.c.h.b16 %v2562
  %v2602 = vunpack.c.l.b16 %v2563
  %v2603 = vunpack.c.h.b16 %v2563
  %v2604 = vunpack.c.l.b16 %v2564
  %v2605 = vunpack.c.h.b16 %v2564
  %v2606 = vunpack.c.l.b16 %v2565
  %v2607 = vunpack.c.h.b16 %v2565
  %v2608 = vunpack.c.l.b16 %v2566
  %v2609 = vunpack.c.h.b16 %v2566
  %v2610 = vunpack.c.l.b16 %v2567
  %v2611 = vunpack.c.h.b16 %v2567
  %v2612 = vunpack.c.l.b16 %v2568
  %v2613 = vunpack.c.h.b16 %v2568
  %v2614 = vunpack.c.l.b16 %v2569
  %v2615 = vunpack.c.h.b16 %v2569
  %v2616 = vunpack.c.l.b16 %v2570
  %v2617 = vunpack.c.h.b16 %v2570
  %v2618 = vunpack.c.l.b16 %v2571
  %v2619 = vunpack.c.h.b16 %v2571
  %v2620 = vpack.c.b16 %v2590, %v2588
  %v2621 = vpack.c.b16 %v2591, %v2589
  %v2622 = vpack.c.b16 %v2594, %v2592
  %v2623 = vpack.c.b16 %v2595, %v2593
  %v2624 = vpack.c.b16 %v2598, %v2596
  %v2625 = vpack.c.b16 %v2599, %v2597
  %v2626 = vpack.c.b16 %v2602, %v2600
  %v2627 = vpack.c.b16 %v2603, %v2601
  %v2628 = vpack.c.b16 %v2606, %v2604
  %v2629 = vpack.c.b16 %v2607, %v2605
  %v2630 = vpack.c.b16 %v2610, %v2608
  %v2631 = vpack.c.b16 %v2611, %v2609
  %v2632 = vpack.c.b16 %v2614, %v2612
  %v2633 = vpack.c.b16 %v2615, %v2613
  %v2634 = vpack.c.b16 %v2618, %v2616
  %v2635 = vpack.c.b16 %v2619, %v2617
  %2652 = vmatprep.subr.bf16.mxu0 %v2621
  %2653 = vmatpush1.bf16.msra.mxu0 %v2620
  %2654 = vmatprep.subr.bf16.mxu0 %v2623
  %2655 = vmatpush1.bf16.msra.mxu0 %v2622
  %2656 = vmatprep.subr.bf16.mxu0 %v2625
  %2657 = vmatpush1.bf16.msra.mxu0 %v2624
  %2658 = vmatprep.subr.bf16.mxu0 %v2627
  %2659 = vmatpush1.bf16.msra.mxu0 %v2626
  %2660 = vmatprep.subr.bf16.mxu0 %v2629
  %2661 = vmatpush1.bf16.msra.mxu0 %v2628
  %2662 = vmatprep.subr.bf16.mxu0 %v2631
  %2663 = vmatpush1.bf16.msra.mxu0 %v2630
  %2664 = vmatprep.subr.bf16.mxu0 %v2633
  %2665 = vmatpush1.bf16.msra.mxu0 %v2632
  %2666 = vmatprep.subr.bf16.mxu0 %v2635
  %2667 = vmatpush1.bf16.msra.mxu0 %v2634
  %2668 = vmatprep.subr.bf16.mxu0 0
  %2669 = vmatpush1.bf16.msra.mxu0 0
  %2670 = vmatprep.subr.bf16.mxu0 0
  %2671 = vmatpush1.bf16.msra.mxu0 0
  %2672 = vmatprep.subr.bf16.mxu0 0
  %2673 = vmatpush1.bf16.msra.mxu0 0
  %2674 = vmatprep.subr.bf16.mxu0 0
  %2675 = vmatpush1.bf16.msra.mxu0 0
  %2676 = vmatprep.subr.bf16.mxu0 0
  %2677 = vmatpush1.bf16.msra.mxu0 0
  %2678 = vmatprep.subr.bf16.mxu0 0
  %2679 = vmatpush1.bf16.msra.mxu0 0
  %2680 = vmatprep.subr.bf16.mxu0 0
  %2681 = vmatpush1.bf16.msra.mxu0 0
  %2682 = vmatprep.subr.bf16.mxu0 0
  %2683 = vmatpush1.bf16.msra.mxu0 0
  %2684 = vmatprep.mubr.bf16.mxu0 0
  %2685 = vmatmul.mubr.bf16.gmra.mrb[0].mxu0 %v2555
  %v2686 = vpop.f32.mrb[0].mxu0
  %v2687 = vadd.f32 %v2013, %v2686
  %v2688 = vpop.f32.mrb[0].mxu0
  %v2689 = vadd.f32 %v2017, %v2688
  %v2690 = vpop.f32.mrb[0].mxu0
  %v2691 = vpop.f32.mrb[0].mxu0
  %2692 = vdwg.mxu0
  %s2693 = scalar_lea.vmem %s11, 16
  %2694 = vst [vmem:[%s2693] sm:$0xff] %v2687
  %2695 = vst [vmem:[%s2693 + $0x8] sm:$0xff] %v2689
  %v2696 = vld [vmem:[#allocation3 + $0x40] sm:$0xff]
  %v2697 = vld [vmem:[#allocation3 + $0x48] sm:$0xff]
  %v2698 = vld [vmem:[#allocation3 + $0x50] sm:$0xff]
  %v2699 = vld [vmem:[#allocation3 + $0x58] sm:$0xff]
  %v2700 = vld [vmem:[%s5] sm:$0xff]
  %v2701 = vld [vmem:[%s5 + $0x8] sm:$0xff]
  %v2702 = vld [vmem:[%s5 + $0x10] sm:$0xff]
  %v2703 = vld [vmem:[%s5 + $0x18] sm:$0xff]
  %v2704 = vld [vmem:[%s5 + $0x20] sm:$0xff]
  %v2705 = vld [vmem:[%s5 + $0x28] sm:$0xff]
  %v2706 = vld [vmem:[%s5 + $0x30] sm:$0xff]
  %v2707 = vld [vmem:[%s5 + $0x38] sm:$0xff]
  %v2708 = vld [vmem:[%s5 + $0x40] sm:$0xff]
  %v2709 = vld [vmem:[%s5 + $0x48] sm:$0xff]
  %v2710 = vld [vmem:[%s5 + $0x50] sm:$0xff]
  %v2711 = vld [vmem:[%s5 + $0x58] sm:$0xff]
  %v2712 = vld [vmem:[%s5 + $0x60] sm:$0xff]
  %v2713 = vld [vmem:[%s5 + $0x68] sm:$0xff]
  %v2714 = vld [vmem:[%s5 + $0x70] sm:$0xff]
  %v2715 = vld [vmem:[%s5 + $0x78] sm:$0xff]
  %v2716 = vld [vmem:[%s5 + $0x80] sm:$0xff]
  %v2717 = vld [vmem:[%s5 + $0x88] sm:$0xff]
  %v2718 = vld [vmem:[%s5 + $0x90] sm:$0xff]
  %v2719 = vld [vmem:[%s5 + $0x98] sm:$0xff]
  %v2720 = vld [vmem:[%s5 + $0xa0] sm:$0xff]
  %v2721 = vld [vmem:[%s5 + $0xa8] sm:$0xff]
  %v2722 = vld [vmem:[%s5 + $0xb0] sm:$0xff]
  %v2723 = vld [vmem:[%s5 + $0xb8] sm:$0xff]
  %v2724 = vld [vmem:[%s5 + $0xc0] sm:$0xff]
  %v2725 = vld [vmem:[%s5 + $0xc8] sm:$0xff]
  %v2726 = vld [vmem:[%s5 + $0xd0] sm:$0xff]
  %v2727 = vld [vmem:[%s5 + $0xd8] sm:$0xff]
  %v2728 = vld [vmem:[%s5 + $0xe0] sm:$0xff]
  %v2729 = vld [vmem:[%s5 + $0xe8] sm:$0xff]
  %v2730 = vld [vmem:[%s5 + $0xf0] sm:$0xff]
  %v2731 = vld [vmem:[%s5 + $0xf8] sm:$0xff]
  %v2764 = vunpack.c.l.b16 %v2700
  %v2765 = vunpack.c.h.b16 %v2700
  %v2766 = vunpack.c.l.b16 %v2701
  %v2767 = vunpack.c.h.b16 %v2701
  %v2768 = vunpack.c.l.b16 %v2702
  %v2769 = vunpack.c.h.b16 %v2702
  %v2770 = vunpack.c.l.b16 %v2703
  %v2771 = vunpack.c.h.b16 %v2703
  %v2772 = vunpack.c.l.b16 %v2704
  %v2773 = vunpack.c.h.b16 %v2704
  %v2774 = vunpack.c.l.b16 %v2705
  %v2775 = vunpack.c.h.b16 %v2705
  %v2776 = vunpack.c.l.b16 %v2706
  %v2777 = vunpack.c.h.b16 %v2706
  %v2778 = vunpack.c.l.b16 %v2707
  %v2779 = vunpack.c.h.b16 %v2707
  %v2780 = vunpack.c.l.b16 %v2708
  %v2781 = vunpack.c.h.b16 %v2708
  %v2782 = vunpack.c.l.b16 %v2709
  %v2783 = vunpack.c.h.b16 %v2709
  %v2784 = vunpack.c.l.b16 %v2710
  %v2785 = vunpack.c.h.b16 %v2710
  %v2786 = vunpack.c.l.b16 %v2711
  %v2787 = vunpack.c.h.b16 %v2711
  %v2788 = vunpack.c.l.b16 %v2712
  %v2789 = vunpack.c.h.b16 %v2712
  %v2790 = vunpack.c.l.b16 %v2713
  %v2791 = vunpack.c.h.b16 %v2713
  %v2792 = vunpack.c.l.b16 %v2714
  %v2793 = vunpack.c.h.b16 %v2714
  %v2794 = vunpack.c.l.b16 %v2715
  %v2795 = vunpack.c.h.b16 %v2715
  %v2796 = vunpack.c.l.b16 %v2716
  %v2797 = vunpack.c.h.b16 %v2716
  %v2798 = vunpack.c.l.b16 %v2717
  %v2799 = vunpack.c.h.b16 %v2717
  %v2800 = vunpack.c.l.b16 %v2718
  %v2801 = vunpack.c.h.b16 %v2718
  %v2802 = vunpack.c.l.b16 %v2719
  %v2803 = vunpack.c.h.b16 %v2719
  %v2804 = vunpack.c.l.b16 %v2720
  %v2805 = vunpack.c.h.b16 %v2720
  %v2806 = vunpack.c.l.b16 %v2721
  %v2807 = vunpack.c.h.b16 %v2721
  %v2808 = vunpack.c.l.b16 %v2722
  %v2809 = vunpack.c.h.b16 %v2722
  %v2810 = vunpack.c.l.b16 %v2723
  %v2811 = vunpack.c.h.b16 %v2723
  %v2812 = vunpack.c.l.b16 %v2724
  %v2813 = vunpack.c.h.b16 %v2724
  %v2814 = vunpack.c.l.b16 %v2725
  %v2815 = vunpack.c.h.b16 %v2725
  %v2816 = vunpack.c.l.b16 %v2726
  %v2817 = vunpack.c.h.b16 %v2726
  %v2818 = vunpack.c.l.b16 %v2727
  %v2819 = vunpack.c.h.b16 %v2727
  %v2820 = vunpack.c.l.b16 %v2728
  %v2821 = vunpack.c.h.b16 %v2728
  %v2822 = vunpack.c.l.b16 %v2729
  %v2823 = vunpack.c.h.b16 %v2729
  %v2824 = vunpack.c.l.b16 %v2730
  %v2825 = vunpack.c.h.b16 %v2730
  %v2826 = vunpack.c.l.b16 %v2731
  %v2827 = vunpack.c.h.b16 %v2731
  %v2828 = vpack.c.b16 %v2768, %v2764
  %v2829 = vpack.c.b16 %v2769, %v2765
  %v2830 = vpack.c.b16 %v2770, %v2766
  %v2831 = vpack.c.b16 %v2771, %v2767
  %v2832 = vpack.c.b16 %v2776, %v2772
  %v2833 = vpack.c.b16 %v2777, %v2773
  %v2834 = vpack.c.b16 %v2778, %v2774
  %v2835 = vpack.c.b16 %v2779, %v2775
  %v2836 = vpack.c.b16 %v2784, %v2780
  %v2837 = vpack.c.b16 %v2785, %v2781
  %v2838 = vpack.c.b16 %v2786, %v2782
  %v2839 = vpack.c.b16 %v2787, %v2783
  %v2840 = vpack.c.b16 %v2792, %v2788
  %v2841 = vpack.c.b16 %v2793, %v2789
  %v2842 = vpack.c.b16 %v2794, %v2790
  %v2843 = vpack.c.b16 %v2795, %v2791
  %v2844 = vpack.c.b16 %v2800, %v2796
  %v2845 = vpack.c.b16 %v2801, %v2797
  %v2846 = vpack.c.b16 %v2802, %v2798
  %v2847 = vpack.c.b16 %v2803, %v2799
  %v2848 = vpack.c.b16 %v2808, %v2804
  %v2849 = vpack.c.b16 %v2809, %v2805
  %v2850 = vpack.c.b16 %v2810, %v2806
  %v2851 = vpack.c.b16 %v2811, %v2807
  %v2852 = vpack.c.b16 %v2816, %v2812
  %v2853 = vpack.c.b16 %v2817, %v2813
  %v2854 = vpack.c.b16 %v2818, %v2814
  %v2855 = vpack.c.b16 %v2819, %v2815
  %v2856 = vpack.c.b16 %v2824, %v2820
  %v2857 = vpack.c.b16 %v2825, %v2821
  %v2858 = vpack.c.b16 %v2826, %v2822
  %v2859 = vpack.c.b16 %v2827, %v2823
  %2892 = vmatprep.subr.bf16.mxu0 %v2829
  %2893 = vmatpush1.bf16.msra.mxu0 %v2828
  %2894 = vmatprep.subr.bf16.mxu0 %v2833
  %2895 = vmatpush1.bf16.msra.mxu0 %v2832
  %2896 = vmatprep.subr.bf16.mxu0 %v2837
  %2897 = vmatpush1.bf16.msra.mxu0 %v2836
  %2898 = vmatprep.subr.bf16.mxu0 %v2841
  %2899 = vmatpush1.bf16.msra.mxu0 %v2840
  %2900 = vmatprep.subr.bf16.mxu0 %v2845
  %2901 = vmatpush1.bf16.msra.mxu0 %v2844
  %2902 = vmatprep.subr.bf16.mxu0 %v2849
  %2903 = vmatpush1.bf16.msra.mxu0 %v2848
  %2904 = vmatprep.subr.bf16.mxu0 %v2853
  %2905 = vmatpush1.bf16.msra.mxu0 %v2852
  %2906 = vmatprep.subr.bf16.mxu0 %v2857
  %2907 = vmatpush1.bf16.msra.mxu0 %v2856
  %2908 = vmatprep.subr.bf16.mxu0 0
  %2909 = vmatpush1.bf16.msra.mxu0 0
  %2910 = vmatprep.subr.bf16.mxu0 0
  %2911 = vmatpush1.bf16.msra.mxu0 0
  %2912 = vmatprep.subr.bf16.mxu0 0
  %2913 = vmatpush1.bf16.msra.mxu0 0
  %2914 = vmatprep.subr.bf16.mxu0 0
  %2915 = vmatpush1.bf16.msra.mxu0 0
  %2916 = vmatprep.subr.bf16.mxu0 0
  %2917 = vmatpush1.bf16.msra.mxu0 0
  %2918 = vmatprep.subr.bf16.mxu0 0
  %2919 = vmatpush1.bf16.msra.mxu0 0
  %2920 = vmatprep.subr.bf16.mxu0 0
  %2921 = vmatpush1.bf16.msra.mxu0 0
  %2922 = vmatprep.subr.bf16.mxu0 0
  %2923 = vmatpush1.bf16.msra.mxu0 0
  %2924 = vmatprep.mubr.bf16.mxu0 0
  %2925 = vmatmul.mubr.bf16.gmra.mrb[0].mxu0 %v2449
  %v2926 = vpop.f32.mrb[0].mxu0
  %v2927 = vadd.f32 0.0, %v2926
  %v2928 = vpop.f32.mrb[0].mxu0
  %v2929 = vadd.f32 0.0, %v2928
  %v2930 = vpop.f32.mrb[0].mxu0
  %v2931 = vpop.f32.mrb[0].mxu0
  %2932 = vdwg.mxu0
  %2933 = vmatprep.subr.bf16.mxu0 %v2831
  %2934 = vmatpush1.bf16.msra.mxu0 %v2830
  %2935 = vmatprep.subr.bf16.mxu0 %v2835
  %2936 = vmatpush1.bf16.msra.mxu0 %v2834
  %2937 = vmatprep.subr.bf16.mxu0 %v2839
  %2938 = vmatpush1.bf16.msra.mxu0 %v2838
  %2939 = vmatprep.subr.bf16.mxu0 %v2843
  %2940 = vmatpush1.bf16.msra.mxu0 %v2842
  %2941 = vmatprep.subr.bf16.mxu0 %v2847
  %2942 = vmatpush1.bf16.msra.mxu0 %v2846
  %2943 = vmatprep.subr.bf16.mxu0 %v2851
  %2944 = vmatpush1.bf16.msra.mxu0 %v2850
  %2945 = vmatprep.subr.bf16.mxu0 %v2855
  %2946 = vmatpush1.bf16.msra.mxu0 %v2854
  %2947 = vmatprep.subr.bf16.mxu0 %v2859
  %2948 = vmatpush1.bf16.msra.mxu0 %v2858
  %2949 = vmatprep.subr.bf16.mxu0 0
  %2950 = vmatpush1.bf16.msra.mxu0 0
  %2951 = vmatprep.subr.bf16.mxu0 0
  %2952 = vmatpush1.bf16.msra.mxu0 0
  %2953 = vmatprep.subr.bf16.mxu0 0
  %2954 = vmatpush1.bf16.msra.mxu0 0
  %2955 = vmatprep.subr.bf16.mxu0 0
  %2956 = vmatpush1.bf16.msra.mxu0 0
  %2957 = vmatprep.subr.bf16.mxu0 0
  %2958 = vmatpush1.bf16.msra.mxu0 0
  %2959 = vmatprep.subr.bf16.mxu0 0
  %2960 = vmatpush1.bf16.msra.mxu0 0
  %2961 = vmatprep.subr.bf16.mxu0 0
  %2962 = vmatpush1.bf16.msra.mxu0 0
  %2963 = vmatprep.subr.bf16.mxu0 0
  %2964 = vmatpush1.bf16.msra.mxu0 0
  %2965 = vmatprep.mubr.bf16.mxu0 0
  %2966 = vmatmul.mubr.bf16.gmra.mrb[0].mxu0 %v2449
  %v2967 = vpop.f32.mrb[0].mxu0
  %v2968 = vadd.f32 0.0, %v2967
  %v2969 = vpop.f32.mrb[0].mxu0
  %v2970 = vadd.f32 0.0, %v2969
  %v2971 = vpop.f32.mrb[0].mxu0
  %v2972 = vpop.f32.mrb[0].mxu0
  %2973 = vdwg.mxu0
  %v2974 = vadd.f32 %v2696, %v2927
  %v2975 = vadd.f32 %v2697, %v2929
  %v2976 = vadd.f32 %v2698, %v2968
  %v2977 = vadd.f32 %v2699, %v2970
  %v2978 = vxor.u32 %v2974, 2147483648
  %v2979 = vmul.f32 %v2978, 1.442695
  %v2980 = vpow.pop %v2979
  %v2981 = vadd.f32 %v2980, 1.0
  %v2982 = vrcp.pop %v2981
  %v2983 = vmul.f32 1.0, %v2982
  %v2984 = vxor.u32 %v2975, 2147483648
  %v2985 = vmul.f32 %v2984, 1.442695
  %v2986 = vpow.pop %v2985
  %v2987 = vadd.f32 %v2986, 1.0
  %v2988 = vrcp.pop %v2987
  %v2989 = vmul.f32 1.0, %v2988
  %v2990 = vtanh.pop %v2976
  %v2991 = vxor.u32 %v2977, 2147483648
  %v2992 = vmul.f32 %v2991, 1.442695
  %v2993 = vpow.pop %v2992
  %v2994 = vadd.f32 %v2993, 1.0
  %v2995 = vrcp.pop %v2994
  %v2996 = vmul.f32 1.0, %v2995
  %v2997 = vmul.f32 %v2989, %v2446
  %v2998 = vmul.f32 %v2983, %v2990
  %v2999 = vadd.f32 %v2997, %v2998
  %v3000 = vtanh.pop %v2999
  %v3001 = vmul.f32 %v2996, %v3000
  %v3002 = vpack.c.bf16 %v3001, %v3001
  %v3003 = vld [vmem:[%s7] sm:$0xf]
  %v3004 = vld [vmem:[%s7 + $0x4] sm:$0xf]
  %v3005 = vld [vmem:[%s7 + $0x8] sm:$0xf]
  %v3006 = vld [vmem:[%s7 + $0xc] sm:$0xf]
  %v3007 = vld [vmem:[%s7 + $0x10] sm:$0xf]
  %v3008 = vld [vmem:[%s7 + $0x14] sm:$0xf]
  %v3009 = vld [vmem:[%s7 + $0x18] sm:$0xf]
  %v3010 = vld [vmem:[%s7 + $0x1c] sm:$0xf]
  %v3011 = vld [vmem:[%s7 + $0x20] sm:$0xf]
  %v3012 = vld [vmem:[%s7 + $0x24] sm:$0xf]
  %v3013 = vld [vmem:[%s7 + $0x28] sm:$0xf]
  %v3014 = vld [vmem:[%s7 + $0x2c] sm:$0xf]
  %v3015 = vld [vmem:[%s7 + $0x30] sm:$0xf]
  %v3016 = vld [vmem:[%s7 + $0x34] sm:$0xf]
  %v3017 = vld [vmem:[%s7 + $0x38] sm:$0xf]
  %v3018 = vld [vmem:[%s7 + $0x3c] sm:$0xf]
  %v3035 = vunpack.c.l.b16 %v3003
  %v3036 = vunpack.c.l.b16 %v3004
  %v3037 = vunpack.c.l.b16 %v3005
  %v3038 = vunpack.c.l.b16 %v3006
  %v3039 = vunpack.c.l.b16 %v3007
  %v3040 = vunpack.c.l.b16 %v3008
  %v3041 = vunpack.c.l.b16 %v3009
  %v3042 = vunpack.c.l.b16 %v3010
  %v3043 = vunpack.c.l.b16 %v3011
  %v3044 = vunpack.c.l.b16 %v3012
  %v3045 = vunpack.c.l.b16 %v3013
  %v3046 = vunpack.c.l.b16 %v3014
  %v3047 = vunpack.c.l.b16 %v3015
  %v3048 = vunpack.c.l.b16 %v3016
  %v3049 = vunpack.c.l.b16 %v3017
  %v3050 = vunpack.c.l.b16 %v3018
  %v3051 = vpack.c.b16 %v3036, %v3035
  %v3052 = vpack.c.b16 %v3038, %v3037
  %v3053 = vpack.c.b16 %v3040, %v3039
  %v3054 = vpack.c.b16 %v3042, %v3041
  %v3055 = vpack.c.b16 %v3044, %v3043
  %v3056 = vpack.c.b16 %v3046, %v3045
  %v3057 = vpack.c.b16 %v3048, %v3047
  %v3058 = vpack.c.b16 %v3050, %v3049
  %3067 = vmatprep.subr.bf16.mxu0 0
  %3068 = vmatpush1.bf16.msra.mxu0 %v3051
  %3069 = vmatprep.subr.bf16.mxu0 0
  %3070 = vmatpush1.bf16.msra.mxu0 %v3052
  %3071 = vmatprep.subr.bf16.mxu0 0
  %3072 = vmatpush1.bf16.msra.mxu0 %v3053
  %3073 = vmatprep.subr.bf16.mxu0 0
  %3074 = vmatpush1.bf16.msra.mxu0 %v3054
  %3075 = vmatprep.subr.bf16.mxu0 0
  %3076 = vmatpush1.bf16.msra.mxu0 %v3055
  %3077 = vmatprep.subr.bf16.mxu0 0
  %3078 = vmatpush1.bf16.msra.mxu0 %v3056
  %3079 = vmatprep.subr.bf16.mxu0 0
  %3080 = vmatpush1.bf16.msra.mxu0 %v3057
  %3081 = vmatprep.subr.bf16.mxu0 0
  %3082 = vmatpush1.bf16.msra.mxu0 %v3058
  %3083 = vmatprep.subr.bf16.mxu0 0
  %3084 = vmatpush1.bf16.msra.mxu0 0
  %3085 = vmatprep.subr.bf16.mxu0 0
  %3086 = vmatpush1.bf16.msra.mxu0 0
  %3087 = vmatprep.subr.bf16.mxu0 0
  %3088 = vmatpush1.bf16.msra.mxu0 0
  %3089 = vmatprep.subr.bf16.mxu0 0
  %3090 = vmatpush1.bf16.msra.mxu0 0
  %3091 = vmatprep.subr.bf16.mxu0 0
  %3092 = vmatpush1.bf16.msra.mxu0 0
  %3093 = vmatprep.subr.bf16.mxu0 0
  %3094 = vmatpush1.bf16.msra.mxu0 0
  %3095 = vmatprep.subr.bf16.mxu0 0
  %3096 = vmatpush1.bf16.msra.mxu0 0
  %3097 = vmatprep.subr.bf16.mxu0 0
  %3098 = vmatpush1.bf16.msra.mxu0 0
  %3099 = vmatprep.mubr.bf16.mxu0 0
  %3100 = vmatmul.mubr.bf16.gmra.mrb[0].mxu0 %v3002
  %v3101 = vpop.f32.mrb[0].mxu0
  %v3102 = vadd.f32 %v1901, %v3101
  %v3103 = vpop.f32.mrb[0].mxu0
  %v3104 = vpop.f32.mrb[0].mxu0
  %v3105 = vpop.f32.mrb[0].mxu0
  %3106 = vdwg.mxu0
  %v3107 = vmax.f32 %v3102, 0.0
  %v3108 = vpack.c.bf16 %v3107, %v3107
  %v3109 = vld [vmem:[%s9] sm:$0xff]
  %v3110 = vld [vmem:[%s9 + $0x8] sm:$0xff]
  %v3111 = vld [vmem:[%s9 + $0x10] sm:$0xff]
  %v3112 = vld [vmem:[%s9 + $0x18] sm:$0xff]
  %v3113 = vld [vmem:[%s9 + $0x20] sm:$0xff]
  %v3114 = vld [vmem:[%s9 + $0x28] sm:$0xff]
  %v3115 = vld [vmem:[%s9 + $0x30] sm:$0xff]
  %v3116 = vld [vmem:[%s9 + $0x38] sm:$0xff]
  %v3117 = vld [vmem:[%s9 + $0x40] sm:$0xff]
  %v3118 = vld [vmem:[%s9 + $0x48] sm:$0xff]
  %v3119 = vld [vmem:[%s9 + $0x50] sm:$0xff]
  %v3120 = vld [vmem:[%s9 + $0x58] sm:$0xff]
  %v3121 = vld [vmem:[%s9 + $0x60] sm:$0xff]
  %v3122 = vld [vmem:[%s9 + $0x68] sm:$0xff]
  %v3123 = vld [vmem:[%s9 + $0x70] sm:$0xff]
  %v3124 = vld [vmem:[%s9 + $0x78] sm:$0xff]
  %v3141 = vunpack.c.l.b16 %v3109
  %v3142 = vunpack.c.h.b16 %v3109
  %v3143 = vunpack.c.l.b16 %v3110
  %v3144 = vunpack.c.h.b16 %v3110
  %v3145 = vunpack.c.l.b16 %v3111
  %v3146 = vunpack.c.h.b16 %v3111
  %v3147 = vunpack.c.l.b16 %v3112
  %v3148 = vunpack.c.h.b16 %v3112
  %v3149 = vunpack.c.l.b16 %v3113
  %v3150 = vunpack.c.h.b16 %v3113
  %v3151 = vunpack.c.l.b16 %v3114
  %v3152 = vunpack.c.h.b16 %v3114
  %v3153 = vunpack.c.l.b16 %v3115
  %v3154 = vunpack.c.h.b16 %v3115
  %v3155 = vunpack.c.l.b16 %v3116
  %v3156 = vunpack.c.h.b16 %v3116
  %v3157 = vunpack.c.l.b16 %v3117
  %v3158 = vunpack.c.h.b16 %v3117
  %v3159 = vunpack.c.l.b16 %v3118
  %v3160 = vunpack.c.h.b16 %v3118
  %v3161 = vunpack.c.l.b16 %v3119
  %v3162 = vunpack.c.h.b16 %v3119
  %v3163 = vunpack.c.l.b16 %v3120
  %v3164 = vunpack.c.h.b16 %v3120
  %v3165 = vunpack.c.l.b16 %v3121
  %v3166 = vunpack.c.h.b16 %v3121
  %v3167 = vunpack.c.l.b16 %v3122
  %v3168 = vunpack.c.h.b16 %v3122
  %v3169 = vunpack.c.l.b16 %v3123
  %v3170 = vunpack.c.h.b16 %v3123
  %v3171 = vunpack.c.l.b16 %v3124
  %v3172 = vunpack.c.h.b16 %v3124
  %v3173 = vpack.c.b16 %v3143, %v3141
  %v3174 = vpack.c.b16 %v3144, %v3142
  %v3175 = vpack.c.b16 %v3147, %v3145
  %v3176 = vpack.c.b16 %v3148, %v3146
  %v3177 = vpack.c.b16 %v3151, %v3149
  %v3178 = vpack.c.b16 %v3152, %v3150
  %v3179 = vpack.c.b16 %v3155, %v3153
  %v3180 = vpack.c.b16 %v3156, %v3154
  %v3181 = vpack.c.b16 %v3159, %v3157
  %v3182 = vpack.c.b16 %v3160, %v3158
  %v3183 = vpack.c.b16 %v3163, %v3161
  %v3184 = vpack.c.b16 %v3164, %v3162
  %v3185 = vpack.c.b16 %v3167, %v3165
  %v3186 = vpack.c.b16 %v3168, %v3166
  %v3187 = vpack.c.b16 %v3171, %v3169
  %v3188 = vpack.c.b16 %v3172, %v3170
  %3205 = vmatprep.subr.bf16.mxu0 %v3174
  %3206 = vmatpush1.bf16.msra.mxu0 %v3173
  %3207 = vmatprep.subr.bf16.mxu0 %v3176
  %3208 = vmatpush1.bf16.msra.mxu0 %v3175
  %3209 = vmatprep.subr.bf16.mxu0 %v3178
  %3210 = vmatpush1.bf16.msra.mxu0 %v3177
  %3211 = vmatprep.subr.bf16.mxu0 %v3180
  %3212 = vmatpush1.bf16.msra.mxu0 %v3179
  %3213 = vmatprep.subr.bf16.mxu0 %v3182
  %3214 = vmatpush1.bf16.msra.mxu0 %v3181
  %3215 = vmatprep.subr.bf16.mxu0 %v3184
  %3216 = vmatpush1.bf16.msra.mxu0 %v3183
  %3217 = vmatprep.subr.bf16.mxu0 %v3186
  %3218 = vmatpush1.bf16.msra.mxu0 %v3185
  %3219 = vmatprep.subr.bf16.mxu0 %v3188
  %3220 = vmatpush1.bf16.msra.mxu0 %v3187
  %3221 = vmatprep.subr.bf16.mxu0 0
  %3222 = vmatpush1.bf16.msra.mxu0 0
  %3223 = vmatprep.subr.bf16.mxu0 0
  %3224 = vmatpush1.bf16.msra.mxu0 0
  %3225 = vmatprep.subr.bf16.mxu0 0
  %3226 = vmatpush1.bf16.msra.mxu0 0
  %3227 = vmatprep.subr.bf16.mxu0 0
  %3228 = vmatpush1.bf16.msra.mxu0 0
  %3229 = vmatprep.subr.bf16.mxu0 0
  %3230 = vmatpush1.bf16.msra.mxu0 0
  %3231 = vmatprep.subr.bf16.mxu0 0
  %3232 = vmatpush1.bf16.msra.mxu0 0
  %3233 = vmatprep.subr.bf16.mxu0 0
  %3234 = vmatpush1.bf16.msra.mxu0 0
  %3235 = vmatprep.subr.bf16.mxu0 0
  %3236 = vmatpush1.bf16.msra.mxu0 0
  %3237 = vmatprep.mubr.bf16.mxu0 0
  %3238 = vmatmul.mubr.bf16.gmra.mrb[0].mxu0 %v3108
  %v3239 = vpop.f32.mrb[0].mxu0
  %v3240 = vadd.f32 %v2013, %v3239
  %v3241 = vpop.f32.mrb[0].mxu0
  %v3242 = vadd.f32 %v2017, %v3241
  %v3243 = vpop.f32.mrb[0].mxu0
  %v3244 = vpop.f32.mrb[0].mxu0
  %3245 = vdwg.mxu0
  %s3246 = scalar_lea.vmem %s11, 32
  %3247 = vst [vmem:[%s3246] sm:$0xff] %v3240
  %3248 = vst [vmem:[%s3246 + $0x8] sm:$0xff] %v3242
  %v3249 = vld [vmem:[#allocation3 + $0x60] sm:$0xff]
  %v3250 = vld [vmem:[#allocation3 + $0x68] sm:$0xff]
  %v3251 = vld [vmem:[#allocation3 + $0x70] sm:$0xff]
  %v3252 = vld [vmem:[#allocation3 + $0x78] sm:$0xff]
  %v3253 = vld [vmem:[%s5] sm:$0xff]
  %v3254 = vld [vmem:[%s5 + $0x8] sm:$0xff]
  %v3255 = vld [vmem:[%s5 + $0x10] sm:$0xff]
  %v3256 = vld [vmem:[%s5 + $0x18] sm:$0xff]
  %v3257 = vld [vmem:[%s5 + $0x20] sm:$0xff]
  %v3258 = vld [vmem:[%s5 + $0x28] sm:$0xff]
  %v3259 = vld [vmem:[%s5 + $0x30] sm:$0xff]
  %v3260 = vld [vmem:[%s5 + $0x38] sm:$0xff]
  %v3261 = vld [vmem:[%s5 + $0x40] sm:$0xff]
  %v3262 = vld [vmem:[%s5 + $0x48] sm:$0xff]
  %v3263 = vld [vmem:[%s5 + $0x50] sm:$0xff]
  %v3264 = vld [vmem:[%s5 + $0x58] sm:$0xff]
  %v3265 = vld [vmem:[%s5 + $0x60] sm:$0xff]
  %v3266 = vld [vmem:[%s5 + $0x68] sm:$0xff]
  %v3267 = vld [vmem:[%s5 + $0x70] sm:$0xff]
  %v3268 = vld [vmem:[%s5 + $0x78] sm:$0xff]
  %v3269 = vld [vmem:[%s5 + $0x80] sm:$0xff]
  %v3270 = vld [vmem:[%s5 + $0x88] sm:$0xff]
  %v3271 = vld [vmem:[%s5 + $0x90] sm:$0xff]
  %v3272 = vld [vmem:[%s5 + $0x98] sm:$0xff]
  %v3273 = vld [vmem:[%s5 + $0xa0] sm:$0xff]
  %v3274 = vld [vmem:[%s5 + $0xa8] sm:$0xff]
  %v3275 = vld [vmem:[%s5 + $0xb0] sm:$0xff]
  %v3276 = vld [vmem:[%s5 + $0xb8] sm:$0xff]
  %v3277 = vld [vmem:[%s5 + $0xc0] sm:$0xff]
  %v3278 = vld [vmem:[%s5 + $0xc8] sm:$0xff]
  %v3279 = vld [vmem:[%s5 + $0xd0] sm:$0xff]
  %v3280 = vld [vmem:[%s5 + $0xd8] sm:$0xff]
  %v3281 = vld [vmem:[%s5 + $0xe0] sm:$0xff]
  %v3282 = vld [vmem:[%s5 + $0xe8] sm:$0xff]
  %v3283 = vld [vmem:[%s5 + $0xf0] sm:$0xff]
  %v3284 = vld [vmem:[%s5 + $0xf8] sm:$0xff]
  %v3317 = vunpack.c.l.b16 %v3253
  %v3318 = vunpack.c.h.b16 %v3253
  %v3319 = vunpack.c.l.b16 %v3254
  %v3320 = vunpack.c.h.b16 %v3254
  %v3321 = vunpack.c.l.b16 %v3255
  %v3322 = vunpack.c.h.b16 %v3255
  %v3323 = vunpack.c.l.b16 %v3256
  %v3324 = vunpack.c.h.b16 %v3256
  %v3325 = vunpack.c.l.b16 %v3257
  %v3326 = vunpack.c.h.b16 %v3257
  %v3327 = vunpack.c.l.b16 %v3258
  %v3328 = vunpack.c.h.b16 %v3258
  %v3329 = vunpack.c.l.b16 %v3259
  %v3330 = vunpack.c.h.b16 %v3259
  %v3331 = vunpack.c.l.b16 %v3260
  %v3332 = vunpack.c.h.b16 %v3260
  %v3333 = vunpack.c.l.b16 %v3261
  %v3334 = vunpack.c.h.b16 %v3261
  %v3335 = vunpack.c.l.b16 %v3262
  %v3336 = vunpack.c.h.b16 %v3262
  %v3337 = vunpack.c.l.b16 %v3263
  %v3338 = vunpack.c.h.b16 %v3263
  %v3339 = vunpack.c.l.b16 %v3264
  %v3340 = vunpack.c.h.b16 %v3264
  %v3341 = vunpack.c.l.b16 %v3265
  %v3342 = vunpack.c.h.b16 %v3265
  %v3343 = vunpack.c.l.b16 %v3266
  %v3344 = vunpack.c.h.b16 %v3266
  %v3345 = vunpack.c.l.b16 %v3267
  %v3346 = vunpack.c.h.b16 %v3267
  %v3347 = vunpack.c.l.b16 %v3268
  %v3348 = vunpack.c.h.b16 %v3268
  %v3349 = vunpack.c.l.b16 %v3269
  %v3350 = vunpack.c.h.b16 %v3269
  %v3351 = vunpack.c.l.b16 %v3270
  %v3352 = vunpack.c.h.b16 %v3270
  %v3353 = vunpack.c.l.b16 %v3271
  %v3354 = vunpack.c.h.b16 %v3271
  %v3355 = vunpack.c.l.b16 %v3272
  %v3356 = vunpack.c.h.b16 %v3272
  %v3357 = vunpack.c.l.b16 %v3273
  %v3358 = vunpack.c.h.b16 %v3273
  %v3359 = vunpack.c.l.b16 %v3274
  %v3360 = vunpack.c.h.b16 %v3274
  %v3361 = vunpack.c.l.b16 %v3275
  %v3362 = vunpack.c.h.b16 %v3275
  %v3363 = vunpack.c.l.b16 %v3276
  %v3364 = vunpack.c.h.b16 %v3276
  %v3365 = vunpack.c.l.b16 %v3277
  %v3366 = vunpack.c.h.b16 %v3277
  %v3367 = vunpack.c.l.b16 %v3278
  %v3368 = vunpack.c.h.b16 %v3278
  %v3369 = vunpack.c.l.b16 %v3279
  %v3370 = vunpack.c.h.b16 %v3279
  %v3371 = vunpack.c.l.b16 %v3280
  %v3372 = vunpack.c.h.b16 %v3280
  %v3373 = vunpack.c.l.b16 %v3281
  %v3374 = vunpack.c.h.b16 %v3281
  %v3375 = vunpack.c.l.b16 %v3282
  %v3376 = vunpack.c.h.b16 %v3282
  %v3377 = vunpack.c.l.b16 %v3283
  %v3378 = vunpack.c.h.b16 %v3283
  %v3379 = vunpack.c.l.b16 %v3284
  %v3380 = vunpack.c.h.b16 %v3284
  %v3381 = vpack.c.b16 %v3321, %v3317
  %v3382 = vpack.c.b16 %v3322, %v3318
  %v3383 = vpack.c.b16 %v3323, %v3319
  %v3384 = vpack.c.b16 %v3324, %v3320
  %v3385 = vpack.c.b16 %v3329, %v3325
  %v3386 = vpack.c.b16 %v3330, %v3326
  %v3387 = vpack.c.b16 %v3331, %v3327
  %v3388 = vpack.c.b16 %v3332, %v3328
  %v3389 = vpack.c.b16 %v3337, %v3333
  %v3390 = vpack.c.b16 %v3338, %v3334
  %v3391 = vpack.c.b16 %v3339, %v3335
  %v3392 = vpack.c.b16 %v3340, %v3336
  %v3393 = vpack.c.b16 %v3345, %v3341
  %v3394 = vpack.c.b16 %v3346, %v3342
  %v3395 = vpack.c.b16 %v3347, %v3343
  %v3396 = vpack.c.b16 %v3348, %v3344
  %v3397 = vpack.c.b16 %v3353, %v3349
  %v3398 = vpack.c.b16 %v3354, %v3350
  %v3399 = vpack.c.b16 %v3355, %v3351
  %v3400 = vpack.c.b16 %v3356, %v3352
  %v3401 = vpack.c.b16 %v3361, %v3357
  %v3402 = vpack.c.b16 %v3362, %v3358
  %v3403 = vpack.c.b16 %v3363, %v3359
  %v3404 = vpack.c.b16 %v3364, %v3360
  %v3405 = vpack.c.b16 %v3369, %v3365
  %v3406 = vpack.c.b16 %v3370, %v3366
  %v3407 = vpack.c.b16 %v3371, %v3367
  %v3408 = vpack.c.b16 %v3372, %v3368
  %v3409 = vpack.c.b16 %v3377, %v3373
  %v3410 = vpack.c.b16 %v3378, %v3374
  %v3411 = vpack.c.b16 %v3379, %v3375
  %v3412 = vpack.c.b16 %v3380, %v3376
  %3445 = vmatprep.subr.bf16.mxu0 %v3382
  %3446 = vmatpush1.bf16.msra.mxu0 %v3381
  %3447 = vmatprep.subr.bf16.mxu0 %v3386
  %3448 = vmatpush1.bf16.msra.mxu0 %v3385
  %3449 = vmatprep.subr.bf16.mxu0 %v3390
  %3450 = vmatpush1.bf16.msra.mxu0 %v3389
  %3451 = vmatprep.subr.bf16.mxu0 %v3394
  %3452 = vmatpush1.bf16.msra.mxu0 %v3393
  %3453 = vmatprep.subr.bf16.mxu0 %v3398
  %3454 = vmatpush1.bf16.msra.mxu0 %v3397
  %3455 = vmatprep.subr.bf16.mxu0 %v3402
  %3456 = vmatpush1.bf16.msra.mxu0 %v3401
  %3457 = vmatprep.subr.bf16.mxu0 %v3406
  %3458 = vmatpush1.bf16.msra.mxu0 %v3405
  %3459 = vmatprep.subr.bf16.mxu0 %v3410
  %3460 = vmatpush1.bf16.msra.mxu0 %v3409
  %3461 = vmatprep.subr.bf16.mxu0 0
  %3462 = vmatpush1.bf16.msra.mxu0 0
  %3463 = vmatprep.subr.bf16.mxu0 0
  %3464 = vmatpush1.bf16.msra.mxu0 0
  %3465 = vmatprep.subr.bf16.mxu0 0
  %3466 = vmatpush1.bf16.msra.mxu0 0
  %3467 = vmatprep.subr.bf16.mxu0 0
  %3468 = vmatpush1.bf16.msra.mxu0 0
  %3469 = vmatprep.subr.bf16.mxu0 0
  %3470 = vmatpush1.bf16.msra.mxu0 0
  %3471 = vmatprep.subr.bf16.mxu0 0
  %3472 = vmatpush1.bf16.msra.mxu0 0
  %3473 = vmatprep.subr.bf16.mxu0 0
  %3474 = vmatpush1.bf16.msra.mxu0 0
  %3475 = vmatprep.subr.bf16.mxu0 0
  %3476 = vmatpush1.bf16.msra.mxu0 0
  %3477 = vmatprep.mubr.bf16.mxu0 0
  %3478 = vmatmul.mubr.bf16.gmra.mrb[0].mxu0 %v3002
  %v3479 = vpop.f32.mrb[0].mxu0
  %v3480 = vadd.f32 0.0, %v3479
  %v3481 = vpop.f32.mrb[0].mxu0
  %v3482 = vadd.f32 0.0, %v3481
  %v3483 = vpop.f32.mrb[0].mxu0
  %v3484 = vpop.f32.mrb[0].mxu0
  %3485 = vdwg.mxu0
  %3486 = vmatprep.subr.bf16.mxu0 %v3384
  %3487 = vmatpush1.bf16.msra.mxu0 %v3383
  %3488 = vmatprep.subr.bf16.mxu0 %v3388
  %3489 = vmatpush1.bf16.msra.mxu0 %v3387
  %3490 = vmatprep.subr.bf16.mxu0 %v3392
  %3491 = vmatpush1.bf16.msra.mxu0 %v3391
  %3492 = vmatprep.subr.bf16.mxu0 %v3396
  %3493 = vmatpush1.bf16.msra.mxu0 %v3395
  %3494 = vmatprep.subr.bf16.mxu0 %v3400
  %3495 = vmatpush1.bf16.msra.mxu0 %v3399
  %3496 = vmatprep.subr.bf16.mxu0 %v3404
  %3497 = vmatpush1.bf16.msra.mxu0 %v3403
  %3498 = vmatprep.subr.bf16.mxu0 %v3408
  %3499 = vmatpush1.bf16.msra.mxu0 %v3407
  %3500 = vmatprep.subr.bf16.mxu0 %v3412
  %3501 = vmatpush1.bf16.msra.mxu0 %v3411
  %3502 = vmatprep.subr.bf16.mxu0 0
  %3503 = vmatpush1.bf16.msra.mxu0 0
  %3504 = vmatprep.subr.bf16.mxu0 0
  %3505 = vmatpush1.bf16.msra.mxu0 0
  %3506 = vmatprep.subr.bf16.mxu0 0
  %3507 = vmatpush1.bf16.msra.mxu0 0
  %3508 = vmatprep.subr.bf16.mxu0 0
  %3509 = vmatpush1.bf16.msra.mxu0 0
  %3510 = vmatprep.subr.bf16.mxu0 0
  %3511 = vmatpush1.bf16.msra.mxu0 0
  %3512 = vmatprep.subr.bf16.mxu0 0
  %3513 = vmatpush1.bf16.msra.mxu0 0
  %3514 = vmatprep.subr.bf16.mxu0 0
  %3515 = vmatpush1.bf16.msra.mxu0 0
  %3516 = vmatprep.subr.bf16.mxu0 0
  %3517 = vmatpush1.bf16.msra.mxu0 0
  %3518 = vmatprep.mubr.bf16.mxu0 0
  %3519 = vmatmul.mubr.bf16.gmra.mrb[0].mxu0 %v3002
  %v3520 = vpop.f32.mrb[0].mxu0
  %v3521 = vadd.f32 0.0, %v3520
  %v3522 = vpop.f32.mrb[0].mxu0
  %v3523 = vadd.f32 0.0, %v3522
  %v3524 = vpop.f32.mrb[0].mxu0
  %v3525 = vpop.f32.mrb[0].mxu0
  %3526 = vdwg.mxu0
  %v3527 = vadd.f32 %v3249, %v3480
  %v3528 = vadd.f32 %v3250, %v3482
  %v3529 = vadd.f32 %v3251, %v3521
  %v3530 = vadd.f32 %v3252, %v3523
  %v3531 = vxor.u32 %v3527, 2147483648
  %v3532 = vmul.f32 %v3531, 1.442695
  %v3533 = vpow.pop %v3532
  %v3534 = vadd.f32 %v3533, 1.0
  %v3535 = vrcp.pop %v3534
  %v3536 = vmul.f32 1.0, %v3535
  %v3537 = vxor.u32 %v3528, 2147483648
  %v3538 = vmul.f32 %v3537, 1.442695
  %v3539 = vpow.pop %v3538
  %v3540 = vadd.f32 %v3539, 1.0
  %v3541 = vrcp.pop %v3540
  %v3542 = vmul.f32 1.0, %v3541
  %v3543 = vtanh.pop %v3529
  %v3544 = vxor.u32 %v3530, 2147483648
  %v3545 = vmul.f32 %v3544, 1.442695
  %v3546 = vpow.pop %v3545
  %v3547 = vadd.f32 %v3546, 1.0
  %v3548 = vrcp.pop %v3547
  %v3549 = vmul.f32 1.0, %v3548
  %v3550 = vmul.f32 %v3542, %v2999
  %v3551 = vmul.f32 %v3536, %v3543
  %v3552 = vadd.f32 %v3550, %v3551
  %v3553 = vtanh.pop %v3552
  %v3554 = vmul.f32 %v3549, %v3553
  %v3555 = vpack.c.bf16 %v3554, %v3554
  %v3556 = vld [vmem:[%s7] sm:$0xf]
  %v3557 = vld [vmem:[%s7 + $0x4] sm:$0xf]
  %v3558 = vld [vmem:[%s7 + $0x8] sm:$0xf]
  %v3559 = vld [vmem:[%s7 + $0xc] sm:$0xf]
  %v3560 = vld [vmem:[%s7 + $0x10] sm:$0xf]
  %v3561 = vld [vmem:[%s7 + $0x14] sm:$0xf]
  %v3562 = vld [vmem:[%s7 + $0x18] sm:$0xf]
  %v3563 = vld [vmem:[%s7 + $0x1c] sm:$0xf]
  %v3564 = vld [vmem:[%s7 + $0x20] sm:$0xf]
  %v3565 = vld [vmem:[%s7 + $0x24] sm:$0xf]
  %v3566 = vld [vmem:[%s7 + $0x28] sm:$0xf]
  %v3567 = vld [vmem:[%s7 + $0x2c] sm:$0xf]
  %v3568 = vld [vmem:[%s7 + $0x30] sm:$0xf]
  %v3569 = vld [vmem:[%s7 + $0x34] sm:$0xf]
  %v3570 = vld [vmem:[%s7 + $0x38] sm:$0xf]
  %v3571 = vld [vmem:[%s7 + $0x3c] sm:$0xf]
  %v3588 = vunpack.c.l.b16 %v3556
  %v3589 = vunpack.c.l.b16 %v3557
  %v3590 = vunpack.c.l.b16 %v3558
  %v3591 = vunpack.c.l.b16 %v3559
  %v3592 = vunpack.c.l.b16 %v3560
  %v3593 = vunpack.c.l.b16 %v3561
  %v3594 = vunpack.c.l.b16 %v3562
  %v3595 = vunpack.c.l.b16 %v3563
  %v3596 = vunpack.c.l.b16 %v3564
  %v3597 = vunpack.c.l.b16 %v3565
  %v3598 = vunpack.c.l.b16 %v3566
  %v3599 = vunpack.c.l.b16 %v3567
  %v3600 = vunpack.c.l.b16 %v3568
  %v3601 = vunpack.c.l.b16 %v3569
  %v3602 = vunpack.c.l.b16 %v3570
  %v3603 = vunpack.c.l.b16 %v3571
  %v3604 = vpack.c.b16 %v3589, %v3588
  %v3605 = vpack.c.b16 %v3591, %v3590
  %v3606 = vpack.c.b16 %v3593, %v3592
  %v3607 = vpack.c.b16 %v3595, %v3594
  %v3608 = vpack.c.b16 %v3597, %v3596
  %v3609 = vpack.c.b16 %v3599, %v3598
  %v3610 = vpack.c.b16 %v3601, %v3600
  %v3611 = vpack.c.b16 %v3603, %v3602
  %3620 = vmatprep.subr.bf16.mxu0 0
  %3621 = vmatpush1.bf16.msra.mxu0 %v3604
  %3622 = vmatprep.subr.bf16.mxu0 0
  %3623 = vmatpush1.bf16.msra.mxu0 %v3605
  %3624 = vmatprep.subr.bf16.mxu0 0
  %3625 = vmatpush1.bf16.msra.mxu0 %v3606
  %3626 = vmatprep.subr.bf16.mxu0 0
  %3627 = vmatpush1.bf16.msra.mxu0 %v3607
  %3628 = vmatprep.subr.bf16.mxu0 0
  %3629 = vmatpush1.bf16.msra.mxu0 %v3608
  %3630 = vmatprep.subr.bf16.mxu0 0
  %3631 = vmatpush1.bf16.msra.mxu0 %v3609
  %3632 = vmatprep.subr.bf16.mxu0 0
  %3633 = vmatpush1.bf16.msra.mxu0 %v3610
  %3634 = vmatprep.subr.bf16.mxu0 0
  %3635 = vmatpush1.bf16.msra.mxu0 %v3611
  %3636 = vmatprep.subr.bf16.mxu0 0
  %3637 = vmatpush1.bf16.msra.mxu0 0
  %3638 = vmatprep.subr.bf16.mxu0 0
  %3639 = vmatpush1.bf16.msra.mxu0 0
  %3640 = vmatprep.subr.bf16.mxu0 0
  %3641 = vmatpush1.bf16.msra.mxu0 0
  %3642 = vmatprep.subr.bf16.mxu0 0
  %3643 = vmatpush1.bf16.msra.mxu0 0
  %3644 = vmatprep.subr.bf16.mxu0 0
  %3645 = vmatpush1.bf16.msra.mxu0 0
  %3646 = vmatprep.subr.bf16.mxu0 0
  %3647 = vmatpush1.bf16.msra.mxu0 0
  %3648 = vmatprep.subr.bf16.mxu0 0
  %3649 = vmatpush1.bf16.msra.mxu0 0
  %3650 = vmatprep.subr.bf16.mxu0 0
  %3651 = vmatpush1.bf16.msra.mxu0 0
  %3652 = vmatprep.mubr.bf16.mxu0 0
  %3653 = vmatmul.mubr.bf16.gmra.mrb[0].mxu0 %v3555
  %v3654 = vpop.f32.mrb[0].mxu0
  %v3655 = vadd.f32 %v1901, %v3654
  %v3656 = vpop.f32.mrb[0].mxu0
  %v3657 = vpop.f32.mrb[0].mxu0
  %v3658 = vpop.f32.mrb[0].mxu0
  %3659 = vdwg.mxu0
  %v3660 = vmax.f32 %v3655, 0.0
  %v3661 = vpack.c.bf16 %v3660, %v3660
  %v3662 = vld [vmem:[%s9] sm:$0xff]
  %v3663 = vld [vmem:[%s9 + $0x8] sm:$0xff]
  %v3664 = vld [vmem:[%s9 + $0x10] sm:$0xff]
  %v3665 = vld [vmem:[%s9 + $0x18] sm:$0xff]
  %v3666 = vld [vmem:[%s9 + $0x20] sm:$0xff]
  %v3667 = vld [vmem:[%s9 + $0x28] sm:$0xff]
  %v3668 = vld [vmem:[%s9 + $0x30] sm:$0xff]
  %v3669 = vld [vmem:[%s9 + $0x38] sm:$0xff]
  %v3670 = vld [vmem:[%s9 + $0x40] sm:$0xff]
  %v3671 = vld [vmem:[%s9 + $0x48] sm:$0xff]
  %v3672 = vld [vmem:[%s9 + $0x50] sm:$0xff]
  %v3673 = vld [vmem:[%s9 + $0x58] sm:$0xff]
  %v3674 = vld [vmem:[%s9 + $0x60] sm:$0xff]
  %v3675 = vld [vmem:[%s9 + $0x68] sm:$0xff]
  %v3676 = vld [vmem:[%s9 + $0x70] sm:$0xff]
  %v3677 = vld [vmem:[%s9 + $0x78] sm:$0xff]
  %v3694 = vunpack.c.l.b16 %v3662
  %v3695 = vunpack.c.h.b16 %v3662
  %v3696 = vunpack.c.l.b16 %v3663
  %v3697 = vunpack.c.h.b16 %v3663
  %v3698 = vunpack.c.l.b16 %v3664
  %v3699 = vunpack.c.h.b16 %v3664
  %v3700 = vunpack.c.l.b16 %v3665
  %v3701 = vunpack.c.h.b16 %v3665
  %v3702 = vunpack.c.l.b16 %v3666
  %v3703 = vunpack.c.h.b16 %v3666
  %v3704 = vunpack.c.l.b16 %v3667
  %v3705 = vunpack.c.h.b16 %v3667
  %v3706 = vunpack.c.l.b16 %v3668
  %v3707 = vunpack.c.h.b16 %v3668
  %v3708 = vunpack.c.l.b16 %v3669
  %v3709 = vunpack.c.h.b16 %v3669
  %v3710 = vunpack.c.l.b16 %v3670
  %v3711 = vunpack.c.h.b16 %v3670
  %v3712 = vunpack.c.l.b16 %v3671
  %v3713 = vunpack.c.h.b16 %v3671
  %v3714 = vunpack.c.l.b16 %v3672
  %v3715 = vunpack.c.h.b16 %v3672
  %v3716 = vunpack.c.l.b16 %v3673
  %v3717 = vunpack.c.h.b16 %v3673
  %v3718 = vunpack.c.l.b16 %v3674
  %v3719 = vunpack.c.h.b16 %v3674
  %v3720 = vunpack.c.l.b16 %v3675
  %v3721 = vunpack.c.h.b16 %v3675
  %v3722 = vunpack.c.l.b16 %v3676
  %v3723 = vunpack.c.h.b16 %v3676
  %v3724 = vunpack.c.l.b16 %v3677
  %v3725 = vunpack.c.h.b16 %v3677
  %v3726 = vpack.c.b16 %v3696, %v3694
  %v3727 = vpack.c.b16 %v3697, %v3695
  %v3728 = vpack.c.b16 %v3700, %v3698
  %v3729 = vpack.c.b16 %v3701, %v3699
  %v3730 = vpack.c.b16 %v3704, %v3702
  %v3731 = vpack.c.b16 %v3705, %v3703
  %v3732 = vpack.c.b16 %v3708, %v3706
  %v3733 = vpack.c.b16 %v3709, %v3707
  %v3734 = vpack.c.b16 %v3712, %v3710
  %v3735 = vpack.c.b16 %v3713, %v3711
  %v3736 = vpack.c.b16 %v3716, %v3714
  %v3737 = vpack.c.b16 %v3717, %v3715
  %v3738 = vpack.c.b16 %v3720, %v3718
  %v3739 = vpack.c.b16 %v3721, %v3719
  %v3740 = vpack.c.b16 %v3724, %v3722
  %v3741 = vpack.c.b16 %v3725, %v3723
  %3758 = vmatprep.subr.bf16.mxu0 %v3727
  %3759 = vmatpush1.bf16.msra.mxu0 %v3726
  %3760 = vmatprep.subr.bf16.mxu0 %v3729
  %3761 = vmatpush1.bf16.msra.mxu0 %v3728
  %3762 = vmatprep.subr.bf16.mxu0 %v3731
  %3763 = vmatpush1.bf16.msra.mxu0 %v3730
  %3764 = vmatprep.subr.bf16.mxu0 %v3733
  %3765 = vmatpush1.bf16.msra.mxu0 %v3732
  %3766 = vmatprep.subr.bf16.mxu0 %v3735
  %3767 = vmatpush1.bf16.msra.mxu0 %v3734
  %3768 = vmatprep.subr.bf16.mxu0 %v3737
  %3769 = vmatpush1.bf16.msra.mxu0 %v3736
  %3770 = vmatprep.subr.bf16.mxu0 %v3739
  %3771 = vmatpush1.bf16.msra.mxu0 %v3738
  %3772 = vmatprep.subr.bf16.mxu0 %v3741
  %3773 = vmatpush1.bf16.msra.mxu0 %v3740
  %3774 = vmatprep.subr.bf16.mxu0 0
  %3775 = vmatpush1.bf16.msra.mxu0 0
  %3776 = vmatprep.subr.bf16.mxu0 0
  %3777 = vmatpush1.bf16.msra.mxu0 0
  %3778 = vmatprep.subr.bf16.mxu0 0
  %3779 = vmatpush1.bf16.msra.mxu0 0
  %3780 = vmatprep.subr.bf16.mxu0 0
  %3781 = vmatpush1.bf16.msra.mxu0 0
  %3782 = vmatprep.subr.bf16.mxu0 0
  %3783 = vmatpush1.bf16.msra.mxu0 0
  %3784 = vmatprep.subr.bf16.mxu0 0
  %3785 = vmatpush1.bf16.msra.mxu0 0
  %3786 = vmatprep.subr.bf16.mxu0 0
  %3787 = vmatpush1.bf16.msra.mxu0 0
  %3788 = vmatprep.subr.bf16.mxu0 0
  %3789 = vmatpush1.bf16.msra.mxu0 0
  %3790 = vmatprep.mubr.bf16.mxu0 0
  %3791 = vmatmul.mubr.bf16.gmra.mrb[0].mxu0 %v3661
  %v3792 = vpop.f32.mrb[0].mxu0
  %v3793 = vadd.f32 %v2013, %v3792
  %v3794 = vpop.f32.mrb[0].mxu0
  %v3795 = vadd.f32 %v2017, %v3794
  %v3796 = vpop.f32.mrb[0].mxu0
  %v3797 = vpop.f32.mrb[0].mxu0
  %3798 = vdwg.mxu0
  %s3799 = scalar_lea.vmem %s11, 48
  %3800 = vst [vmem:[%s3799] sm:$0xff] %v3793
  %3801 = vst [vmem:[%s3799 + $0x8] sm:$0xff] %v3795
  %v3802 = vld [vmem:[#allocation3 + $0x80] sm:$0xff]
  %v3803 = vld [vmem:[#allocation3 + $0x88] sm:$0xff]
  %v3804 = vld [vmem:[#allocation3 + $0x90] sm:$0xff]
  %v3805 = vld [vmem:[#allocation3 + $0x98] sm:$0xff]
  %v3806 = vld [vmem:[%s5] sm:$0xff]
  %v3807 = vld [vmem:[%s5 + $0x8] sm:$0xff]
  %v3808 = vld [vmem:[%s5 + $0x10] sm:$0xff]
  %v3809 = vld [vmem:[%s5 + $0x18] sm:$0xff]
  %v3810 = vld [vmem:[%s5 + $0x20] sm:$0xff]
  %v3811 = vld [vmem:[%s5 + $0x28] sm:$0xff]
  %v3812 = vld [vmem:[%s5 + $0x30] sm:$0xff]
  %v3813 = vld [vmem:[%s5 + $0x38] sm:$0xff]
  %v3814 = vld [vmem:[%s5 + $0x40] sm:$0xff]
  %v3815 = vld [vmem:[%s5 + $0x48] sm:$0xff]
  %v3816 = vld [vmem:[%s5 + $0x50] sm:$0xff]
  %v3817 = vld [vmem:[%s5 + $0x58] sm:$0xff]
  %v3818 = vld [vmem:[%s5 + $0x60] sm:$0xff]
  %v3819 = vld [vmem:[%s5 + $0x68] sm:$0xff]
  %v3820 = vld [vmem:[%s5 + $0x70] sm:$0xff]
  %v3821 = vld [vmem:[%s5 + $0x78] sm:$0xff]
  %v3822 = vld [vmem:[%s5 + $0x80] sm:$0xff]
  %v3823 = vld [vmem:[%s5 + $0x88] sm:$0xff]
  %v3824 = vld [vmem:[%s5 + $0x90] sm:$0xff]
  %v3825 = vld [vmem:[%s5 + $0x98] sm:$0xff]
  %v3826 = vld [vmem:[%s5 + $0xa0] sm:$0xff]
  %v3827 = vld [vmem:[%s5 + $0xa8] sm:$0xff]
  %v3828 = vld [vmem:[%s5 + $0xb0] sm:$0xff]
  %v3829 = vld [vmem:[%s5 + $0xb8] sm:$0xff]
  %v3830 = vld [vmem:[%s5 + $0xc0] sm:$0xff]
  %v3831 = vld [vmem:[%s5 + $0xc8] sm:$0xff]
  %v3832 = vld [vmem:[%s5 + $0xd0] sm:$0xff]
  %v3833 = vld [vmem:[%s5 + $0xd8] sm:$0xff]
  %v3834 = vld [vmem:[%s5 + $0xe0] sm:$0xff]
  %v3835 = vld [vmem:[%s5 + $0xe8] sm:$0xff]
  %v3836 = vld [vmem:[%s5 + $0xf0] sm:$0xff]
  %v3837 = vld [vmem:[%s5 + $0xf8] sm:$0xff]
  %v3870 = vunpack.c.l.b16 %v3806
  %v3871 = vunpack.c.h.b16 %v3806
  %v3872 = vunpack.c.l.b16 %v3807
  %v3873 = vunpack.c.h.b16 %v3807
  %v3874 = vunpack.c.l.b16 %v3808
  %v3875 = vunpack.c.h.b16 %v3808
  %v3876 = vunpack.c.l.b16 %v3809
  %v3877 = vunpack.c.h.b16 %v3809
  %v3878 = vunpack.c.l.b16 %v3810
  %v3879 = vunpack.c.h.b16 %v3810
  %v3880 = vunpack.c.l.b16 %v3811
  %v3881 = vunpack.c.h.b16 %v3811
  %v3882 = vunpack.c.l.b16 %v3812
  %v3883 = vunpack.c.h.b16 %v3812
  %v3884 = vunpack.c.l.b16 %v3813
  %v3885 = vunpack.c.h.b16 %v3813
  %v3886 = vunpack.c.l.b16 %v3814
  %v3887 = vunpack.c.h.b16 %v3814
  %v3888 = vunpack.c.l.b16 %v3815
  %v3889 = vunpack.c.h.b16 %v3815
  %v3890 = vunpack.c.l.b16 %v3816
  %v3891 = vunpack.c.h.b16 %v3816
  %v3892 = vunpack.c.l.b16 %v3817
  %v3893 = vunpack.c.h.b16 %v3817
  %v3894 = vunpack.c.l.b16 %v3818
  %v3895 = vunpack.c.h.b16 %v3818
  %v3896 = vunpack.c.l.b16 %v3819
  %v3897 = vunpack.c.h.b16 %v3819
  %v3898 = vunpack.c.l.b16 %v3820
  %v3899 = vunpack.c.h.b16 %v3820
  %v3900 = vunpack.c.l.b16 %v3821
  %v3901 = vunpack.c.h.b16 %v3821
  %v3902 = vunpack.c.l.b16 %v3822
  %v3903 = vunpack.c.h.b16 %v3822
  %v3904 = vunpack.c.l.b16 %v3823
  %v3905 = vunpack.c.h.b16 %v3823
  %v3906 = vunpack.c.l.b16 %v3824
  %v3907 = vunpack.c.h.b16 %v3824
  %v3908 = vunpack.c.l.b16 %v3825
  %v3909 = vunpack.c.h.b16 %v3825
  %v3910 = vunpack.c.l.b16 %v3826
  %v3911 = vunpack.c.h.b16 %v3826
  %v3912 = vunpack.c.l.b16 %v3827
  %v3913 = vunpack.c.h.b16 %v3827
  %v3914 = vunpack.c.l.b16 %v3828
  %v3915 = vunpack.c.h.b16 %v3828
  %v3916 = vunpack.c.l.b16 %v3829
  %v3917 = vunpack.c.h.b16 %v3829
  %v3918 = vunpack.c.l.b16 %v3830
  %v3919 = vunpack.c.h.b16 %v3830
  %v3920 = vunpack.c.l.b16 %v3831
  %v3921 = vunpack.c.h.b16 %v3831
  %v3922 = vunpack.c.l.b16 %v3832
  %v3923 = vunpack.c.h.b16 %v3832
  %v3924 = vunpack.c.l.b16 %v3833
  %v3925 = vunpack.c.h.b16 %v3833
  %v3926 = vunpack.c.l.b16 %v3834
  %v3927 = vunpack.c.h.b16 %v3834
  %v3928 = vunpack.c.l.b16 %v3835
  %v3929 = vunpack.c.h.b16 %v3835
  %v3930 = vunpack.c.l.b16 %v3836
  %v3931 = vunpack.c.h.b16 %v3836
  %v3932 = vunpack.c.l.b16 %v3837
  %v3933 = vunpack.c.h.b16 %v3837
  %v3934 = vpack.c.b16 %v3874, %v3870
  %v3935 = vpack.c.b16 %v3875, %v3871
  %v3936 = vpack.c.b16 %v3876, %v3872
  %v3937 = vpack.c.b16 %v3877, %v3873
  %v3938 = vpack.c.b16 %v3882, %v3878
  %v3939 = vpack.c.b16 %v3883, %v3879
  %v3940 = vpack.c.b16 %v3884, %v3880
  %v3941 = vpack.c.b16 %v3885, %v3881
  %v3942 = vpack.c.b16 %v3890, %v3886
  %v3943 = vpack.c.b16 %v3891, %v3887
  %v3944 = vpack.c.b16 %v3892, %v3888
  %v3945 = vpack.c.b16 %v3893, %v3889
  %v3946 = vpack.c.b16 %v3898, %v3894
  %v3947 = vpack.c.b16 %v3899, %v3895
  %v3948 = vpack.c.b16 %v3900, %v3896
  %v3949 = vpack.c.b16 %v3901, %v3897
  %v3950 = vpack.c.b16 %v3906, %v3902
  %v3951 = vpack.c.b16 %v3907, %v3903
  %v3952 = vpack.c.b16 %v3908, %v3904
  %v3953 = vpack.c.b16 %v3909, %v3905
  %v3954 = vpack.c.b16 %v3914, %v3910
  %v3955 = vpack.c.b16 %v3915, %v3911
  %v3956 = vpack.c.b16 %v3916, %v3912
  %v3957 = vpack.c.b16 %v3917, %v3913
  %v3958 = vpack.c.b16 %v3922, %v3918
  %v3959 = vpack.c.b16 %v3923, %v3919
  %v3960 = vpack.c.b16 %v3924, %v3920
  %v3961 = vpack.c.b16 %v3925, %v3921
  %v3962 = vpack.c.b16 %v3930, %v3926
  %v3963 = vpack.c.b16 %v3931, %v3927
  %v3964 = vpack.c.b16 %v3932, %v3928
  %v3965 = vpack.c.b16 %v3933, %v3929
  %3998 = vmatprep.subr.bf16.mxu0 %v3935
  %3999 = vmatpush1.bf16.msra.mxu0 %v3934
  %4000 = vmatprep.subr.bf16.mxu0 %v3939
  %4001 = vmatpush1.bf16.msra.mxu0 %v3938
  %4002 = vmatprep.subr.bf16.mxu0 %v3943
  %4003 = vmatpush1.bf16.msra.mxu0 %v3942
  %4004 = vmatprep.subr.bf16.mxu0 %v3947
  %4005 = vmatpush1.bf16.msra.mxu0 %v3946
  %4006 = vmatprep.subr.bf16.mxu0 %v3951
  %4007 = vmatpush1.bf16.msra.mxu0 %v3950
  %4008 = vmatprep.subr.bf16.mxu0 %v3955
  %4009 = vmatpush1.bf16.msra.mxu0 %v3954
  %4010 = vmatprep.subr.bf16.mxu0 %v3959
  %4011 = vmatpush1.bf16.msra.mxu0 %v3958
  %4012 = vmatprep.subr.bf16.mxu0 %v3963
  %4013 = vmatpush1.bf16.msra.mxu0 %v3962
  %4014 = vmatprep.subr.bf16.mxu0 0
  %4015 = vmatpush1.bf16.msra.mxu0 0
  %4016 = vmatprep.subr.bf16.mxu0 0
  %4017 = vmatpush1.bf16.msra.mxu0 0
  %4018 = vmatprep.subr.bf16.mxu0 0
  %4019 = vmatpush1.bf16.msra.mxu0 0
  %4020 = vmatprep.subr.bf16.mxu0 0
  %4021 = vmatpush1.bf16.msra.mxu0 0
  %4022 = vmatprep.subr.bf16.mxu0 0
  %4023 = vmatpush1.bf16.msra.mxu0 0
  %4024 = vmatprep.subr.bf16.mxu0 0
  %4025 = vmatpush1.bf16.msra.mxu0 0
  %4026 = vmatprep.subr.bf16.mxu0 0
  %4027 = vmatpush1.bf16.msra.mxu0 0
  %4028 = vmatprep.subr.bf16.mxu0 0
  %4029 = vmatpush1.bf16.msra.mxu0 0
  %4030 = vmatprep.mubr.bf16.mxu0 0
  %4031 = vmatmul.mubr.bf16.gmra.mrb[0].mxu0 %v3555
  %v4032 = vpop.f32.mrb[0].mxu0
  %v4033 = vadd.f32 0.0, %v4032
  %v4034 = vpop.f32.mrb[0].mxu0
  %v4035 = vadd.f32 0.0, %v4034
  %v4036 = vpop.f32.mrb[0].mxu0
  %v4037 = vpop.f32.mrb[0].mxu0
  %4038 = vdwg.mxu0
  %4039 = vmatprep.subr.bf16.mxu0 %v3937
  %4040 = vmatpush1.bf16.msra.mxu0 %v3936
  %4041 = vmatprep.subr.bf16.mxu0 %v3941
  %4042 = vmatpush1.bf16.msra.mxu0 %v3940
  %4043 = vmatprep.subr.bf16.mxu0 %v3945
  %4044 = vmatpush1.bf16.msra.mxu0 %v3944
  %4045 = vmatprep.subr.bf16.mxu0 %v3949
  %4046 = vmatpush1.bf16.msra.mxu0 %v3948
  %4047 = vmatprep.subr.bf16.mxu0 %v3953
  %4048 = vmatpush1.bf16.msra.mxu0 %v3952
  %4049 = vmatprep.subr.bf16.mxu0 %v3957
  %4050 = vmatpush1.bf16.msra.mxu0 %v3956
  %4051 = vmatprep.subr.bf16.mxu0 %v3961
  %4052 = vmatpush1.bf16.msra.mxu0 %v3960
  %4053 = vmatprep.subr.bf16.mxu0 %v3965
  %4054 = vmatpush1.bf16.msra.mxu0 %v3964
  %4055 = vmatprep.subr.bf16.mxu0 0
  %4056 = vmatpush1.bf16.msra.mxu0 0
  %4057 = vmatprep.subr.bf16.mxu0 0
  %4058 = vmatpush1.bf16.msra.mxu0 0
  %4059 = vmatprep.subr.bf16.mxu0 0
  %4060 = vmatpush1.bf16.msra.mxu0 0
  %4061 = vmatprep.subr.bf16.mxu0 0
  %4062 = vmatpush1.bf16.msra.mxu0 0
  %4063 = vmatprep.subr.bf16.mxu0 0
  %4064 = vmatpush1.bf16.msra.mxu0 0
  %4065 = vmatprep.subr.bf16.mxu0 0
  %4066 = vmatpush1.bf16.msra.mxu0 0
  %4067 = vmatprep.subr.bf16.mxu0 0
  %4068 = vmatpush1.bf16.msra.mxu0 0
  %4069 = vmatprep.subr.bf16.mxu0 0
  %4070 = vmatpush1.bf16.msra.mxu0 0
  %4071 = vmatprep.mubr.bf16.mxu0 0
  %4072 = vmatmul.mubr.bf16.gmra.mrb[0].mxu0 %v3555
  %v4073 = vpop.f32.mrb[0].mxu0
  %v4074 = vadd.f32 0.0, %v4073
  %v4075 = vpop.f32.mrb[0].mxu0
  %v4076 = vadd.f32 0.0, %v4075
  %v4077 = vpop.f32.mrb[0].mxu0
  %v4078 = vpop.f32.mrb[0].mxu0
  %4079 = vdwg.mxu0
  %v4080 = vadd.f32 %v3802, %v4033
  %v4081 = vadd.f32 %v3803, %v4035
  %v4082 = vadd.f32 %v3804, %v4074
  %v4083 = vadd.f32 %v3805, %v4076
  %v4084 = vxor.u32 %v4080, 2147483648
  %v4085 = vmul.f32 %v4084, 1.442695
  %v4086 = vpow.pop %v4085
  %v4087 = vadd.f32 %v4086, 1.0
  %v4088 = vrcp.pop %v4087
  %v4089 = vmul.f32 1.0, %v4088
  %v4090 = vxor.u32 %v4081, 2147483648
  %v4091 = vmul.f32 %v4090, 1.442695
  %v4092 = vpow.pop %v4091
  %v4093 = vadd.f32 %v4092, 1.0
  %v4094 = vrcp.pop %v4093
  %v4095 = vmul.f32 1.0, %v4094
  %v4096 = vtanh.pop %v4082
  %v4097 = vxor.u32 %v4083, 2147483648
  %v4098 = vmul.f32 %v4097, 1.442695
  %v4099 = vpow.pop %v4098
  %v4100 = vadd.f32 %v4099, 1.0
  %v4101 = vrcp.pop %v4100
  %v4102 = vmul.f32 1.0, %v4101
  %v4103 = vmul.f32 %v4095, %v3552
  %v4104 = vmul.f32 %v4089, %v4096
  %v4105 = vadd.f32 %v4103, %v4104
  %v4106 = vtanh.pop %v4105
  %v4107 = vmul.f32 %v4102, %v4106
  %v4108 = vpack.c.bf16 %v4107, %v4107
  %v4109 = vld [vmem:[%s7] sm:$0xf]
  %v4110 = vld [vmem:[%s7 + $0x4] sm:$0xf]
  %v4111 = vld [vmem:[%s7 + $0x8] sm:$0xf]
  %v4112 = vld [vmem:[%s7 + $0xc] sm:$0xf]
  %v4113 = vld [vmem:[%s7 + $0x10] sm:$0xf]
  %v4114 = vld [vmem:[%s7 + $0x14] sm:$0xf]
  %v4115 = vld [vmem:[%s7 + $0x18] sm:$0xf]
  %v4116 = vld [vmem:[%s7 + $0x1c] sm:$0xf]
  %v4117 = vld [vmem:[%s7 + $0x20] sm:$0xf]
  %v4118 = vld [vmem:[%s7 + $0x24] sm:$0xf]
  %v4119 = vld [vmem:[%s7 + $0x28] sm:$0xf]
  %v4120 = vld [vmem:[%s7 + $0x2c] sm:$0xf]
  %v4121 = vld [vmem:[%s7 + $0x30] sm:$0xf]
  %v4122 = vld [vmem:[%s7 + $0x34] sm:$0xf]
  %v4123 = vld [vmem:[%s7 + $0x38] sm:$0xf]
  %v4124 = vld [vmem:[%s7 + $0x3c] sm:$0xf]
  %v4141 = vunpack.c.l.b16 %v4109
  %v4142 = vunpack.c.l.b16 %v4110
  %v4143 = vunpack.c.l.b16 %v4111
  %v4144 = vunpack.c.l.b16 %v4112
  %v4145 = vunpack.c.l.b16 %v4113
  %v4146 = vunpack.c.l.b16 %v4114
  %v4147 = vunpack.c.l.b16 %v4115
  %v4148 = vunpack.c.l.b16 %v4116
  %v4149 = vunpack.c.l.b16 %v4117
  %v4150 = vunpack.c.l.b16 %v4118
  %v4151 = vunpack.c.l.b16 %v4119
  %v4152 = vunpack.c.l.b16 %v4120
  %v4153 = vunpack.c.l.b16 %v4121
  %v4154 = vunpack.c.l.b16 %v4122
  %v4155 = vunpack.c.l.b16 %v4123
  %v4156 = vunpack.c.l.b16 %v4124
  %v4157 = vpack.c.b16 %v4142, %v4141
  %v4158 = vpack.c.b16 %v4144, %v4143
  %v4159 = vpack.c.b16 %v4146, %v4145
  %v4160 = vpack.c.b16 %v4148, %v4147
  %v4161 = vpack.c.b16 %v4150, %v4149
  %v4162 = vpack.c.b16 %v4152, %v4151
  %v4163 = vpack.c.b16 %v4154, %v4153
  %v4164 = vpack.c.b16 %v4156, %v4155
  %4173 = vmatprep.subr.bf16.mxu0 0
  %4174 = vmatpush1.bf16.msra.mxu0 %v4157
  %4175 = vmatprep.subr.bf16.mxu0 0
  %4176 = vmatpush1.bf16.msra.mxu0 %v4158
  %4177 = vmatprep.subr.bf16.mxu0 0
  %4178 = vmatpush1.bf16.msra.mxu0 %v4159
  %4179 = vmatprep.subr.bf16.mxu0 0
  %4180 = vmatpush1.bf16.msra.mxu0 %v4160
  %4181 = vmatprep.subr.bf16.mxu0 0
  %4182 = vmatpush1.bf16.msra.mxu0 %v4161
  %4183 = vmatprep.subr.bf16.mxu0 0
  %4184 = vmatpush1.bf16.msra.mxu0 %v4162
  %4185 = vmatprep.subr.bf16.mxu0 0
  %4186 = vmatpush1.bf16.msra.mxu0 %v4163
  %4187 = vmatprep.subr.bf16.mxu0 0
  %4188 = vmatpush1.bf16.msra.mxu0 %v4164
  %4189 = vmatprep.subr.bf16.mxu0 0
  %4190 = vmatpush1.bf16.msra.mxu0 0
  %4191 = vmatprep.subr.bf16.mxu0 0
  %4192 = vmatpush1.bf16.msra.mxu0 0
  %4193 = vmatprep.subr.bf16.mxu0 0
  %4194 = vmatpush1.bf16.msra.mxu0 0
  %4195 = vmatprep.subr.bf16.mxu0 0
  %4196 = vmatpush1.bf16.msra.mxu0 0
  %4197 = vmatprep.subr.bf16.mxu0 0
  %4198 = vmatpush1.bf16.msra.mxu0 0
  %4199 = vmatprep.subr.bf16.mxu0 0
  %4200 = vmatpush1.bf16.msra.mxu0 0
  %4201 = vmatprep.subr.bf16.mxu0 0
  %4202 = vmatpush1.bf16.msra.mxu0 0
  %4203 = vmatprep.subr.bf16.mxu0 0
  %4204 = vmatpush1.bf16.msra.mxu0 0
  %4205 = vmatprep.mubr.bf16.mxu0 0
  %4206 = vmatmul.mubr.bf16.gmra.mrb[0].mxu0 %v4108
  %v4207 = vpop.f32.mrb[0].mxu0
  %v4208 = vadd.f32 %v1901, %v4207
  %v4209 = vpop.f32.mrb[0].mxu0
  %v4210 = vpop.f32.mrb[0].mxu0
  %v4211 = vpop.f32.mrb[0].mxu0
  %4212 = vdwg.mxu0
  %v4213 = vmax.f32 %v4208, 0.0
  %v4214 = vpack.c.bf16 %v4213, %v4213
  %v4215 = vld [vmem:[%s9] sm:$0xff]
  %v4216 = vld [vmem:[%s9 + $0x8] sm:$0xff]
  %v4217 = vld [vmem:[%s9 + $0x10] sm:$0xff]
  %v4218 = vld [vmem:[%s9 + $0x18] sm:$0xff]
  %v4219 = vld [vmem:[%s9 + $0x20] sm:$0xff]
  %v4220 = vld [vmem:[%s9 + $0x28] sm:$0xff]
  %v4221 = vld [vmem:[%s9 + $0x30] sm:$0xff]
  %v4222 = vld [vmem:[%s9 + $0x38] sm:$0xff]
  %v4223 = vld [vmem:[%s9 + $0x40] sm:$0xff]
  %v4224 = vld [vmem:[%s9 + $0x48] sm:$0xff]
  %v4225 = vld [vmem:[%s9 + $0x50] sm:$0xff]
  %v4226 = vld [vmem:[%s9 + $0x58] sm:$0xff]
  %v4227 = vld [vmem:[%s9 + $0x60] sm:$0xff]
  %v4228 = vld [vmem:[%s9 + $0x68] sm:$0xff]
  %v4229 = vld [vmem:[%s9 + $0x70] sm:$0xff]
  %v4230 = vld [vmem:[%s9 + $0x78] sm:$0xff]
  %v4247 = vunpack.c.l.b16 %v4215
  %v4248 = vunpack.c.h.b16 %v4215
  %v4249 = vunpack.c.l.b16 %v4216
  %v4250 = vunpack.c.h.b16 %v4216
  %v4251 = vunpack.c.l.b16 %v4217
  %v4252 = vunpack.c.h.b16 %v4217
  %v4253 = vunpack.c.l.b16 %v4218
  %v4254 = vunpack.c.h.b16 %v4218
  %v4255 = vunpack.c.l.b16 %v4219
  %v4256 = vunpack.c.h.b16 %v4219
  %v4257 = vunpack.c.l.b16 %v4220
  %v4258 = vunpack.c.h.b16 %v4220
  %v4259 = vunpack.c.l.b16 %v4221
  %v4260 = vunpack.c.h.b16 %v4221
  %v4261 = vunpack.c.l.b16 %v4222
  %v4262 = vunpack.c.h.b16 %v4222
  %v4263 = vunpack.c.l.b16 %v4223
  %v4264 = vunpack.c.h.b16 %v4223
  %v4265 = vunpack.c.l.b16 %v4224
  %v4266 = vunpack.c.h.b16 %v4224
  %v4267 = vunpack.c.l.b16 %v4225
  %v4268 = vunpack.c.h.b16 %v4225
  %v4269 = vunpack.c.l.b16 %v4226
  %v4270 = vunpack.c.h.b16 %v4226
  %v4271 = vunpack.c.l.b16 %v4227
  %v4272 = vunpack.c.h.b16 %v4227
  %v4273 = vunpack.c.l.b16 %v4228
  %v4274 = vunpack.c.h.b16 %v4228
  %v4275 = vunpack.c.l.b16 %v4229
  %v4276 = vunpack.c.h.b16 %v4229
  %v4277 = vunpack.c.l.b16 %v4230
  %v4278 = vunpack.c.h.b16 %v4230
  %v4279 = vpack.c.b16 %v4249, %v4247
  %v4280 = vpack.c.b16 %v4250, %v4248
  %v4281 = vpack.c.b16 %v4253, %v4251
  %v4282 = vpack.c.b16 %v4254, %v4252
  %v4283 = vpack.c.b16 %v4257, %v4255
  %v4284 = vpack.c.b16 %v4258, %v4256
  %v4285 = vpack.c.b16 %v4261, %v4259
  %v4286 = vpack.c.b16 %v4262, %v4260
  %v4287 = vpack.c.b16 %v4265, %v4263
  %v4288 = vpack.c.b16 %v4266, %v4264
  %v4289 = vpack.c.b16 %v4269, %v4267
  %v4290 = vpack.c.b16 %v4270, %v4268
  %v4291 = vpack.c.b16 %v4273, %v4271
  %v4292 = vpack.c.b16 %v4274, %v4272
  %v4293 = vpack.c.b16 %v4277, %v4275
  %v4294 = vpack.c.b16 %v4278, %v4276
  %4311 = vmatprep.subr.bf16.mxu0 %v4280
  %4312 = vmatpush1.bf16.msra.mxu0 %v4279
  %4313 = vmatprep.subr.bf16.mxu0 %v4282
  %4314 = vmatpush1.bf16.msra.mxu0 %v4281
  %4315 = vmatprep.subr.bf16.mxu0 %v4284
  %4316 = vmatpush1.bf16.msra.mxu0 %v4283
  %4317 = vmatprep.subr.bf16.mxu0 %v4286
  %4318 = vmatpush1.bf16.msra.mxu0 %v4285
  %4319 = vmatprep.subr.bf16.mxu0 %v4288
  %4320 = vmatpush1.bf16.msra.mxu0 %v4287
  %4321 = vmatprep.subr.bf16.mxu0 %v4290
  %4322 = vmatpush1.bf16.msra.mxu0 %v4289
  %4323 = vmatprep.subr.bf16.mxu0 %v4292
  %4324 = vmatpush1.bf16.msra.mxu0 %v4291
  %4325 = vmatprep.subr.bf16.mxu0 %v4294
  %4326 = vmatpush1.bf16.msra.mxu0 %v4293
  %4327 = vmatprep.subr.bf16.mxu0 0
  %4328 = vmatpush1.bf16.msra.mxu0 0
  %4329 = vmatprep.subr.bf16.mxu0 0
  %4330 = vmatpush1.bf16.msra.mxu0 0
  %4331 = vmatprep.subr.bf16.mxu0 0
  %4332 = vmatpush1.bf16.msra.mxu0 0
  %4333 = vmatprep.subr.bf16.mxu0 0
  %4334 = vmatpush1.bf16.msra.mxu0 0
  %4335 = vmatprep.subr.bf16.mxu0 0
  %4336 = vmatpush1.bf16.msra.mxu0 0
  %4337 = vmatprep.subr.bf16.mxu0 0
  %4338 = vmatpush1.bf16.msra.mxu0 0
  %4339 = vmatprep.subr.bf16.mxu0 0
  %4340 = vmatpush1.bf16.msra.mxu0 0
  %4341 = vmatprep.subr.bf16.mxu0 0
  %4342 = vmatpush1.bf16.msra.mxu0 0
  %4343 = vmatprep.mubr.bf16.mxu0 0
  %4344 = vmatmul.mubr.bf16.gmra.mrb[0].mxu0 %v4214
  %v4345 = vpop.f32.mrb[0].mxu0
  %v4346 = vadd.f32 %v2013, %v4345
  %v4347 = vpop.f32.mrb[0].mxu0
  %v4348 = vadd.f32 %v2017, %v4347
  %v4349 = vpop.f32.mrb[0].mxu0
  %v4350 = vpop.f32.mrb[0].mxu0
  %4351 = vdwg.mxu0
  %s4352 = scalar_lea.vmem %s11, 64
  %4353 = vst [vmem:[%s4352] sm:$0xff] %v4346
  %4354 = vst [vmem:[%s4352 + $0x8] sm:$0xff] %v4348
  %v4355 = vld [vmem:[#allocation3 + $0xa0] sm:$0xff]
  %v4356 = vld [vmem:[#allocation3 + $0xa8] sm:$0xff]
  %v4357 = vld [vmem:[#allocation3 + $0xb0] sm:$0xff]
  %v4358 = vld [vmem:[#allocation3 + $0xb8] sm:$0xff]
  %v4359 = vld [vmem:[%s5] sm:$0xff]
  %v4360 = vld [vmem:[%s5 + $0x8] sm:$0xff]
  %v4361 = vld [vmem:[%s5 + $0x10] sm:$0xff]
  %v4362 = vld [vmem:[%s5 + $0x18] sm:$0xff]
  %v4363 = vld [vmem:[%s5 + $0x20] sm:$0xff]
  %v4364 = vld [vmem:[%s5 + $0x28] sm:$0xff]
  %v4365 = vld [vmem:[%s5 + $0x30] sm:$0xff]
  %v4366 = vld [vmem:[%s5 + $0x38] sm:$0xff]
  %v4367 = vld [vmem:[%s5 + $0x40] sm:$0xff]
  %v4368 = vld [vmem:[%s5 + $0x48] sm:$0xff]
  %v4369 = vld [vmem:[%s5 + $0x50] sm:$0xff]
  %v4370 = vld [vmem:[%s5 + $0x58] sm:$0xff]
  %v4371 = vld [vmem:[%s5 + $0x60] sm:$0xff]
  %v4372 = vld [vmem:[%s5 + $0x68] sm:$0xff]
  %v4373 = vld [vmem:[%s5 + $0x70] sm:$0xff]
  %v4374 = vld [vmem:[%s5 + $0x78] sm:$0xff]
  %v4375 = vld [vmem:[%s5 + $0x80] sm:$0xff]
  %v4376 = vld [vmem:[%s5 + $0x88] sm:$0xff]
  %v4377 = vld [vmem:[%s5 + $0x90] sm:$0xff]
  %v4378 = vld [vmem:[%s5 + $0x98] sm:$0xff]
  %v4379 = vld [vmem:[%s5 + $0xa0] sm:$0xff]
  %v4380 = vld [vmem:[%s5 + $0xa8] sm:$0xff]
  %v4381 = vld [vmem:[%s5 + $0xb0] sm:$0xff]
  %v4382 = vld [vmem:[%s5 + $0xb8] sm:$0xff]
  %v4383 = vld [vmem:[%s5 + $0xc0] sm:$0xff]
  %v4384 = vld [vmem:[%s5 + $0xc8] sm:$0xff]
  %v4385 = vld [vmem:[%s5 + $0xd0] sm:$0xff]
  %v4386 = vld [vmem:[%s5 + $0xd8] sm:$0xff]
  %v4387 = vld [vmem:[%s5 + $0xe0] sm:$0xff]
  %v4388 = vld [vmem:[%s5 + $0xe8] sm:$0xff]
  %v4389 = vld [vmem:[%s5 + $0xf0] sm:$0xff]
  %v4390 = vld [vmem:[%s5 + $0xf8] sm:$0xff]
  %v4423 = vunpack.c.l.b16 %v4359
  %v4424 = vunpack.c.h.b16 %v4359
  %v4425 = vunpack.c.l.b16 %v4360
  %v4426 = vunpack.c.h.b16 %v4360
  %v4427 = vunpack.c.l.b16 %v4361
  %v4428 = vunpack.c.h.b16 %v4361
  %v4429 = vunpack.c.l.b16 %v4362
  %v4430 = vunpack.c.h.b16 %v4362
  %v4431 = vunpack.c.l.b16 %v4363
  %v4432 = vunpack.c.h.b16 %v4363
  %v4433 = vunpack.c.l.b16 %v4364
  %v4434 = vunpack.c.h.b16 %v4364
  %v4435 = vunpack.c.l.b16 %v4365
  %v4436 = vunpack.c.h.b16 %v4365
  %v4437 = vunpack.c.l.b16 %v4366
  %v4438 = vunpack.c.h.b16 %v4366
  %v4439 = vunpack.c.l.b16 %v4367
  %v4440 = vunpack.c.h.b16 %v4367
  %v4441 = vunpack.c.l.b16 %v4368
  %v4442 = vunpack.c.h.b16 %v4368
  %v4443 = vunpack.c.l.b16 %v4369
  %v4444 = vunpack.c.h.b16 %v4369
  %v4445 = vunpack.c.l.b16 %v4370
  %v4446 = vunpack.c.h.b16 %v4370
  %v4447 = vunpack.c.l.b16 %v4371
  %v4448 = vunpack.c.h.b16 %v4371
  %v4449 = vunpack.c.l.b16 %v4372
  %v4450 = vunpack.c.h.b16 %v4372
  %v4451 = vunpack.c.l.b16 %v4373
  %v4452 = vunpack.c.h.b16 %v4373
  %v4453 = vunpack.c.l.b16 %v4374
  %v4454 = vunpack.c.h.b16 %v4374
  %v4455 = vunpack.c.l.b16 %v4375
  %v4456 = vunpack.c.h.b16 %v4375
  %v4457 = vunpack.c.l.b16 %v4376
  %v4458 = vunpack.c.h.b16 %v4376
  %v4459 = vunpack.c.l.b16 %v4377
  %v4460 = vunpack.c.h.b16 %v4377
  %v4461 = vunpack.c.l.b16 %v4378
  %v4462 = vunpack.c.h.b16 %v4378
  %v4463 = vunpack.c.l.b16 %v4379
  %v4464 = vunpack.c.h.b16 %v4379
  %v4465 = vunpack.c.l.b16 %v4380
  %v4466 = vunpack.c.h.b16 %v4380
  %v4467 = vunpack.c.l.b16 %v4381
  %v4468 = vunpack.c.h.b16 %v4381
  %v4469 = vunpack.c.l.b16 %v4382
  %v4470 = vunpack.c.h.b16 %v4382
  %v4471 = vunpack.c.l.b16 %v4383
  %v4472 = vunpack.c.h.b16 %v4383
  %v4473 = vunpack.c.l.b16 %v4384
  %v4474 = vunpack.c.h.b16 %v4384
  %v4475 = vunpack.c.l.b16 %v4385
  %v4476 = vunpack.c.h.b16 %v4385
  %v4477 = vunpack.c.l.b16 %v4386
  %v4478 = vunpack.c.h.b16 %v4386
  %v4479 = vunpack.c.l.b16 %v4387
  %v4480 = vunpack.c.h.b16 %v4387
  %v4481 = vunpack.c.l.b16 %v4388
  %v4482 = vunpack.c.h.b16 %v4388
  %v4483 = vunpack.c.l.b16 %v4389
  %v4484 = vunpack.c.h.b16 %v4389
  %v4485 = vunpack.c.l.b16 %v4390
  %v4486 = vunpack.c.h.b16 %v4390
  %v4487 = vpack.c.b16 %v4427, %v4423
  %v4488 = vpack.c.b16 %v4428, %v4424
  %v4489 = vpack.c.b16 %v4429, %v4425
  %v4490 = vpack.c.b16 %v4430, %v4426
  %v4491 = vpack.c.b16 %v4435, %v4431
  %v4492 = vpack.c.b16 %v4436, %v4432
  %v4493 = vpack.c.b16 %v4437, %v4433
  %v4494 = vpack.c.b16 %v4438, %v4434
  %v4495 = vpack.c.b16 %v4443, %v4439
  %v4496 = vpack.c.b16 %v4444, %v4440
  %v4497 = vpack.c.b16 %v4445, %v4441
  %v4498 = vpack.c.b16 %v4446, %v4442
  %v4499 = vpack.c.b16 %v4451, %v4447
  %v4500 = vpack.c.b16 %v4452, %v4448
  %v4501 = vpack.c.b16 %v4453, %v4449
  %v4502 = vpack.c.b16 %v4454, %v4450
  %v4503 = vpack.c.b16 %v4459, %v4455
  %v4504 = vpack.c.b16 %v4460, %v4456
  %v4505 = vpack.c.b16 %v4461, %v4457
  %v4506 = vpack.c.b16 %v4462, %v4458
  %v4507 = vpack.c.b16 %v4467, %v4463
  %v4508 = vpack.c.b16 %v4468, %v4464
  %v4509 = vpack.c.b16 %v4469, %v4465
  %v4510 = vpack.c.b16 %v4470, %v4466
  %v4511 = vpack.c.b16 %v4475, %v4471
  %v4512 = vpack.c.b16 %v4476, %v4472
  %v4513 = vpack.c.b16 %v4477, %v4473
  %v4514 = vpack.c.b16 %v4478, %v4474
  %v4515 = vpack.c.b16 %v4483, %v4479
  %v4516 = vpack.c.b16 %v4484, %v4480
  %v4517 = vpack.c.b16 %v4485, %v4481
  %v4518 = vpack.c.b16 %v4486, %v4482
  %4551 = vmatprep.subr.bf16.mxu0 %v4488
  %4552 = vmatpush1.bf16.msra.mxu0 %v4487
  %4553 = vmatprep.subr.bf16.mxu0 %v4492
  %4554 = vmatpush1.bf16.msra.mxu0 %v4491
  %4555 = vmatprep.subr.bf16.mxu0 %v4496
  %4556 = vmatpush1.bf16.msra.mxu0 %v4495
  %4557 = vmatprep.subr.bf16.mxu0 %v4500
  %4558 = vmatpush1.bf16.msra.mxu0 %v4499
  %4559 = vmatprep.subr.bf16.mxu0 %v4504
  %4560 = vmatpush1.bf16.msra.mxu0 %v4503
  %4561 = vmatprep.subr.bf16.mxu0 %v4508
  %4562 = vmatpush1.bf16.msra.mxu0 %v4507
  %4563 = vmatprep.subr.bf16.mxu0 %v4512
  %4564 = vmatpush1.bf16.msra.mxu0 %v4511
  %4565 = vmatprep.subr.bf16.mxu0 %v4516
  %4566 = vmatpush1.bf16.msra.mxu0 %v4515
  %4567 = vmatprep.subr.bf16.mxu0 0
  %4568 = vmatpush1.bf16.msra.mxu0 0
  %4569 = vmatprep.subr.bf16.mxu0 0
  %4570 = vmatpush1.bf16.msra.mxu0 0
  %4571 = vmatprep.subr.bf16.mxu0 0
  %4572 = vmatpush1.bf16.msra.mxu0 0
  %4573 = vmatprep.subr.bf16.mxu0 0
  %4574 = vmatpush1.bf16.msra.mxu0 0
  %4575 = vmatprep.subr.bf16.mxu0 0
  %4576 = vmatpush1.bf16.msra.mxu0 0
  %4577 = vmatprep.subr.bf16.mxu0 0
  %4578 = vmatpush1.bf16.msra.mxu0 0
  %4579 = vmatprep.subr.bf16.mxu0 0
  %4580 = vmatpush1.bf16.msra.mxu0 0
  %4581 = vmatprep.subr.bf16.mxu0 0
  %4582 = vmatpush1.bf16.msra.mxu0 0
  %4583 = vmatprep.mubr.bf16.mxu0 0
  %4584 = vmatmul.mubr.bf16.gmra.mrb[0].mxu0 %v4108
  %v4585 = vpop.f32.mrb[0].mxu0
  %v4586 = vadd.f32 0.0, %v4585
  %v4587 = vpop.f32.mrb[0].mxu0
  %v4588 = vadd.f32 0.0, %v4587
  %v4589 = vpop.f32.mrb[0].mxu0
  %v4590 = vpop.f32.mrb[0].mxu0
  %4591 = vdwg.mxu0
  %4592 = vmatprep.subr.bf16.mxu0 %v4490
  %4593 = vmatpush1.bf16.msra.mxu0 %v4489
  %4594 = vmatprep.subr.bf16.mxu0 %v4494
  %4595 = vmatpush1.bf16.msra.mxu0 %v4493
  %4596 = vmatprep.subr.bf16.mxu0 %v4498
  %4597 = vmatpush1.bf16.msra.mxu0 %v4497
  %4598 = vmatprep.subr.bf16.mxu0 %v4502
  %4599 = vmatpush1.bf16.msra.mxu0 %v4501
  %4600 = vmatprep.subr.bf16.mxu0 %v4506
  %4601 = vmatpush1.bf16.msra.mxu0 %v4505
  %4602 = vmatprep.subr.bf16.mxu0 %v4510
  %4603 = vmatpush1.bf16.msra.mxu0 %v4509
  %4604 = vmatprep.subr.bf16.mxu0 %v4514
  %4605 = vmatpush1.bf16.msra.mxu0 %v4513
  %4606 = vmatprep.subr.bf16.mxu0 %v4518
  %4607 = vmatpush1.bf16.msra.mxu0 %v4517
  %4608 = vmatprep.subr.bf16.mxu0 0
  %4609 = vmatpush1.bf16.msra.mxu0 0
  %4610 = vmatprep.subr.bf16.mxu0 0
  %4611 = vmatpush1.bf16.msra.mxu0 0
  %4612 = vmatprep.subr.bf16.mxu0 0
  %4613 = vmatpush1.bf16.msra.mxu0 0
  %4614 = vmatprep.subr.bf16.mxu0 0
  %4615 = vmatpush1.bf16.msra.mxu0 0
  %4616 = vmatprep.subr.bf16.mxu0 0
  %4617 = vmatpush1.bf16.msra.mxu0 0
  %4618 = vmatprep.subr.bf16.mxu0 0
  %4619 = vmatpush1.bf16.msra.mxu0 0
  %4620 = vmatprep.subr.bf16.mxu0 0
  %4621 = vmatpush1.bf16.msra.mxu0 0
  %4622 = vmatprep.subr.bf16.mxu0 0
  %4623 = vmatpush1.bf16.msra.mxu0 0
  %4624 = vmatprep.mubr.bf16.mxu0 0
  %4625 = vmatmul.mubr.bf16.gmra.mrb[0].mxu0 %v4108
  %v4626 = vpop.f32.mrb[0].mxu0
  %v4627 = vadd.f32 0.0, %v4626
  %v4628 = vpop.f32.mrb[0].mxu0
  %v4629 = vadd.f32 0.0, %v4628
  %v4630 = vpop.f32.mrb[0].mxu0
  %v4631 = vpop.f32.mrb[0].mxu0
  %4632 = vdwg.mxu0
  %v4633 = vadd.f32 %v4355, %v4586
  %v4634 = vadd.f32 %v4356, %v4588
  %v4635 = vadd.f32 %v4357, %v4627
  %v4636 = vadd.f32 %v4358, %v4629
  %v4637 = vxor.u32 %v4633, 2147483648
  %v4638 = vmul.f32 %v4637, 1.442695
  %v4639 = vpow.pop %v4638
  %v4640 = vadd.f32 %v4639, 1.0
  %v4641 = vrcp.pop %v4640
  %v4642 = vmul.f32 1.0, %v4641
  %v4643 = vxor.u32 %v4634, 2147483648
  %v4644 = vmul.f32 %v4643, 1.442695
  %v4645 = vpow.pop %v4644
  %v4646 = vadd.f32 %v4645, 1.0
  %v4647 = vrcp.pop %v4646
  %v4648 = vmul.f32 1.0, %v4647
  %v4649 = vtanh.pop %v4635
  %v4650 = vxor.u32 %v4636, 2147483648
  %v4651 = vmul.f32 %v4650, 1.442695
  %v4652 = vpow.pop %v4651
  %v4653 = vadd.f32 %v4652, 1.0
  %v4654 = vrcp.pop %v4653
  %v4655 = vmul.f32 1.0, %v4654
  %v4656 = vmul.f32 %v4648, %v4105
  %v4657 = vmul.f32 %v4642, %v4649
  %v4658 = vadd.f32 %v4656, %v4657
  %v4659 = vtanh.pop %v4658
  %v4660 = vmul.f32 %v4655, %v4659
  %v4661 = vpack.c.bf16 %v4660, %v4660
  %v4662 = vld [vmem:[%s7] sm:$0xf]
  %v4663 = vld [vmem:[%s7 + $0x4] sm:$0xf]
  %v4664 = vld [vmem:[%s7 + $0x8] sm:$0xf]
  %v4665 = vld [vmem:[%s7 + $0xc] sm:$0xf]
  %v4666 = vld [vmem:[%s7 + $0x10] sm:$0xf]
  %v4667 = vld [vmem:[%s7 + $0x14] sm:$0xf]
  %v4668 = vld [vmem:[%s7 + $0x18] sm:$0xf]
  %v4669 = vld [vmem:[%s7 + $0x1c] sm:$0xf]
  %v4670 = vld [vmem:[%s7 + $0x20] sm:$0xf]
  %v4671 = vld [vmem:[%s7 + $0x24] sm:$0xf]
  %v4672 = vld [vmem:[%s7 + $0x28] sm:$0xf]
  %v4673 = vld [vmem:[%s7 + $0x2c] sm:$0xf]
  %v4674 = vld [vmem:[%s7 + $0x30] sm:$0xf]
  %v4675 = vld [vmem:[%s7 + $0x34] sm:$0xf]
  %v4676 = vld [vmem:[%s7 + $0x38] sm:$0xf]
  %v4677 = vld [vmem:[%s7 + $0x3c] sm:$0xf]
  %v4694 = vunpack.c.l.b16 %v4662
  %v4695 = vunpack.c.l.b16 %v4663
  %v4696 = vunpack.c.l.b16 %v4664
  %v4697 = vunpack.c.l.b16 %v4665
  %v4698 = vunpack.c.l.b16 %v4666
  %v4699 = vunpack.c.l.b16 %v4667
  %v4700 = vunpack.c.l.b16 %v4668
  %v4701 = vunpack.c.l.b16 %v4669
  %v4702 = vunpack.c.l.b16 %v4670
  %v4703 = vunpack.c.l.b16 %v4671
  %v4704 = vunpack.c.l.b16 %v4672
  %v4705 = vunpack.c.l.b16 %v4673
  %v4706 = vunpack.c.l.b16 %v4674
  %v4707 = vunpack.c.l.b16 %v4675
  %v4708 = vunpack.c.l.b16 %v4676
  %v4709 = vunpack.c.l.b16 %v4677
  %v4710 = vpack.c.b16 %v4695, %v4694
  %v4711 = vpack.c.b16 %v4697, %v4696
  %v4712 = vpack.c.b16 %v4699, %v4698
  %v4713 = vpack.c.b16 %v4701, %v4700
  %v4714 = vpack.c.b16 %v4703, %v4702
  %v4715 = vpack.c.b16 %v4705, %v4704
  %v4716 = vpack.c.b16 %v4707, %v4706
  %v4717 = vpack.c.b16 %v4709, %v4708
  %4726 = vmatprep.subr.bf16.mxu0 0
  %4727 = vmatpush1.bf16.msra.mxu0 %v4710
  %4728 = vmatprep.subr.bf16.mxu0 0
  %4729 = vmatpush1.bf16.msra.mxu0 %v4711
  %4730 = vmatprep.subr.bf16.mxu0 0
  %4731 = vmatpush1.bf16.msra.mxu0 %v4712
  %4732 = vmatprep.subr.bf16.mxu0 0
  %4733 = vmatpush1.bf16.msra.mxu0 %v4713
  %4734 = vmatprep.subr.bf16.mxu0 0
  %4735 = vmatpush1.bf16.msra.mxu0 %v4714
  %4736 = vmatprep.subr.bf16.mxu0 0
  %4737 = vmatpush1.bf16.msra.mxu0 %v4715
  %4738 = vmatprep.subr.bf16.mxu0 0
  %4739 = vmatpush1.bf16.msra.mxu0 %v4716
  %4740 = vmatprep.subr.bf16.mxu0 0
  %4741 = vmatpush1.bf16.msra.mxu0 %v4717
  %4742 = vmatprep.subr.bf16.mxu0 0
  %4743 = vmatpush1.bf16.msra.mxu0 0
  %4744 = vmatprep.subr.bf16.mxu0 0
  %4745 = vmatpush1.bf16.msra.mxu0 0
  %4746 = vmatprep.subr.bf16.mxu0 0
  %4747 = vmatpush1.bf16.msra.mxu0 0
  %4748 = vmatprep.subr.bf16.mxu0 0
  %4749 = vmatpush1.bf16.msra.mxu0 0
  %4750 = vmatprep.subr.bf16.mxu0 0
  %4751 = vmatpush1.bf16.msra.mxu0 0
  %4752 = vmatprep.subr.bf16.mxu0 0
  %4753 = vmatpush1.bf16.msra.mxu0 0
  %4754 = vmatprep.subr.bf16.mxu0 0
  %4755 = vmatpush1.bf16.msra.mxu0 0
  %4756 = vmatprep.subr.bf16.mxu0 0
  %4757 = vmatpush1.bf16.msra.mxu0 0
  %4758 = vmatprep.mubr.bf16.mxu0 0
  %4759 = vmatmul.mubr.bf16.gmra.mrb[0].mxu0 %v4661
  %v4760 = vpop.f32.mrb[0].mxu0
  %v4761 = vadd.f32 %v1901, %v4760
  %v4762 = vpop.f32.mrb[0].mxu0
  %v4763 = vpop.f32.mrb[0].mxu0
  %v4764 = vpop.f32.mrb[0].mxu0
  %4765 = vdwg.mxu0
  %v4766 = vmax.f32 %v4761, 0.0
  %v4767 = vpack.c.bf16 %v4766, %v4766
  %v4768 = vld [vmem:[%s9] sm:$0xff]
  %v4769 = vld [vmem:[%s9 + $0x8] sm:$0xff]
  %v4770 = vld [vmem:[%s9 + $0x10] sm:$0xff]
  %v4771 = vld [vmem:[%s9 + $0x18] sm:$0xff]
  %v4772 = vld [vmem:[%s9 + $0x20] sm:$0xff]
  %v4773 = vld [vmem:[%s9 + $0x28] sm:$0xff]
  %v4774 = vld [vmem:[%s9 + $0x30] sm:$0xff]
  %v4775 = vld [vmem:[%s9 + $0x38] sm:$0xff]
  %v4776 = vld [vmem:[%s9 + $0x40] sm:$0xff]
  %v4777 = vld [vmem:[%s9 + $0x48] sm:$0xff]
  %v4778 = vld [vmem:[%s9 + $0x50] sm:$0xff]
  %v4779 = vld [vmem:[%s9 + $0x58] sm:$0xff]
  %v4780 = vld [vmem:[%s9 + $0x60] sm:$0xff]
  %v4781 = vld [vmem:[%s9 + $0x68] sm:$0xff]
  %v4782 = vld [vmem:[%s9 + $0x70] sm:$0xff]
  %v4783 = vld [vmem:[%s9 + $0x78] sm:$0xff]
  %v4800 = vunpack.c.l.b16 %v4768
  %v4801 = vunpack.c.h.b16 %v4768
  %v4802 = vunpack.c.l.b16 %v4769
  %v4803 = vunpack.c.h.b16 %v4769
  %v4804 = vunpack.c.l.b16 %v4770
  %v4805 = vunpack.c.h.b16 %v4770
  %v4806 = vunpack.c.l.b16 %v4771
  %v4807 = vunpack.c.h.b16 %v4771
  %v4808 = vunpack.c.l.b16 %v4772
  %v4809 = vunpack.c.h.b16 %v4772
  %v4810 = vunpack.c.l.b16 %v4773
  %v4811 = vunpack.c.h.b16 %v4773
  %v4812 = vunpack.c.l.b16 %v4774
  %v4813 = vunpack.c.h.b16 %v4774
  %v4814 = vunpack.c.l.b16 %v4775
  %v4815 = vunpack.c.h.b16 %v4775
  %v4816 = vunpack.c.l.b16 %v4776
  %v4817 = vunpack.c.h.b16 %v4776
  %v4818 = vunpack.c.l.b16 %v4777
  %v4819 = vunpack.c.h.b16 %v4777
  %v4820 = vunpack.c.l.b16 %v4778
  %v4821 = vunpack.c.h.b16 %v4778
  %v4822 = vunpack.c.l.b16 %v4779
  %v4823 = vunpack.c.h.b16 %v4779
  %v4824 = vunpack.c.l.b16 %v4780
  %v4825 = vunpack.c.h.b16 %v4780
  %v4826 = vunpack.c.l.b16 %v4781
  %v4827 = vunpack.c.h.b16 %v4781
  %v4828 = vunpack.c.l.b16 %v4782
  %v4829 = vunpack.c.h.b16 %v4782
  %v4830 = vunpack.c.l.b16 %v4783
  %v4831 = vunpack.c.h.b16 %v4783
  %v4832 = vpack.c.b16 %v4802, %v4800
  %v4833 = vpack.c.b16 %v4803, %v4801
  %v4834 = vpack.c.b16 %v4806, %v4804
  %v4835 = vpack.c.b16 %v4807, %v4805
  %v4836 = vpack.c.b16 %v4810, %v4808
  %v4837 = vpack.c.b16 %v4811, %v4809
  %v4838 = vpack.c.b16 %v4814, %v4812
  %v4839 = vpack.c.b16 %v4815, %v4813
  %v4840 = vpack.c.b16 %v4818, %v4816
  %v4841 = vpack.c.b16 %v4819, %v4817
  %v4842 = vpack.c.b16 %v4822, %v4820
  %v4843 = vpack.c.b16 %v4823, %v4821
  %v4844 = vpack.c.b16 %v4826, %v4824
  %v4845 = vpack.c.b16 %v4827, %v4825
  %v4846 = vpack.c.b16 %v4830, %v4828
  %v4847 = vpack.c.b16 %v4831, %v4829
  %4864 = vmatprep.subr.bf16.mxu0 %v4833
  %4865 = vmatpush1.bf16.msra.mxu0 %v4832
  %4866 = vmatprep.subr.bf16.mxu0 %v4835
  %4867 = vmatpush1.bf16.msra.mxu0 %v4834
  %4868 = vmatprep.subr.bf16.mxu0 %v4837
  %4869 = vmatpush1.bf16.msra.mxu0 %v4836
  %4870 = vmatprep.subr.bf16.mxu0 %v4839
  %4871 = vmatpush1.bf16.msra.mxu0 %v4838
  %4872 = vmatprep.subr.bf16.mxu0 %v4841
  %4873 = vmatpush1.bf16.msra.mxu0 %v4840
  %4874 = vmatprep.subr.bf16.mxu0 %v4843
  %4875 = vmatpush1.bf16.msra.mxu0 %v4842
  %4876 = vmatprep.subr.bf16.mxu0 %v4845
  %4877 = vmatpush1.bf16.msra.mxu0 %v4844
  %4878 = vmatprep.subr.bf16.mxu0 %v4847
  %4879 = vmatpush1.bf16.msra.mxu0 %v4846
  %4880 = vmatprep.subr.bf16.mxu0 0
  %4881 = vmatpush1.bf16.msra.mxu0 0
  %4882 = vmatprep.subr.bf16.mxu0 0
  %4883 = vmatpush1.bf16.msra.mxu0 0
  %4884 = vmatprep.subr.bf16.mxu0 0
  %4885 = vmatpush1.bf16.msra.mxu0 0
  %4886 = vmatprep.subr.bf16.mxu0 0
  %4887 = vmatpush1.bf16.msra.mxu0 0
  %4888 = vmatprep.subr.bf16.mxu0 0
  %4889 = vmatpush1.bf16.msra.mxu0 0
  %4890 = vmatprep.subr.bf16.mxu0 0
  %4891 = vmatpush1.bf16.msra.mxu0 0
  %4892 = vmatprep.subr.bf16.mxu0 0
  %4893 = vmatpush1.bf16.msra.mxu0 0
  %4894 = vmatprep.subr.bf16.mxu0 0
  %4895 = vmatpush1.bf16.msra.mxu0 0
  %4896 = vmatprep.mubr.bf16.mxu0 0
  %4897 = vmatmul.mubr.bf16.gmra.mrb[0].mxu0 %v4767
  %v4898 = vpop.f32.mrb[0].mxu0
  %v4899 = vadd.f32 %v2013, %v4898
  %v4900 = vpop.f32.mrb[0].mxu0
  %v4901 = vadd.f32 %v2017, %v4900
  %v4902 = vpop.f32.mrb[0].mxu0
  %v4903 = vpop.f32.mrb[0].mxu0
  %4904 = vdwg.mxu0
  %s4905 = scalar_lea.vmem %s11, 80
  %4906 = vst [vmem:[%s4905] sm:$0xff] %v4899
  %4907 = vst [vmem:[%s4905 + $0x8] sm:$0xff] %v4901
  %v4908 = vld [vmem:[#allocation3 + $0xc0] sm:$0xff]
  %v4909 = vld [vmem:[#allocation3 + $0xc8] sm:$0xff]
  %v4910 = vld [vmem:[#allocation3 + $0xd0] sm:$0xff]
  %v4911 = vld [vmem:[#allocation3 + $0xd8] sm:$0xff]
  %v4912 = vld [vmem:[%s5] sm:$0xff]
  %v4913 = vld [vmem:[%s5 + $0x8] sm:$0xff]
  %v4914 = vld [vmem:[%s5 + $0x10] sm:$0xff]
  %v4915 = vld [vmem:[%s5 + $0x18] sm:$0xff]
  %v4916 = vld [vmem:[%s5 + $0x20] sm:$0xff]
  %v4917 = vld [vmem:[%s5 + $0x28] sm:$0xff]
  %v4918 = vld [vmem:[%s5 + $0x30] sm:$0xff]
  %v4919 = vld [vmem:[%s5 + $0x38] sm:$0xff]
  %v4920 = vld [vmem:[%s5 + $0x40] sm:$0xff]
  %v4921 = vld [vmem:[%s5 + $0x48] sm:$0xff]
  %v4922 = vld [vmem:[%s5 + $0x50] sm:$0xff]
  %v4923 = vld [vmem:[%s5 + $0x58] sm:$0xff]
  %v4924 = vld [vmem:[%s5 + $0x60] sm:$0xff]
  %v4925 = vld [vmem:[%s5 + $0x68] sm:$0xff]
  %v4926 = vld [vmem:[%s5 + $0x70] sm:$0xff]
  %v4927 = vld [vmem:[%s5 + $0x78] sm:$0xff]
  %v4928 = vld [vmem:[%s5 + $0x80] sm:$0xff]
  %v4929 = vld [vmem:[%s5 + $0x88] sm:$0xff]
  %v4930 = vld [vmem:[%s5 + $0x90] sm:$0xff]
  %v4931 = vld [vmem:[%s5 + $0x98] sm:$0xff]
  %v4932 = vld [vmem:[%s5 + $0xa0] sm:$0xff]
  %v4933 = vld [vmem:[%s5 + $0xa8] sm:$0xff]
  %v4934 = vld [vmem:[%s5 + $0xb0] sm:$0xff]
  %v4935 = vld [vmem:[%s5 + $0xb8] sm:$0xff]
  %v4936 = vld [vmem:[%s5 + $0xc0] sm:$0xff]
  %v4937 = vld [vmem:[%s5 + $0xc8] sm:$0xff]
  %v4938 = vld [vmem:[%s5 + $0xd0] sm:$0xff]
  %v4939 = vld [vmem:[%s5 + $0xd8] sm:$0xff]
  %v4940 = vld [vmem:[%s5 + $0xe0] sm:$0xff]
  %v4941 = vld [vmem:[%s5 + $0xe8] sm:$0xff]
  %v4942 = vld [vmem:[%s5 + $0xf0] sm:$0xff]
  %v4943 = vld [vmem:[%s5 + $0xf8] sm:$0xff]
  %v4976 = vunpack.c.l.b16 %v4912
  %v4977 = vunpack.c.h.b16 %v4912
  %v4978 = vunpack.c.l.b16 %v4913
  %v4979 = vunpack.c.h.b16 %v4913
  %v4980 = vunpack.c.l.b16 %v4914
  %v4981 = vunpack.c.h.b16 %v4914
  %v4982 = vunpack.c.l.b16 %v4915
  %v4983 = vunpack.c.h.b16 %v4915
  %v4984 = vunpack.c.l.b16 %v4916
  %v4985 = vunpack.c.h.b16 %v4916
  %v4986 = vunpack.c.l.b16 %v4917
  %v4987 = vunpack.c.h.b16 %v4917
  %v4988 = vunpack.c.l.b16 %v4918
  %v4989 = vunpack.c.h.b16 %v4918
  %v4990 = vunpack.c.l.b16 %v4919
  %v4991 = vunpack.c.h.b16 %v4919
  %v4992 = vunpack.c.l.b16 %v4920
  %v4993 = vunpack.c.h.b16 %v4920
  %v4994 = vunpack.c.l.b16 %v4921
  %v4995 = vunpack.c.h.b16 %v4921
  %v4996 = vunpack.c.l.b16 %v4922
  %v4997 = vunpack.c.h.b16 %v4922
  %v4998 = vunpack.c.l.b16 %v4923
  %v4999 = vunpack.c.h.b16 %v4923
  %v5000 = vunpack.c.l.b16 %v4924
  %v5001 = vunpack.c.h.b16 %v4924
  %v5002 = vunpack.c.l.b16 %v4925
  %v5003 = vunpack.c.h.b16 %v4925
  %v5004 = vunpack.c.l.b16 %v4926
  %v5005 = vunpack.c.h.b16 %v4926
  %v5006 = vunpack.c.l.b16 %v4927
  %v5007 = vunpack.c.h.b16 %v4927
  %v5008 = vunpack.c.l.b16 %v4928
  %v5009 = vunpack.c.h.b16 %v4928
  %v5010 = vunpack.c.l.b16 %v4929
  %v5011 = vunpack.c.h.b16 %v4929
  %v5012 = vunpack.c.l.b16 %v4930
  %v5013 = vunpack.c.h.b16 %v4930
  %v5014 = vunpack.c.l.b16 %v4931
  %v5015 = vunpack.c.h.b16 %v4931
  %v5016 = vunpack.c.l.b16 %v4932
  %v5017 = vunpack.c.h.b16 %v4932
  %v5018 = vunpack.c.l.b16 %v4933
  %v5019 = vunpack.c.h.b16 %v4933
  %v5020 = vunpack.c.l.b16 %v4934
  %v5021 = vunpack.c.h.b16 %v4934
  %v5022 = vunpack.c.l.b16 %v4935
  %v5023 = vunpack.c.h.b16 %v4935
  %v5024 = vunpack.c.l.b16 %v4936
  %v5025 = vunpack.c.h.b16 %v4936
  %v5026 = vunpack.c.l.b16 %v4937
  %v5027 = vunpack.c.h.b16 %v4937
  %v5028 = vunpack.c.l.b16 %v4938
  %v5029 = vunpack.c.h.b16 %v4938
  %v5030 = vunpack.c.l.b16 %v4939
  %v5031 = vunpack.c.h.b16 %v4939
  %v5032 = vunpack.c.l.b16 %v4940
  %v5033 = vunpack.c.h.b16 %v4940
  %v5034 = vunpack.c.l.b16 %v4941
  %v5035 = vunpack.c.h.b16 %v4941
  %v5036 = vunpack.c.l.b16 %v4942
  %v5037 = vunpack.c.h.b16 %v4942
  %v5038 = vunpack.c.l.b16 %v4943
  %v5039 = vunpack.c.h.b16 %v4943
  %v5040 = vpack.c.b16 %v4980, %v4976
  %v5041 = vpack.c.b16 %v4981, %v4977
  %v5042 = vpack.c.b16 %v4982, %v4978
  %v5043 = vpack.c.b16 %v4983, %v4979
  %v5044 = vpack.c.b16 %v4988, %v4984
  %v5045 = vpack.c.b16 %v4989, %v4985
  %v5046 = vpack.c.b16 %v4990, %v4986
  %v5047 = vpack.c.b16 %v4991, %v4987
  %v5048 = vpack.c.b16 %v4996, %v4992
  %v5049 = vpack.c.b16 %v4997, %v4993
  %v5050 = vpack.c.b16 %v4998, %v4994
  %v5051 = vpack.c.b16 %v4999, %v4995
  %v5052 = vpack.c.b16 %v5004, %v5000
  %v5053 = vpack.c.b16 %v5005, %v5001
  %v5054 = vpack.c.b16 %v5006, %v5002
  %v5055 = vpack.c.b16 %v5007, %v5003
  %v5056 = vpack.c.b16 %v5012, %v5008
  %v5057 = vpack.c.b16 %v5013, %v5009
  %v5058 = vpack.c.b16 %v5014, %v5010
  %v5059 = vpack.c.b16 %v5015, %v5011
  %v5060 = vpack.c.b16 %v5020, %v5016
  %v5061 = vpack.c.b16 %v5021, %v5017
  %v5062 = vpack.c.b16 %v5022, %v5018
  %v5063 = vpack.c.b16 %v5023, %v5019
  %v5064 = vpack.c.b16 %v5028, %v5024
  %v5065 = vpack.c.b16 %v5029, %v5025
  %v5066 = vpack.c.b16 %v5030, %v5026
  %v5067 = vpack.c.b16 %v5031, %v5027
  %v5068 = vpack.c.b16 %v5036, %v5032
  %v5069 = vpack.c.b16 %v5037, %v5033
  %v5070 = vpack.c.b16 %v5038, %v5034
  %v5071 = vpack.c.b16 %v5039, %v5035
  %5104 = vmatprep.subr.bf16.mxu0 %v5041
  %5105 = vmatpush1.bf16.msra.mxu0 %v5040
  %5106 = vmatprep.subr.bf16.mxu0 %v5045
  %5107 = vmatpush1.bf16.msra.mxu0 %v5044
  %5108 = vmatprep.subr.bf16.mxu0 %v5049
  %5109 = vmatpush1.bf16.msra.mxu0 %v5048
  %5110 = vmatprep.subr.bf16.mxu0 %v5053
  %5111 = vmatpush1.bf16.msra.mxu0 %v5052
  %5112 = vmatprep.subr.bf16.mxu0 %v5057
  %5113 = vmatpush1.bf16.msra.mxu0 %v5056
  %5114 = vmatprep.subr.bf16.mxu0 %v5061
  %5115 = vmatpush1.bf16.msra.mxu0 %v5060
  %5116 = vmatprep.subr.bf16.mxu0 %v5065
  %5117 = vmatpush1.bf16.msra.mxu0 %v5064
  %5118 = vmatprep.subr.bf16.mxu0 %v5069
  %5119 = vmatpush1.bf16.msra.mxu0 %v5068
  %5120 = vmatprep.subr.bf16.mxu0 0
  %5121 = vmatpush1.bf16.msra.mxu0 0
  %5122 = vmatprep.subr.bf16.mxu0 0
  %5123 = vmatpush1.bf16.msra.mxu0 0
  %5124 = vmatprep.subr.bf16.mxu0 0
  %5125 = vmatpush1.bf16.msra.mxu0 0
  %5126 = vmatprep.subr.bf16.mxu0 0
  %5127 = vmatpush1.bf16.msra.mxu0 0
  %5128 = vmatprep.subr.bf16.mxu0 0
  %5129 = vmatpush1.bf16.msra.mxu0 0
  %5130 = vmatprep.subr.bf16.mxu0 0
  %5131 = vmatpush1.bf16.msra.mxu0 0
  %5132 = vmatprep.subr.bf16.mxu0 0
  %5133 = vmatpush1.bf16.msra.mxu0 0
  %5134 = vmatprep.subr.bf16.mxu0 0
  %5135 = vmatpush1.bf16.msra.mxu0 0
  %5136 = vmatprep.mubr.bf16.mxu0 0
  %5137 = vmatmul.mubr.bf16.gmra.mrb[0].mxu0 %v4661
  %v5138 = vpop.f32.mrb[0].mxu0
  %v5139 = vadd.f32 0.0, %v5138
  %v5140 = vpop.f32.mrb[0].mxu0
  %v5141 = vadd.f32 0.0, %v5140
  %v5142 = vpop.f32.mrb[0].mxu0
  %v5143 = vpop.f32.mrb[0].mxu0
  %5144 = vdwg.mxu0
  %5145 = vmatprep.subr.bf16.mxu0 %v5043
  %5146 = vmatpush1.bf16.msra.mxu0 %v5042
  %5147 = vmatprep.subr.bf16.mxu0 %v5047
  %5148 = vmatpush1.bf16.msra.mxu0 %v5046
  %5149 = vmatprep.subr.bf16.mxu0 %v5051
  %5150 = vmatpush1.bf16.msra.mxu0 %v5050
  %5151 = vmatprep.subr.bf16.mxu0 %v5055
  %5152 = vmatpush1.bf16.msra.mxu0 %v5054
  %5153 = vmatprep.subr.bf16.mxu0 %v5059
  %5154 = vmatpush1.bf16.msra.mxu0 %v5058
  %5155 = vmatprep.subr.bf16.mxu0 %v5063
  %5156 = vmatpush1.bf16.msra.mxu0 %v5062
  %5157 = vmatprep.subr.bf16.mxu0 %v5067
  %5158 = vmatpush1.bf16.msra.mxu0 %v5066
  %5159 = vmatprep.subr.bf16.mxu0 %v5071
  %5160 = vmatpush1.bf16.msra.mxu0 %v5070
  %5161 = vmatprep.subr.bf16.mxu0 0
  %5162 = vmatpush1.bf16.msra.mxu0 0
  %5163 = vmatprep.subr.bf16.mxu0 0
  %5164 = vmatpush1.bf16.msra.mxu0 0
  %5165 = vmatprep.subr.bf16.mxu0 0
  %5166 = vmatpush1.bf16.msra.mxu0 0
  %5167 = vmatprep.subr.bf16.mxu0 0
  %5168 = vmatpush1.bf16.msra.mxu0 0
  %5169 = vmatprep.subr.bf16.mxu0 0
  %5170 = vmatpush1.bf16.msra.mxu0 0
  %5171 = vmatprep.subr.bf16.mxu0 0
  %5172 = vmatpush1.bf16.msra.mxu0 0
  %5173 = vmatprep.subr.bf16.mxu0 0
  %5174 = vmatpush1.bf16.msra.mxu0 0
  %5175 = vmatprep.subr.bf16.mxu0 0
  %5176 = vmatpush1.bf16.msra.mxu0 0
  %5177 = vmatprep.mubr.bf16.mxu0 0
  %5178 = vmatmul.mubr.bf16.gmra.mrb[0].mxu0 %v4661
  %v5179 = vpop.f32.mrb[0].mxu0
  %v5180 = vadd.f32 0.0, %v5179
  %v5181 = vpop.f32.mrb[0].mxu0
  %v5182 = vadd.f32 0.0, %v5181
  %v5183 = vpop.f32.mrb[0].mxu0
  %v5184 = vpop.f32.mrb[0].mxu0
  %5185 = vdwg.mxu0
  %v5186 = vadd.f32 %v4908, %v5139
  %v5187 = vadd.f32 %v4909, %v5141
  %v5188 = vadd.f32 %v4910, %v5180
  %v5189 = vadd.f32 %v4911, %v5182
  %v5190 = vxor.u32 %v5186, 2147483648
  %v5191 = vmul.f32 %v5190, 1.442695
  %v5192 = vpow.pop %v5191
  %v5193 = vadd.f32 %v5192, 1.0
  %v5194 = vrcp.pop %v5193
  %v5195 = vmul.f32 1.0, %v5194
  %v5196 = vxor.u32 %v5187, 2147483648
  %v5197 = vmul.f32 %v5196, 1.442695
  %v5198 = vpow.pop %v5197
  %v5199 = vadd.f32 %v5198, 1.0
  %v5200 = vrcp.pop %v5199
  %v5201 = vmul.f32 1.0, %v5200
  %v5202 = vtanh.pop %v5188
  %v5203 = vxor.u32 %v5189, 2147483648
  %v5204 = vmul.f32 %v5203, 1.442695
  %v5205 = vpow.pop %v5204
  %v5206 = vadd.f32 %v5205, 1.0
  %v5207 = vrcp.pop %v5206
  %v5208 = vmul.f32 1.0, %v5207
  %v5209 = vmul.f32 %v5201, %v4658
  %v5210 = vmul.f32 %v5195, %v5202
  %v5211 = vadd.f32 %v5209, %v5210
  %v5212 = vtanh.pop %v5211
  %v5213 = vmul.f32 %v5208, %v5212
  %v5214 = vpack.c.bf16 %v5213, %v5213
  %v5215 = vld [vmem:[%s7] sm:$0xf]
  %v5216 = vld [vmem:[%s7 + $0x4] sm:$0xf]
  %v5217 = vld [vmem:[%s7 + $0x8] sm:$0xf]
  %v5218 = vld [vmem:[%s7 + $0xc] sm:$0xf]
  %v5219 = vld [vmem:[%s7 + $0x10] sm:$0xf]
  %v5220 = vld [vmem:[%s7 + $0x14] sm:$0xf]
  %v5221 = vld [vmem:[%s7 + $0x18] sm:$0xf]
  %v5222 = vld [vmem:[%s7 + $0x1c] sm:$0xf]
  %v5223 = vld [vmem:[%s7 + $0x20] sm:$0xf]
  %v5224 = vld [vmem:[%s7 + $0x24] sm:$0xf]
  %v5225 = vld [vmem:[%s7 + $0x28] sm:$0xf]
  %v5226 = vld [vmem:[%s7 + $0x2c] sm:$0xf]
  %v5227 = vld [vmem:[%s7 + $0x30] sm:$0xf]
  %v5228 = vld [vmem:[%s7 + $0x34] sm:$0xf]
  %v5229 = vld [vmem:[%s7 + $0x38] sm:$0xf]
  %v5230 = vld [vmem:[%s7 + $0x3c] sm:$0xf]
  %v5247 = vunpack.c.l.b16 %v5215
  %v5248 = vunpack.c.l.b16 %v5216
  %v5249 = vunpack.c.l.b16 %v5217
  %v5250 = vunpack.c.l.b16 %v5218
  %v5251 = vunpack.c.l.b16 %v5219
  %v5252 = vunpack.c.l.b16 %v5220
  %v5253 = vunpack.c.l.b16 %v5221
  %v5254 = vunpack.c.l.b16 %v5222
  %v5255 = vunpack.c.l.b16 %v5223
  %v5256 = vunpack.c.l.b16 %v5224
  %v5257 = vunpack.c.l.b16 %v5225
  %v5258 = vunpack.c.l.b16 %v5226
  %v5259 = vunpack.c.l.b16 %v5227
  %v5260 = vunpack.c.l.b16 %v5228
  %v5261 = vunpack.c.l.b16 %v5229
  %v5262 = vunpack.c.l.b16 %v5230
  %v5263 = vpack.c.b16 %v5248, %v5247
  %v5264 = vpack.c.b16 %v5250, %v5249
  %v5265 = vpack.c.b16 %v5252, %v5251
  %v5266 = vpack.c.b16 %v5254, %v5253
  %v5267 = vpack.c.b16 %v5256, %v5255
  %v5268 = vpack.c.b16 %v5258, %v5257
  %v5269 = vpack.c.b16 %v5260, %v5259
  %v5270 = vpack.c.b16 %v5262, %v5261
  %5279 = vmatprep.subr.bf16.mxu0 0
  %5280 = vmatpush1.bf16.msra.mxu0 %v5263
  %5281 = vmatprep.subr.bf16.mxu0 0
  %5282 = vmatpush1.bf16.msra.mxu0 %v5264
  %5283 = vmatprep.subr.bf16.mxu0 0
  %5284 = vmatpush1.bf16.msra.mxu0 %v5265
  %5285 = vmatprep.subr.bf16.mxu0 0
  %5286 = vmatpush1.bf16.msra.mxu0 %v5266
  %5287 = vmatprep.subr.bf16.mxu0 0
  %5288 = vmatpush1.bf16.msra.mxu0 %v5267
  %5289 = vmatprep.subr.bf16.mxu0 0
  %5290 = vmatpush1.bf16.msra.mxu0 %v5268
  %5291 = vmatprep.subr.bf16.mxu0 0
  %5292 = vmatpush1.bf16.msra.mxu0 %v5269
  %5293 = vmatprep.subr.bf16.mxu0 0
  %5294 = vmatpush1.bf16.msra.mxu0 %v5270
  %5295 = vmatprep.subr.bf16.mxu0 0
  %5296 = vmatpush1.bf16.msra.mxu0 0
  %5297 = vmatprep.subr.bf16.mxu0 0
  %5298 = vmatpush1.bf16.msra.mxu0 0
  %5299 = vmatprep.subr.bf16.mxu0 0
  %5300 = vmatpush1.bf16.msra.mxu0 0
  %5301 = vmatprep.subr.bf16.mxu0 0
  %5302 = vmatpush1.bf16.msra.mxu0 0
  %5303 = vmatprep.subr.bf16.mxu0 0
  %5304 = vmatpush1.bf16.msra.mxu0 0
  %5305 = vmatprep.subr.bf16.mxu0 0
  %5306 = vmatpush1.bf16.msra.mxu0 0
  %5307 = vmatprep.subr.bf16.mxu0 0
  %5308 = vmatpush1.bf16.msra.mxu0 0
  %5309 = vmatprep.subr.bf16.mxu0 0
  %5310 = vmatpush1.bf16.msra.mxu0 0
  %5311 = vmatprep.mubr.bf16.mxu0 0
  %5312 = vmatmul.mubr.bf16.gmra.mrb[0].mxu0 %v5214
  %v5313 = vpop.f32.mrb[0].mxu0
  %v5314 = vadd.f32 %v1901, %v5313
  %v5315 = vpop.f32.mrb[0].mxu0
  %v5316 = vpop.f32.mrb[0].mxu0
  %v5317 = vpop.f32.mrb[0].mxu0
  %5318 = vdwg.mxu0
  %v5319 = vmax.f32 %v5314, 0.0
  %v5320 = vpack.c.bf16 %v5319, %v5319
  %v5321 = vld [vmem:[%s9] sm:$0xff]
  %v5322 = vld [vmem:[%s9 + $0x8] sm:$0xff]
  %v5323 = vld [vmem:[%s9 + $0x10] sm:$0xff]
  %v5324 = vld [vmem:[%s9 + $0x18] sm:$0xff]
  %v5325 = vld [vmem:[%s9 + $0x20] sm:$0xff]
  %v5326 = vld [vmem:[%s9 + $0x28] sm:$0xff]
  %v5327 = vld [vmem:[%s9 + $0x30] sm:$0xff]
  %v5328 = vld [vmem:[%s9 + $0x38] sm:$0xff]
  %v5329 = vld [vmem:[%s9 + $0x40] sm:$0xff]
  %v5330 = vld [vmem:[%s9 + $0x48] sm:$0xff]
  %v5331 = vld [vmem:[%s9 + $0x50] sm:$0xff]
  %v5332 = vld [vmem:[%s9 + $0x58] sm:$0xff]
  %v5333 = vld [vmem:[%s9 + $0x60] sm:$0xff]
  %v5334 = vld [vmem:[%s9 + $0x68] sm:$0xff]
  %v5335 = vld [vmem:[%s9 + $0x70] sm:$0xff]
  %v5336 = vld [vmem:[%s9 + $0x78] sm:$0xff]
  %v5353 = vunpack.c.l.b16 %v5321
  %v5354 = vunpack.c.h.b16 %v5321
  %v5355 = vunpack.c.l.b16 %v5322
  %v5356 = vunpack.c.h.b16 %v5322
  %v5357 = vunpack.c.l.b16 %v5323
  %v5358 = vunpack.c.h.b16 %v5323
  %v5359 = vunpack.c.l.b16 %v5324
  %v5360 = vunpack.c.h.b16 %v5324
  %v5361 = vunpack.c.l.b16 %v5325
  %v5362 = vunpack.c.h.b16 %v5325
  %v5363 = vunpack.c.l.b16 %v5326
  %v5364 = vunpack.c.h.b16 %v5326
  %v5365 = vunpack.c.l.b16 %v5327
  %v5366 = vunpack.c.h.b16 %v5327
  %v5367 = vunpack.c.l.b16 %v5328
  %v5368 = vunpack.c.h.b16 %v5328
  %v5369 = vunpack.c.l.b16 %v5329
  %v5370 = vunpack.c.h.b16 %v5329
  %v5371 = vunpack.c.l.b16 %v5330
  %v5372 = vunpack.c.h.b16 %v5330
  %v5373 = vunpack.c.l.b16 %v5331
  %v5374 = vunpack.c.h.b16 %v5331
  %v5375 = vunpack.c.l.b16 %v5332
  %v5376 = vunpack.c.h.b16 %v5332
  %v5377 = vunpack.c.l.b16 %v5333
  %v5378 = vunpack.c.h.b16 %v5333
  %v5379 = vunpack.c.l.b16 %v5334
  %v5380 = vunpack.c.h.b16 %v5334
  %v5381 = vunpack.c.l.b16 %v5335
  %v5382 = vunpack.c.h.b16 %v5335
  %v5383 = vunpack.c.l.b16 %v5336
  %v5384 = vunpack.c.h.b16 %v5336
  %v5385 = vpack.c.b16 %v5355, %v5353
  %v5386 = vpack.c.b16 %v5356, %v5354
  %v5387 = vpack.c.b16 %v5359, %v5357
  %v5388 = vpack.c.b16 %v5360, %v5358
  %v5389 = vpack.c.b16 %v5363, %v5361
  %v5390 = vpack.c.b16 %v5364, %v5362
  %v5391 = vpack.c.b16 %v5367, %v5365
  %v5392 = vpack.c.b16 %v5368, %v5366
  %v5393 = vpack.c.b16 %v5371, %v5369
  %v5394 = vpack.c.b16 %v5372, %v5370
  %v5395 = vpack.c.b16 %v5375, %v5373
  %v5396 = vpack.c.b16 %v5376, %v5374
  %v5397 = vpack.c.b16 %v5379, %v5377
  %v5398 = vpack.c.b16 %v5380, %v5378
  %v5399 = vpack.c.b16 %v5383, %v5381
  %v5400 = vpack.c.b16 %v5384, %v5382
  %5417 = vmatprep.subr.bf16.mxu0 %v5386
  %5418 = vmatpush1.bf16.msra.mxu0 %v5385
  %5419 = vmatprep.subr.bf16.mxu0 %v5388
  %5420 = vmatpush1.bf16.msra.mxu0 %v5387
  %5421 = vmatprep.subr.bf16.mxu0 %v5390
  %5422 = vmatpush1.bf16.msra.mxu0 %v5389
  %5423 = vmatprep.subr.bf16.mxu0 %v5392
  %5424 = vmatpush1.bf16.msra.mxu0 %v5391
  %5425 = vmatprep.subr.bf16.mxu0 %v5394
  %5426 = vmatpush1.bf16.msra.mxu0 %v5393
  %5427 = vmatprep.subr.bf16.mxu0 %v5396
  %5428 = vmatpush1.bf16.msra.mxu0 %v5395
  %5429 = vmatprep.subr.bf16.mxu0 %v5398
  %5430 = vmatpush1.bf16.msra.mxu0 %v5397
  %5431 = vmatprep.subr.bf16.mxu0 %v5400
  %5432 = vmatpush1.bf16.msra.mxu0 %v5399
  %5433 = vmatprep.subr.bf16.mxu0 0
  %5434 = vmatpush1.bf16.msra.mxu0 0
  %5435 = vmatprep.subr.bf16.mxu0 0
  %5436 = vmatpush1.bf16.msra.mxu0 0
  %5437 = vmatprep.subr.bf16.mxu0 0
  %5438 = vmatpush1.bf16.msra.mxu0 0
  %5439 = vmatprep.subr.bf16.mxu0 0
  %5440 = vmatpush1.bf16.msra.mxu0 0
  %5441 = vmatprep.subr.bf16.mxu0 0
  %5442 = vmatpush1.bf16.msra.mxu0 0
  %5443 = vmatprep.subr.bf16.mxu0 0
  %5444 = vmatpush1.bf16.msra.mxu0 0
  %5445 = vmatprep.subr.bf16.mxu0 0
  %5446 = vmatpush1.bf16.msra.mxu0 0
  %5447 = vmatprep.subr.bf16.mxu0 0
  %5448 = vmatpush1.bf16.msra.mxu0 0
  %5449 = vmatprep.mubr.bf16.mxu0 0
  %5450 = vmatmul.mubr.bf16.gmra.mrb[0].mxu0 %v5320
  %v5451 = vpop.f32.mrb[0].mxu0
  %v5452 = vadd.f32 %v2013, %v5451
  %v5453 = vpop.f32.mrb[0].mxu0
  %v5454 = vadd.f32 %v2017, %v5453
  %v5455 = vpop.f32.mrb[0].mxu0
  %v5456 = vpop.f32.mrb[0].mxu0
  %5457 = vdwg.mxu0
  %s5458 = scalar_lea.vmem %s11, 96
  %5459 = vst [vmem:[%s5458] sm:$0xff] %v5452
  %5460 = vst [vmem:[%s5458 + $0x8] sm:$0xff] %v5454
  %v5461 = vld [vmem:[#allocation3 + $0xe0] sm:$0xff]
  %v5462 = vld [vmem:[#allocation3 + $0xe8] sm:$0xff]
  %v5463 = vld [vmem:[#allocation3 + $0xf0] sm:$0xff]
  %v5464 = vld [vmem:[#allocation3 + $0xf8] sm:$0xff]
  %v5465 = vld [vmem:[%s5] sm:$0xff]
  %v5466 = vld [vmem:[%s5 + $0x8] sm:$0xff]
  %v5467 = vld [vmem:[%s5 + $0x10] sm:$0xff]
  %v5468 = vld [vmem:[%s5 + $0x18] sm:$0xff]
  %v5469 = vld [vmem:[%s5 + $0x20] sm:$0xff]
  %v5470 = vld [vmem:[%s5 + $0x28] sm:$0xff]
  %v5471 = vld [vmem:[%s5 + $0x30] sm:$0xff]
  %v5472 = vld [vmem:[%s5 + $0x38] sm:$0xff]
  %v5473 = vld [vmem:[%s5 + $0x40] sm:$0xff]
  %v5474 = vld [vmem:[%s5 + $0x48] sm:$0xff]
  %v5475 = vld [vmem:[%s5 + $0x50] sm:$0xff]
  %v5476 = vld [vmem:[%s5 + $0x58] sm:$0xff]
  %v5477 = vld [vmem:[%s5 + $0x60] sm:$0xff]
  %v5478 = vld [vmem:[%s5 + $0x68] sm:$0xff]
  %v5479 = vld [vmem:[%s5 + $0x70] sm:$0xff]
  %v5480 = vld [vmem:[%s5 + $0x78] sm:$0xff]
  %v5481 = vld [vmem:[%s5 + $0x80] sm:$0xff]
  %v5482 = vld [vmem:[%s5 + $0x88] sm:$0xff]
  %v5483 = vld [vmem:[%s5 + $0x90] sm:$0xff]
  %v5484 = vld [vmem:[%s5 + $0x98] sm:$0xff]
  %v5485 = vld [vmem:[%s5 + $0xa0] sm:$0xff]
  %v5486 = vld [vmem:[%s5 + $0xa8] sm:$0xff]
  %v5487 = vld [vmem:[%s5 + $0xb0] sm:$0xff]
  %v5488 = vld [vmem:[%s5 + $0xb8] sm:$0xff]
  %v5489 = vld [vmem:[%s5 + $0xc0] sm:$0xff]
  %v5490 = vld [vmem:[%s5 + $0xc8] sm:$0xff]
  %v5491 = vld [vmem:[%s5 + $0xd0] sm:$0xff]
  %v5492 = vld [vmem:[%s5 + $0xd8] sm:$0xff]
  %v5493 = vld [vmem:[%s5 + $0xe0] sm:$0xff]
  %v5494 = vld [vmem:[%s5 + $0xe8] sm:$0xff]
  %v5495 = vld [vmem:[%s5 + $0xf0] sm:$0xff]
  %v5496 = vld [vmem:[%s5 + $0xf8] sm:$0xff]
  %v5529 = vunpack.c.l.b16 %v5465
  %v5530 = vunpack.c.h.b16 %v5465
  %v5531 = vunpack.c.l.b16 %v5466
  %v5532 = vunpack.c.h.b16 %v5466
  %v5533 = vunpack.c.l.b16 %v5467
  %v5534 = vunpack.c.h.b16 %v5467
  %v5535 = vunpack.c.l.b16 %v5468
  %v5536 = vunpack.c.h.b16 %v5468
  %v5537 = vunpack.c.l.b16 %v5469
  %v5538 = vunpack.c.h.b16 %v5469
  %v5539 = vunpack.c.l.b16 %v5470
  %v5540 = vunpack.c.h.b16 %v5470
  %v5541 = vunpack.c.l.b16 %v5471
  %v5542 = vunpack.c.h.b16 %v5471
  %v5543 = vunpack.c.l.b16 %v5472
  %v5544 = vunpack.c.h.b16 %v5472
  %v5545 = vunpack.c.l.b16 %v5473
  %v5546 = vunpack.c.h.b16 %v5473
  %v5547 = vunpack.c.l.b16 %v5474
  %v5548 = vunpack.c.h.b16 %v5474
  %v5549 = vunpack.c.l.b16 %v5475
  %v5550 = vunpack.c.h.b16 %v5475
  %v5551 = vunpack.c.l.b16 %v5476
  %v5552 = vunpack.c.h.b16 %v5476
  %v5553 = vunpack.c.l.b16 %v5477
  %v5554 = vunpack.c.h.b16 %v5477
  %v5555 = vunpack.c.l.b16 %v5478
  %v5556 = vunpack.c.h.b16 %v5478
  %v5557 = vunpack.c.l.b16 %v5479
  %v5558 = vunpack.c.h.b16 %v5479
  %v5559 = vunpack.c.l.b16 %v5480
  %v5560 = vunpack.c.h.b16 %v5480
  %v5561 = vunpack.c.l.b16 %v5481
  %v5562 = vunpack.c.h.b16 %v5481
  %v5563 = vunpack.c.l.b16 %v5482
  %v5564 = vunpack.c.h.b16 %v5482
  %v5565 = vunpack.c.l.b16 %v5483
  %v5566 = vunpack.c.h.b16 %v5483
  %v5567 = vunpack.c.l.b16 %v5484
  %v5568 = vunpack.c.h.b16 %v5484
  %v5569 = vunpack.c.l.b16 %v5485
  %v5570 = vunpack.c.h.b16 %v5485
  %v5571 = vunpack.c.l.b16 %v5486
  %v5572 = vunpack.c.h.b16 %v5486
  %v5573 = vunpack.c.l.b16 %v5487
  %v5574 = vunpack.c.h.b16 %v5487
  %v5575 = vunpack.c.l.b16 %v5488
  %v5576 = vunpack.c.h.b16 %v5488
  %v5577 = vunpack.c.l.b16 %v5489
  %v5578 = vunpack.c.h.b16 %v5489
  %v5579 = vunpack.c.l.b16 %v5490
  %v5580 = vunpack.c.h.b16 %v5490
  %v5581 = vunpack.c.l.b16 %v5491
  %v5582 = vunpack.c.h.b16 %v5491
  %v5583 = vunpack.c.l.b16 %v5492
  %v5584 = vunpack.c.h.b16 %v5492
  %v5585 = vunpack.c.l.b16 %v5493
  %v5586 = vunpack.c.h.b16 %v5493
  %v5587 = vunpack.c.l.b16 %v5494
  %v5588 = vunpack.c.h.b16 %v5494
  %v5589 = vunpack.c.l.b16 %v5495
  %v5590 = vunpack.c.h.b16 %v5495
  %v5591 = vunpack.c.l.b16 %v5496
  %v5592 = vunpack.c.h.b16 %v5496
  %v5593 = vpack.c.b16 %v5533, %v5529
  %v5594 = vpack.c.b16 %v5534, %v5530
  %v5595 = vpack.c.b16 %v5535, %v5531
  %v5596 = vpack.c.b16 %v5536, %v5532
  %v5597 = vpack.c.b16 %v5541, %v5537
  %v5598 = vpack.c.b16 %v5542, %v5538
  %v5599 = vpack.c.b16 %v5543, %v5539
  %v5600 = vpack.c.b16 %v5544, %v5540
  %v5601 = vpack.c.b16 %v5549, %v5545
  %v5602 = vpack.c.b16 %v5550, %v5546
  %v5603 = vpack.c.b16 %v5551, %v5547
  %v5604 = vpack.c.b16 %v5552, %v5548
  %v5605 = vpack.c.b16 %v5557, %v5553
  %v5606 = vpack.c.b16 %v5558, %v5554
  %v5607 = vpack.c.b16 %v5559, %v5555
  %v5608 = vpack.c.b16 %v5560, %v5556
  %v5609 = vpack.c.b16 %v5565, %v5561
  %v5610 = vpack.c.b16 %v5566, %v5562
  %v5611 = vpack.c.b16 %v5567, %v5563
  %v5612 = vpack.c.b16 %v5568, %v5564
  %v5613 = vpack.c.b16 %v5573, %v5569
  %v5614 = vpack.c.b16 %v5574, %v5570
  %v5615 = vpack.c.b16 %v5575, %v5571
  %v5616 = vpack.c.b16 %v5576, %v5572
  %v5617 = vpack.c.b16 %v5581, %v5577
  %v5618 = vpack.c.b16 %v5582, %v5578
  %v5619 = vpack.c.b16 %v5583, %v5579
  %v5620 = vpack.c.b16 %v5584, %v5580
  %v5621 = vpack.c.b16 %v5589, %v5585
  %v5622 = vpack.c.b16 %v5590, %v5586
  %v5623 = vpack.c.b16 %v5591, %v5587
  %v5624 = vpack.c.b16 %v5592, %v5588
  %5657 = vmatprep.subr.bf16.mxu0 %v5594
  %5658 = vmatpush1.bf16.msra.mxu0 %v5593
  %5659 = vmatprep.subr.bf16.mxu0 %v5598
  %5660 = vmatpush1.bf16.msra.mxu0 %v5597
  %5661 = vmatprep.subr.bf16.mxu0 %v5602
  %5662 = vmatpush1.bf16.msra.mxu0 %v5601
  %5663 = vmatprep.subr.bf16.mxu0 %v5606
  %5664 = vmatpush1.bf16.msra.mxu0 %v5605
  %5665 = vmatprep.subr.bf16.mxu0 %v5610
  %5666 = vmatpush1.bf16.msra.mxu0 %v5609
  %5667 = vmatprep.subr.bf16.mxu0 %v5614
  %5668 = vmatpush1.bf16.msra.mxu0 %v5613
  %5669 = vmatprep.subr.bf16.mxu0 %v5618
  %5670 = vmatpush1.bf16.msra.mxu0 %v5617
  %5671 = vmatprep.subr.bf16.mxu0 %v5622
  %5672 = vmatpush1.bf16.msra.mxu0 %v5621
  %5673 = vmatprep.subr.bf16.mxu0 0
  %5674 = vmatpush1.bf16.msra.mxu0 0
  %5675 = vmatprep.subr.bf16.mxu0 0
  %5676 = vmatpush1.bf16.msra.mxu0 0
  %5677 = vmatprep.subr.bf16.mxu0 0
  %5678 = vmatpush1.bf16.msra.mxu0 0
  %5679 = vmatprep.subr.bf16.mxu0 0
  %5680 = vmatpush1.bf16.msra.mxu0 0
  %5681 = vmatprep.subr.bf16.mxu0 0
  %5682 = vmatpush1.bf16.msra.mxu0 0
  %5683 = vmatprep.subr.bf16.mxu0 0
  %5684 = vmatpush1.bf16.msra.mxu0 0
  %5685 = vmatprep.subr.bf16.mxu0 0
  %5686 = vmatpush1.bf16.msra.mxu0 0
  %5687 = vmatprep.subr.bf16.mxu0 0
  %5688 = vmatpush1.bf16.msra.mxu0 0
  %5689 = vmatprep.mubr.bf16.mxu0 0
  %5690 = vmatmul.mubr.bf16.gmra.mrb[0].mxu0 %v5214
  %v5691 = vpop.f32.mrb[0].mxu0
  %v5692 = vadd.f32 0.0, %v5691
  %v5693 = vpop.f32.mrb[0].mxu0
  %v5694 = vadd.f32 0.0, %v5693
  %v5695 = vpop.f32.mrb[0].mxu0
  %v5696 = vpop.f32.mrb[0].mxu0
  %5697 = vdwg.mxu0
  %5698 = vmatprep.subr.bf16.mxu0 %v5596
  %5699 = vmatpush1.bf16.msra.mxu0 %v5595
  %5700 = vmatprep.subr.bf16.mxu0 %v5600
  %5701 = vmatpush1.bf16.msra.mxu0 %v5599
  %5702 = vmatprep.subr.bf16.mxu0 %v5604
  %5703 = vmatpush1.bf16.msra.mxu0 %v5603
  %5704 = vmatprep.subr.bf16.mxu0 %v5608
  %5705 = vmatpush1.bf16.msra.mxu0 %v5607
  %5706 = vmatprep.subr.bf16.mxu0 %v5612
  %5707 = vmatpush1.bf16.msra.mxu0 %v5611
  %5708 = vmatprep.subr.bf16.mxu0 %v5616
  %5709 = vmatpush1.bf16.msra.mxu0 %v5615
  %5710 = vmatprep.subr.bf16.mxu0 %v5620
  %5711 = vmatpush1.bf16.msra.mxu0 %v5619
  %5712 = vmatprep.subr.bf16.mxu0 %v5624
  %5713 = vmatpush1.bf16.msra.mxu0 %v5623
  %5714 = vmatprep.subr.bf16.mxu0 0
  %5715 = vmatpush1.bf16.msra.mxu0 0
  %5716 = vmatprep.subr.bf16.mxu0 0
  %5717 = vmatpush1.bf16.msra.mxu0 0
  %5718 = vmatprep.subr.bf16.mxu0 0
  %5719 = vmatpush1.bf16.msra.mxu0 0
  %5720 = vmatprep.subr.bf16.mxu0 0
  %5721 = vmatpush1.bf16.msra.mxu0 0
  %5722 = vmatprep.subr.bf16.mxu0 0
  %5723 = vmatpush1.bf16.msra.mxu0 0
  %5724 = vmatprep.subr.bf16.mxu0 0
  %5725 = vmatpush1.bf16.msra.mxu0 0
  %5726 = vmatprep.subr.bf16.mxu0 0
  %5727 = vmatpush1.bf16.msra.mxu0 0
  %5728 = vmatprep.subr.bf16.mxu0 0
  %5729 = vmatpush1.bf16.msra.mxu0 0
  %5730 = vmatprep.mubr.bf16.mxu0 0
  %5731 = vmatmul.mubr.bf16.gmra.mrb[0].mxu0 %v5214
  %v5732 = vpop.f32.mrb[0].mxu0
  %v5733 = vadd.f32 0.0, %v5732
  %v5734 = vpop.f32.mrb[0].mxu0
  %v5735 = vadd.f32 0.0, %v5734
  %v5736 = vpop.f32.mrb[0].mxu0
  %v5737 = vpop.f32.mrb[0].mxu0
  %5738 = vdwg.mxu0
  %v5739 = vadd.f32 %v5461, %v5692
  %v5740 = vadd.f32 %v5462, %v5694
  %v5741 = vadd.f32 %v5463, %v5733
  %v5742 = vadd.f32 %v5464, %v5735
  %v5743 = vxor.u32 %v5739, 2147483648
  %v5744 = vmul.f32 %v5743, 1.442695
  %v5745 = vpow.pop %v5744
  %v5746 = vadd.f32 %v5745, 1.0
  %v5747 = vrcp.pop %v5746
  %v5748 = vmul.f32 1.0, %v5747
  %v5749 = vxor.u32 %v5740, 2147483648
  %v5750 = vmul.f32 %v5749, 1.442695
  %v5751 = vpow.pop %v5750
  %v5752 = vadd.f32 %v5751, 1.0
  %v5753 = vrcp.pop %v5752
  %v5754 = vmul.f32 1.0, %v5753
  %v5755 = vtanh.pop %v5741
  %v5756 = vxor.u32 %v5742, 2147483648
  %v5757 = vmul.f32 %v5756, 1.442695
  %v5758 = vpow.pop %v5757
  %v5759 = vadd.f32 %v5758, 1.0
  %v5760 = vrcp.pop %v5759
  %v5761 = vmul.f32 1.0, %v5760
  %v5762 = vmul.f32 %v5754, %v5211
  %v5763 = vmul.f32 %v5748, %v5755
  %v5764 = vadd.f32 %v5762, %v5763
  %v5765 = vtanh.pop %v5764
  %v5766 = vmul.f32 %v5761, %v5765
  %v5767 = vpack.c.bf16 %v5766, %v5766
  %v5768 = vld [vmem:[%s7] sm:$0xf]
  %v5769 = vld [vmem:[%s7 + $0x4] sm:$0xf]
  %v5770 = vld [vmem:[%s7 + $0x8] sm:$0xf]
  %v5771 = vld [vmem:[%s7 + $0xc] sm:$0xf]
  %v5772 = vld [vmem:[%s7 + $0x10] sm:$0xf]
  %v5773 = vld [vmem:[%s7 + $0x14] sm:$0xf]
  %v5774 = vld [vmem:[%s7 + $0x18] sm:$0xf]
  %v5775 = vld [vmem:[%s7 + $0x1c] sm:$0xf]
  %v5776 = vld [vmem:[%s7 + $0x20] sm:$0xf]
  %v5777 = vld [vmem:[%s7 + $0x24] sm:$0xf]
  %v5778 = vld [vmem:[%s7 + $0x28] sm:$0xf]
  %v5779 = vld [vmem:[%s7 + $0x2c] sm:$0xf]
  %v5780 = vld [vmem:[%s7 + $0x30] sm:$0xf]
  %v5781 = vld [vmem:[%s7 + $0x34] sm:$0xf]
  %v5782 = vld [vmem:[%s7 + $0x38] sm:$0xf]
  %v5783 = vld [vmem:[%s7 + $0x3c] sm:$0xf]
  %v5800 = vunpack.c.l.b16 %v5768
  %v5801 = vunpack.c.l.b16 %v5769
  %v5802 = vunpack.c.l.b16 %v5770
  %v5803 = vunpack.c.l.b16 %v5771
  %v5804 = vunpack.c.l.b16 %v5772
  %v5805 = vunpack.c.l.b16 %v5773
  %v5806 = vunpack.c.l.b16 %v5774
  %v5807 = vunpack.c.l.b16 %v5775
  %v5808 = vunpack.c.l.b16 %v5776
  %v5809 = vunpack.c.l.b16 %v5777
  %v5810 = vunpack.c.l.b16 %v5778
  %v5811 = vunpack.c.l.b16 %v5779
  %v5812 = vunpack.c.l.b16 %v5780
  %v5813 = vunpack.c.l.b16 %v5781
  %v5814 = vunpack.c.l.b16 %v5782
  %v5815 = vunpack.c.l.b16 %v5783
  %v5816 = vpack.c.b16 %v5801, %v5800
  %v5817 = vpack.c.b16 %v5803, %v5802
  %v5818 = vpack.c.b16 %v5805, %v5804
  %v5819 = vpack.c.b16 %v5807, %v5806
  %v5820 = vpack.c.b16 %v5809, %v5808
  %v5821 = vpack.c.b16 %v5811, %v5810
  %v5822 = vpack.c.b16 %v5813, %v5812
  %v5823 = vpack.c.b16 %v5815, %v5814
  %5832 = vmatprep.subr.bf16.mxu0 0
  %5833 = vmatpush1.bf16.msra.mxu0 %v5816
  %5834 = vmatprep.subr.bf16.mxu0 0
  %5835 = vmatpush1.bf16.msra.mxu0 %v5817
  %5836 = vmatprep.subr.bf16.mxu0 0
  %5837 = vmatpush1.bf16.msra.mxu0 %v5818
  %5838 = vmatprep.subr.bf16.mxu0 0
  %5839 = vmatpush1.bf16.msra.mxu0 %v5819
  %5840 = vmatprep.subr.bf16.mxu0 0
  %5841 = vmatpush1.bf16.msra.mxu0 %v5820
  %5842 = vmatprep.subr.bf16.mxu0 0
  %5843 = vmatpush1.bf16.msra.mxu0 %v5821
  %5844 = vmatprep.subr.bf16.mxu0 0
  %5845 = vmatpush1.bf16.msra.mxu0 %v5822
  %5846 = vmatprep.subr.bf16.mxu0 0
  %5847 = vmatpush1.bf16.msra.mxu0 %v5823
  %5848 = vmatprep.subr.bf16.mxu0 0
  %5849 = vmatpush1.bf16.msra.mxu0 0
  %5850 = vmatprep.subr.bf16.mxu0 0
  %5851 = vmatpush1.bf16.msra.mxu0 0
  %5852 = vmatprep.subr.bf16.mxu0 0
  %5853 = vmatpush1.bf16.msra.mxu0 0
  %5854 = vmatprep.subr.bf16.mxu0 0
  %5855 = vmatpush1.bf16.msra.mxu0 0
  %5856 = vmatprep.subr.bf16.mxu0 0
  %5857 = vmatpush1.bf16.msra.mxu0 0
  %5858 = vmatprep.subr.bf16.mxu0 0
  %5859 = vmatpush1.bf16.msra.mxu0 0
  %5860 = vmatprep.subr.bf16.mxu0 0
  %5861 = vmatpush1.bf16.msra.mxu0 0
  %5862 = vmatprep.subr.bf16.mxu0 0
  %5863 = vmatpush1.bf16.msra.mxu0 0
  %5864 = vmatprep.mubr.bf16.mxu0 0
  %5865 = vmatmul.mubr.bf16.gmra.mrb[0].mxu0 %v5767
  %v5866 = vpop.f32.mrb[0].mxu0
  %v5867 = vadd.f32 %v1901, %v5866
  %v5868 = vpop.f32.mrb[0].mxu0
  %v5869 = vpop.f32.mrb[0].mxu0
  %v5870 = vpop.f32.mrb[0].mxu0
  %5871 = vdwg.mxu0
  %v5872 = vmax.f32 %v5867, 0.0
  %v5873 = vpack.c.bf16 %v5872, %v5872
  %v5874 = vld [vmem:[%s9] sm:$0xff]
  %v5875 = vld [vmem:[%s9 + $0x8] sm:$0xff]
  %v5876 = vld [vmem:[%s9 + $0x10] sm:$0xff]
  %v5877 = vld [vmem:[%s9 + $0x18] sm:$0xff]
  %v5878 = vld [vmem:[%s9 + $0x20] sm:$0xff]
  %v5879 = vld [vmem:[%s9 + $0x28] sm:$0xff]
  %v5880 = vld [vmem:[%s9 + $0x30] sm:$0xff]
  %v5881 = vld [vmem:[%s9 + $0x38] sm:$0xff]
  %v5882 = vld [vmem:[%s9 + $0x40] sm:$0xff]
  %v5883 = vld [vmem:[%s9 + $0x48] sm:$0xff]
  %v5884 = vld [vmem:[%s9 + $0x50] sm:$0xff]
  %v5885 = vld [vmem:[%s9 + $0x58] sm:$0xff]
  %v5886 = vld [vmem:[%s9 + $0x60] sm:$0xff]
  %v5887 = vld [vmem:[%s9 + $0x68] sm:$0xff]
  %v5888 = vld [vmem:[%s9 + $0x70] sm:$0xff]
  %v5889 = vld [vmem:[%s9 + $0x78] sm:$0xff]
  %v5906 = vunpack.c.l.b16 %v5874
  %v5907 = vunpack.c.h.b16 %v5874
  %v5908 = vunpack.c.l.b16 %v5875
  %v5909 = vunpack.c.h.b16 %v5875
  %v5910 = vunpack.c.l.b16 %v5876
  %v5911 = vunpack.c.h.b16 %v5876
  %v5912 = vunpack.c.l.b16 %v5877
  %v5913 = vunpack.c.h.b16 %v5877
  %v5914 = vunpack.c.l.b16 %v5878
  %v5915 = vunpack.c.h.b16 %v5878
  %v5916 = vunpack.c.l.b16 %v5879
  %v5917 = vunpack.c.h.b16 %v5879
  %v5918 = vunpack.c.l.b16 %v5880
  %v5919 = vunpack.c.h.b16 %v5880
  %v5920 = vunpack.c.l.b16 %v5881
  %v5921 = vunpack.c.h.b16 %v5881
  %v5922 = vunpack.c.l.b16 %v5882
  %v5923 = vunpack.c.h.b16 %v5882
  %v5924 = vunpack.c.l.b16 %v5883
  %v5925 = vunpack.c.h.b16 %v5883
  %v5926 = vunpack.c.l.b16 %v5884
  %v5927 = vunpack.c.h.b16 %v5884
  %v5928 = vunpack.c.l.b16 %v5885
  %v5929 = vunpack.c.h.b16 %v5885
  %v5930 = vunpack.c.l.b16 %v5886
  %v5931 = vunpack.c.h.b16 %v5886
  %v5932 = vunpack.c.l.b16 %v5887
  %v5933 = vunpack.c.h.b16 %v5887
  %v5934 = vunpack.c.l.b16 %v5888
  %v5935 = vunpack.c.h.b16 %v5888
  %v5936 = vunpack.c.l.b16 %v5889
  %v5937 = vunpack.c.h.b16 %v5889
  %v5938 = vpack.c.b16 %v5908, %v5906
  %v5939 = vpack.c.b16 %v5909, %v5907
  %v5940 = vpack.c.b16 %v5912, %v5910
  %v5941 = vpack.c.b16 %v5913, %v5911
  %v5942 = vpack.c.b16 %v5916, %v5914
  %v5943 = vpack.c.b16 %v5917, %v5915
  %v5944 = vpack.c.b16 %v5920, %v5918
  %v5945 = vpack.c.b16 %v5921, %v5919
  %v5946 = vpack.c.b16 %v5924, %v5922
  %v5947 = vpack.c.b16 %v5925, %v5923
  %v5948 = vpack.c.b16 %v5928, %v5926
  %v5949 = vpack.c.b16 %v5929, %v5927
  %v5950 = vpack.c.b16 %v5932, %v5930
  %v5951 = vpack.c.b16 %v5933, %v5931
  %v5952 = vpack.c.b16 %v5936, %v5934
  %v5953 = vpack.c.b16 %v5937, %v5935
  %5970 = vmatprep.subr.bf16.mxu0 %v5939
  %5971 = vmatpush1.bf16.msra.mxu0 %v5938
  %5972 = vmatprep.subr.bf16.mxu0 %v5941
  %5973 = vmatpush1.bf16.msra.mxu0 %v5940
  %5974 = vmatprep.subr.bf16.mxu0 %v5943
  %5975 = vmatpush1.bf16.msra.mxu0 %v5942
  %5976 = vmatprep.subr.bf16.mxu0 %v5945
  %5977 = vmatpush1.bf16.msra.mxu0 %v5944
  %5978 = vmatprep.subr.bf16.mxu0 %v5947
  %5979 = vmatpush1.bf16.msra.mxu0 %v5946
  %5980 = vmatprep.subr.bf16.mxu0 %v5949
  %5981 = vmatpush1.bf16.msra.mxu0 %v5948
  %5982 = vmatprep.subr.bf16.mxu0 %v5951
  %5983 = vmatpush1.bf16.msra.mxu0 %v5950
  %5984 = vmatprep.subr.bf16.mxu0 %v5953
  %5985 = vmatpush1.bf16.msra.mxu0 %v5952
  %5986 = vmatprep.subr.bf16.mxu0 0
  %5987 = vmatpush1.bf16.msra.mxu0 0
  %5988 = vmatprep.subr.bf16.mxu0 0
  %5989 = vmatpush1.bf16.msra.mxu0 0
  %5990 = vmatprep.subr.bf16.mxu0 0
  %5991 = vmatpush1.bf16.msra.mxu0 0
  %5992 = vmatprep.subr.bf16.mxu0 0
  %5993 = vmatpush1.bf16.msra.mxu0 0
  %5994 = vmatprep.subr.bf16.mxu0 0
  %5995 = vmatpush1.bf16.msra.mxu0 0
  %5996 = vmatprep.subr.bf16.mxu0 0
  %5997 = vmatpush1.bf16.msra.mxu0 0
  %5998 = vmatprep.subr.bf16.mxu0 0
  %5999 = vmatpush1.bf16.msra.mxu0 0
  %6000 = vmatprep.subr.bf16.mxu0 0
  %6001 = vmatpush1.bf16.msra.mxu0 0
  %6002 = vmatprep.mubr.bf16.mxu0 0
  %6003 = vmatmul.mubr.bf16.gmra.mrb[0].mxu0 %v5873
  %v6004 = vpop.f32.mrb[0].mxu0
  %v6005 = vadd.f32 %v2013, %v6004
  %v6006 = vpop.f32.mrb[0].mxu0
  %v6007 = vadd.f32 %v2017, %v6006
  %v6008 = vpop.f32.mrb[0].mxu0
  %v6009 = vpop.f32.mrb[0].mxu0
  %6010 = vdwg.mxu0
  %s6011 = scalar_lea.vmem %s11, 112
  %6012 = vst [vmem:[%s6011] sm:$0xff] %v6005
  %6013 = vst [vmem:[%s6011 + $0x8] sm:$0xff] %v6007
  // Predicated region
  $region76: #{image_caption_forward.1} parent=0 // pred_check
    _
  $region77: #{image_caption_forward.1} parent=0 // pred_check_branch
    %6015 = sbr.rel (0) target = $region79
  $region78: #{image_caption_forward.1} parent=0 // pred_region
    _
  $region79: #{image_caption_forward.1} parent=0 // pred_fallthru
    _
  // Predicated region
  $region80: #{image_caption_forward.1} parent=0 // pred_check
    _
  $region81: #{image_caption_forward.1} parent=0 // pred_check_branch
    %6017 = sbr.rel (0) target = $region83
  $region82: #{image_caption_forward.1} parent=0 // pred_region
    _
  $region83: #{image_caption_forward.1} parent=0 // pred_fallthru
    _
  %6018 = vsyncmov [#allocation4]
  %s6019 = vpop.sfrf %6018
  %p6020 = scmp.eq.s32.totalorder %s6019, 0
  %p6021 = pneg %p6020
  %6023 = shalt.err (%p6021)

</llo_original>
